<compile_context>
chip_gen: v7x
topology: tpu7x:2x2x1
jax: 0.10.0
libtpu: 0.0.40
codegen_flags: <defaults>
</compile_context>

<pallas_src>
import functools

import jax
import jax.numpy as jnp
from jax.experimental import pallas as pl
from jax.experimental.pallas import tpu as pltpu


# ----------------------------------------------------------------------------
# Pallas kernels.  All activations are [C, M] with M = N*Ho*Wo on the lane axis.
# Matmul operands (b = [Cout, K], a = [K, M]) are bf16; accumulation + epilogue f32.
# ----------------------------------------------------------------------------

def _conv_wibrelu_kernel(b_ref, a_ref, o_ref):
    # conv -> WIBReLU:  relu(y) - mean(y)   (mean over ALL elements of y)
    y = jnp.dot(b_ref[...], a_ref[...], preferred_element_type=jnp.float32)
    o_ref[...] = jnp.maximum(y, 0.0) - jnp.mean(y)


def _conv_bn_relu_kernel(b_ref, a_ref, o_ref):
    # conv -> BatchNorm2d (batch stats, gamma=1, beta=0, eps=1e-5) -> ReLU
    # per-channel stats = reduce over the lane (M = N*H*W) axis.
    y = jnp.dot(b_ref[...], a_ref[...], preferred_element_type=jnp.float32)
    mean = jnp.mean(y, axis=1, keepdims=True)
    var = jnp.mean((y - mean) ** 2, axis=1, keepdims=True)
    yn = (y - mean) * jax.lax.rsqrt(var + 1e-5)
    o_ref[...] = jnp.maximum(yn, 0.0)


def _conv_bn_wibrelu_kernel(b_ref, a_ref, o_ref):
    # conv -> BatchNorm2d (batch stats) -> WIBReLU
    y = jnp.dot(b_ref[...], a_ref[...], preferred_element_type=jnp.float32)
    mean = jnp.mean(y, axis=1, keepdims=True)
    var = jnp.mean((y - mean) ** 2, axis=1, keepdims=True)
    yn = (y - mean) * jax.lax.rsqrt(var + 1e-5)
    o_ref[...] = jnp.maximum(yn, 0.0) - jnp.mean(yn)


def _conv_residual_relu_kernel(b_ref, a_ref, x_ref, o_ref):
    # ResnetBlock:  x + relu(conv(reflect_pad(x)))
    y = jnp.dot(b_ref[...], a_ref[...], preferred_element_type=jnp.float32)
    o_ref[...] = x_ref[...] + jnp.maximum(y, 0.0)


def _conv_tanh_kernel(b_ref, a_ref, o_ref):
    # final conv -> Tanh
    y = jnp.dot(b_ref[...], a_ref[...], preferred_element_type=jnp.float32)
    o_ref[...] = jnp.tanh(y)


def _blur_kernel(t_ref, o_ref):
    # Depthwise 3x3 binomial blur ([1,2,1] x [1,2,1] / 16), stride-2 taps pre-sliced.
    # t_ref: [9, C, Mo] stacked taps -> o: [C, Mo]
    w = (1.0, 2.0, 1.0, 2.0, 4.0, 2.0, 1.0, 2.0, 1.0)
    acc = t_ref[0] * (w[0] / 16.0)
    for t in range(1, 9):
        acc = acc + t_ref[t] * (w[t] / 16.0)
    o_ref[...] = acc


def _lerp4_kernel(a_ref, b_ref, c_ref, d_ref, wa_ref, wb_ref, wc_ref, wd_ref, o_ref):
    # Bilinear interpolation: a..d are [C, M] gathered neighbours, w* are [1, M] weight
    # rows (sublane-broadcast inside the kernel instead of full [M, C] maps in HBM).
    o_ref[...] = (a_ref[...] * wa_ref[...] + b_ref[...] * wb_ref[...] +
                  c_ref[...] * wc_ref[...] + d_ref[...] * wd_ref[...])


# ----------------------------------------------------------------------------
# pallas_call helper: whole-array blocks (every tensor here is tens of KiB).
# ----------------------------------------------------------------------------

def _whole_spec(shape):
    nd = len(shape)
    return pl.BlockSpec(tuple(shape), lambda i, _n=nd: (0,) * _n)


def _call_whole(kernel, out_shape, *args):
    return pl.pallas_call(
        kernel,
        grid=(1,),
        in_specs=[_whole_spec(a.shape) for a in args],
        out_specs=_whole_spec(tuple(out_shape)),
        out_shape=jax.ShapeDtypeStruct(tuple(out_shape), jnp.float32),
        compiler_params=pltpu.CompilerParams(dimension_semantics=("arbitrary",)),
    )(*args)


# ----------------------------------------------------------------------------
# Layer building blocks (thin JAX glue around the fused Pallas kernels).
# Activations travel as (x_cm [C, N*H*W], spatial=(N, H, W)).
# ----------------------------------------------------------------------------

def conv2d_fused(x_cm, spatial, w, kernel, pad=0, pad_mode="zero", extra=None):
    """Conv (bias=False) with fused epilogue.  w: HWIO [KH, KW, Cin, Cout]."""
    N, H, W = spatial
    Cin = x_cm.shape[0]
    KH, KW, _, Cout = w.shape
    x4 = x_cm.reshape(Cin, N, H, W)
    if pad > 0:
        mode = "reflect" if pad_mode == "reflect" else "constant"
        x4 = jnp.pad(x4, ((0, 0), (0, 0), (pad, pad), (pad, pad)), mode=mode)
    Hp, Wp = H + 2 * pad, W + 2 * pad
    Ho, Wo = Hp - KH + 1, Wp - KW + 1
    M = N * Ho * Wo
    # im2col, transposed so the matmul output is [Cout, M] (lane-dense).
    taps = []
    for kh in range(KH):
        for kw in range(KW):
            taps.append(x4[:, :, kh:kh + Ho, kw:kw + Wo].reshape(Cin, M))
    a_t = jnp.concatenate(taps, axis=0).astype(jnp.bfloat16)                    # [K, M]
    b_t = jnp.transpose(w, (3, 0, 1, 2)).reshape(Cout, KH * KW * Cin)
    b_t = b_t.astype(jnp.bfloat16)                                              # [Cout, K]
    args = (b_t, a_t) if extra is None else (b_t, a_t, extra)
    out = _call_whole(kernel, (Cout, M), *args)
    return out, (N, Ho, Wo)


def downsample_blur(x_cm, spatial):
    """Downsample(channels): reflect pad 1, depthwise 3x3 binomial blur, stride 2."""
    N, H, W = spatial
    C = x_cm.shape[0]
    x4 = x_cm.reshape(C, N, H, W)
    xp = jnp.pad(x4, ((0, 0), (0, 0), (1, 1), (1, 1)), mode="reflect")
    Ho = (H + 2 - 3) // 2 + 1
    Wo = (W + 2 - 3) // 2 + 1
    Mo = N * Ho * Wo
    taps = []
    for kh in range(3):
        for kw in range(3):
            taps.append(xp[:, :, kh:kh + 2 * Ho:2, kw:kw + 2 * Wo:2].reshape(C, Mo))
    t = jnp.stack(taps, axis=0)                                                  # [9, C, Mo]
    out = _call_whole(_blur_kernel, (C, Mo), t)
    return out, (N, Ho, Wo)


def _bilinear_iw(n_in, n_out):
    # PyTorch F.interpolate(mode='bilinear', align_corners=False) source coordinates.
    o = jnp.arange(n_out, dtype=jnp.float32)
    src = jnp.maximum((o + 0.5) * (n_in / n_out) - 0.5, 0.0)
    i0 = jnp.minimum(jnp.floor(src).astype(jnp.int32), n_in - 1)
    i1 = jnp.minimum(i0 + 1, n_in - 1)
    f = src - i0.astype(jnp.float32)
    return i0, i1, f


def upsample2_bilinear(x_cm, spatial):
    N, H, W = spatial
    C = x_cm.shape[0]
    x4 = x_cm.reshape(C, N, H, W)
    Ho, Wo = 2 * H, 2 * W
    M = N * Ho * Wo
    ih0, ih1, fh = _bilinear_iw(H, Ho)
    iw0, iw1, fw = _bilinear_iw(W, Wo)
    xh0, xh1 = x4[:, :, ih0], x4[:, :, ih1]
    a = xh0[:, :, :, iw0]
    b = xh0[:, :, :, iw1]
    c = xh1[:, :, :, iw0]
    d = xh1[:, :, :, iw1]
    # Compact [1, M] weight rows (broadcast over channels inside the kernel).
    wh0, wh1 = (1.0 - fh)[:, None], fh[:, None]
    ww0, ww1 = (1.0 - fw)[None, :], fw[None, :]

    def wmap(wh, ww):
        return jnp.broadcast_to((wh * ww)[None, :, :], (N, Ho, Wo)).reshape(1, M)

    wa, wb, wc, wd = wmap(wh0, ww0), wmap(wh0, ww1), wmap(wh1, ww0), wmap(wh1, ww1)
    flat = lambda t: t.reshape(C, M)
    out = _call_whole(_lerp4_kernel, (C, M),
                      flat(a), flat(b), flat(c), flat(d), wa, wb, wc, wd)
    return out, (N, Ho, Wo)


# ----------------------------------------------------------------------------
# Parameters (deterministic synthetic init; use_bias=False => no conv biases;
# BatchNorm gamma=1 / beta=0 => affine identity, kept implicit).
# ----------------------------------------------------------------------------

def init_params(key, input_nc=3, output_nc=3, ngf=8, n_blocks=2):
    shapes = {
        "c0": (5, 5, input_nc, ngf // 2),
        "c1": (3, 3, ngf // 2, ngf),
        "d0": (3, 3, ngf, ngf * 2),
        "d1": (3, 3, ngf * 2, ngf * 4),
    }
    for i in range(n_blocks):
        shapes[f"r{i}"] = (3, 3, ngf * 4, ngf * 4)
    shapes.update({
        "u0": (3, 3, ngf * 4, ngf * 2),
        "u1": (3, 3, ngf * 2, ngf),
        "f0": (5, 5, ngf, ngf // 2),
        "f1": (3, 3, ngf // 2, output_nc),
    })
    params = {}
    keys = jax.random.split(key, len(shapes))
    for k, (name, shp) in zip(keys, shapes.items()):
        fan_in = shp[0] * shp[1] * shp[2]
        params[name] = jax.random.normal(k, shp, jnp.float32) / jnp.sqrt(float(fan_in))
    return params


# ----------------------------------------------------------------------------
# Full forward pass (input / output: PyTorch-style NCHW)
# ----------------------------------------------------------------------------

def resnet_generator_forward(x_nchw, params, n_blocks=2):
    N, Cin, H, W = x_nchw.shape
    h = jnp.transpose(x_nchw, (1, 0, 2, 3)).reshape(Cin, N * H * W)   # -> [C, M]
    sp = (N, H, W)

    # Initial block
    h, sp = conv2d_fused(h, sp, params["c0"], _conv_wibrelu_kernel, pad=3, pad_mode="reflect")
    h, sp = conv2d_fused(h, sp, params["c1"], _conv_wibrelu_kernel, pad=0)

    # Downsampling: conv+BN+ReLU fused, then antialiased stride-2 blur
    for name in ("d0", "d1"):
        h, sp = conv2d_fused(h, sp, params[name], _conv_bn_relu_kernel, pad=1, pad_mode="zero")
        h, sp = downsample_blur(h, sp)

    # ResNet blocks (conv + ReLU + residual add fused)
    for i in range(n_blocks):
        h, sp = conv2d_fused(h, sp, params[f"r{i}"], _conv_residual_relu_kernel,
                             pad=1, pad_mode="reflect", extra=h)

    # Upsampling: bilinear lerp kernel, then conv+BN+WIBReLU fused
    for name in ("u0", "u1"):
        h, sp = upsample2_bilinear(h, sp)
        h, sp = conv2d_fused(h, sp, params[name], _conv_bn_wibrelu_kernel, pad=1, pad_mode="zero")

    # Final block
    h, sp = conv2d_fused(h, sp, params["f0"], _conv_wibrelu_kernel, pad=3, pad_mode="reflect")
    h, sp = conv2d_fused(h, sp, params["f1"], _conv_tanh_kernel, pad=0)

    Nn, Ho, Wo = sp
    out = h.reshape(-1, Nn, Ho, Wo)                 # [Cout, N, H, W]
    return jnp.transpose(out, (1, 0, 2, 3))         # NCHW


if __name__ == "__main__":
    key = jax.random.PRNGKey(0)
    kx, kp = jax.random.split(key)

    # PyTorch-style NCHW input [2, 3, 16, 16]
    x = jax.random.normal(kx, (2, 3, 16, 16), jnp.float32)

    n_blocks = 2  # small config: input_nc=3, output_nc=3, ngf=8, n_blocks=2
    params = init_params(kp, input_nc=3, output_nc=3, ngf=8, n_blocks=n_blocks)

    fwd = jax.jit(functools.partial(resnet_generator_forward, n_blocks=n_blocks))
    out = fwd(x, params)
    jax.block_until_ready(out)

    assert out.shape == (2, 3, 16, 16), out.shape
    assert bool(jnp.all(jnp.isfinite(out)))
    print("KERNEL_OK")
</pallas_src>

<mosaic_0001>
module attributes {stable_mosaic.version = 11 : i64} {
  func.func @_conv_wibrelu_kernel(%arg0: i32, %arg1: memref<4x75xbf16, #tpu.memory_space<vmem>>, %arg2: memref<75x648xbf16, #tpu.memory_space<vmem>>, %arg3: memref<4x648xf32, #tpu.memory_space<vmem>>) attributes {dimension_semantics = [#tpu.dimension_semantics<arbitrary>], iteration_bounds = array<i64: 1>, scalar_prefetch = 0 : i64, scratch_operands = 0 : i64, tpu.core_type = #tpu.core_type<tc>, window_params = [{pipeline_mode = #tpu.pipeline_mode<synchronous>, transform_indices = @transform_0, window_bounds = array<i64: 4, 75>}, {pipeline_mode = #tpu.pipeline_mode<synchronous>, transform_indices = @transform_1, window_bounds = array<i64: 75, 648>}, {pipeline_mode = #tpu.pipeline_mode<synchronous>, transform_indices = @transform_2, window_bounds = array<i64: 4, 648>}]} {
    %c0 = arith.constant 0 : index
    %c0_0 = arith.constant 0 : index
    %0 = vector.load %arg1[%c0, %c0_0] : memref<4x75xbf16, #tpu.memory_space<vmem>>, vector<4x75xbf16>
    %c0_1 = arith.constant 0 : index
    %c0_2 = arith.constant 0 : index
    %1 = vector.load %arg2[%c0_1, %c0_2] : memref<75x648xbf16, #tpu.memory_space<vmem>>, vector<75x648xbf16>
    %cst = arith.constant dense<0.000000e+00> : vector<4x648xf32>
    %2 = tpu.matmul %0, %1, %cst {dimension_numbers = #tpu.dot_dimension_numbers<[1], [0], [0], [1], [0, 0, 1, 1], [], []>} : vector<4x75xbf16>, vector<75x648xbf16>, vector<4x648xf32> -> vector<4x648xf32>
    %cst_3 = arith.constant 0.000000e+00 : f32
    %3 = vector.broadcast %cst_3 : f32 to vector<4x648xf32>
    %4 = arith.maximumf %2, %3 : vector<4x648xf32>
    %5 = vector.shape_cast %2 : vector<4x648xf32> to vector<1x4x648xf32>
    %cst_4 = arith.constant dense<0.000000e+00> : vector<1xf32>
    %6 = vector.multi_reduction <add>, %5, %cst_4 [1, 2] : vector<1x4x648xf32> to vector<1xf32>
    %7 = vector.shape_cast %6 : vector<1xf32> to vector<1x1x1xf32>
    %8 = vector.extract %7[0, 0, 0] : f32 from vector<1x1x1xf32>
    %cst_5 = arith.constant 2.592000e+03 : f32
    %9 = arith.divf %8, %cst_5 : f32
    %10 = vector.broadcast %9 : f32 to vector<4x648xf32>
    %11 = arith.subf %4, %10 : vector<4x648xf32>
    %c0_6 = arith.constant 0 : index
    %c0_7 = arith.constant 0 : index
    %12 = vector.load %arg3[%c0_6, %c0_7] : memref<4x648xf32, #tpu.memory_space<vmem>>, vector<4x648xf32>
    tpu.vector_store %arg3[%c0_6, %c0_7], %11 {strides = array<i32>} : memref<4x648xf32, #tpu.memory_space<vmem>>, vector<4x648xf32>,
    return
  }
  func.func @transform_0(%arg0: i32) -> (i32, i32) {
    %c0_i32 = arith.constant 0 : i32
    %c0_i32_0 = arith.constant 0 : i32
    %c0_i32_1 = arith.constant 0 : i32
    return %c0_i32, %c0_i32_0 : i32, i32
  }
  func.func @transform_1(%arg0: i32) -> (i32, i32) {
    %c0_i32 = arith.constant 0 : i32
    %c0_i32_0 = arith.constant 0 : i32
    %c0_i32_1 = arith.constant 0 : i32
    return %c0_i32, %c0_i32_0 : i32, i32
  }
  func.func @transform_2(%arg0: i32) -> (i32, i32) {
    %c0_i32 = arith.constant 0 : i32
    %c0_i32_0 = arith.constant 0 : i32
    %c0_i32_1 = arith.constant 0 : i32
    return %c0_i32, %c0_i32_0 : i32, i32
  }
}

module attributes {stable_mosaic.version = 11 : i64} {
  func.func @_conv_wibrelu_kernel(%arg0: i32, %arg1: memref<8x36xbf16, #tpu.memory_space<vmem>>, %arg2: memref<36x512xbf16, #tpu.memory_space<vmem>>, %arg3: memref<8x512xf32, #tpu.memory_space<vmem>>) attributes {dimension_semantics = [#tpu.dimension_semantics<arbitrary>], iteration_bounds = array<i64: 1>, scalar_prefetch = 0 : i64, scratch_operands = 0 : i64, tpu.core_type = #tpu.core_type<tc>, window_params = [{pipeline_mode = #tpu.pipeline_mode<synchronous>, transform_indices = @transform_0, window_bounds = array<i64: 8, 36>}, {pipeline_mode = #tpu.pipeline_mode<synchronous>, transform_indices = @transform_1, window_bounds = array<i64: 36, 512>}, {pipeline_mode = #tpu.pipeline_mode<synchronous>, transform_indices = @transform_2, window_bounds = array<i64: 8, 512>}]} {
    %c0 = arith.constant 0 : index
    %c0_0 = arith.constant 0 : index
    %0 = vector.load %arg1[%c0, %c0_0] : memref<8x36xbf16, #tpu.memory_space<vmem>>, vector<8x36xbf16>
    %c0_1 = arith.constant 0 : index
    %c0_2 = arith.constant 0 : index
    %1 = vector.load %arg2[%c0_1, %c0_2] : memref<36x512xbf16, #tpu.memory_space<vmem>>, vector<36x512xbf16>
    %cst = arith.constant dense<0.000000e+00> : vector<8x512xf32>
    %2 = tpu.matmul %0, %1, %cst {dimension_numbers = #tpu.dot_dimension_numbers<[1], [0], [0], [1], [0, 0, 1, 1], [], []>} : vector<8x36xbf16>, vector<36x512xbf16>, vector<8x512xf32> -> vector<8x512xf32>
    %cst_3 = arith.constant 0.000000e+00 : f32
    %3 = vector.broadcast %cst_3 : f32 to vector<8x512xf32>
    %4 = arith.maximumf %2, %3 : vector<8x512xf32>
    %5 = vector.shape_cast %2 : vector<8x512xf32> to vector<1x8x512xf32>
    %cst_4 = arith.constant dense<0.000000e+00> : vector<1xf32>
    %6 = vector.multi_reduction <add>, %5, %cst_4 [1, 2] : vector<1x8x512xf32> to vector<1xf32>
    %7 = vector.shape_cast %6 : vector<1xf32> to vector<1x1x1xf32>
    %8 = vector.extract %7[0, 0, 0] : f32 from vector<1x1x1xf32>
    %cst_5 = arith.constant 4.096000e+03 : f32
    %9 = arith.divf %8, %cst_5 : f32
    %10 = vector.broadcast %9 : f32 to vector<8x512xf32>
    %11 = arith.subf %4, %10 : vector<8x512xf32>
    %c0_6 = arith.constant 0 : index
    %c0_7 = arith.constant 0 : index
    %12 = vector.load %arg3[%c0_6, %c0_7] : memref<8x512xf32, #tpu.memory_space<vmem>>, vector<8x512xf32>
    tpu.vector_store %arg3[%c0_6, %c0_7], %11 {strides = array<i32>} : memref<8x512xf32, #tpu.memory_space<vmem>>, vector<8x512xf32>,
    return
  }
  func.func @transform_0(%arg0: i32) -> (i32, i32) {
    %c0_i32 = arith.constant 0 : i32
    %c0_i32_0 = arith.constant 0 : i32
    %c0_i32_1 = arith.constant 0 : i32
    return %c0_i32, %c0_i32_0 : i32, i32
  }
  func.func @transform_1(%arg0: i32) -> (i32, i32) {
    %c0_i32 = arith.constant 0 : i32
    %c0_i32_0 = arith.constant 0 : i32
    %c0_i32_1 = arith.constant 0 : i32
    return %c0_i32, %c0_i32_0 : i32, i32
  }
  func.func @transform_2(%arg0: i32) -> (i32, i32) {
    %c0_i32 = arith.constant 0 : i32
    %c0_i32_0 = arith.constant 0 : i32
    %c0_i32_1 = arith.constant 0 : i32
    return %c0_i32, %c0_i32_0 : i32, i32
  }
}

module attributes {stable_mosaic.version = 11 : i64} {
  func.func @_conv_bn_relu_kernel(%arg0: i32, %arg1: memref<16x72xbf16, #tpu.memory_space<vmem>>, %arg2: memref<72x512xbf16, #tpu.memory_space<vmem>>, %arg3: memref<16x512xf32, #tpu.memory_space<vmem>>) attributes {dimension_semantics = [#tpu.dimension_semantics<arbitrary>], iteration_bounds = array<i64: 1>, scalar_prefetch = 0 : i64, scratch_operands = 0 : i64, tpu.core_type = #tpu.core_type<tc>, window_params = [{pipeline_mode = #tpu.pipeline_mode<synchronous>, transform_indices = @transform_0, window_bounds = array<i64: 16, 72>}, {pipeline_mode = #tpu.pipeline_mode<synchronous>, transform_indices = @transform_1, window_bounds = array<i64: 72, 512>}, {pipeline_mode = #tpu.pipeline_mode<synchronous>, transform_indices = @transform_2, window_bounds = array<i64: 16, 512>}]} {
    %c0 = arith.constant 0 : index
    %c0_0 = arith.constant 0 : index
    %0 = vector.load %arg1[%c0, %c0_0] : memref<16x72xbf16, #tpu.memory_space<vmem>>, vector<16x72xbf16>
    %c0_1 = arith.constant 0 : index
    %c0_2 = arith.constant 0 : index
    %1 = vector.load %arg2[%c0_1, %c0_2] : memref<72x512xbf16, #tpu.memory_space<vmem>>, vector<72x512xbf16>
    %cst = arith.constant dense<0.000000e+00> : vector<16x512xf32>
    %2 = tpu.matmul %0, %1, %cst {dimension_numbers = #tpu.dot_dimension_numbers<[1], [0], [0], [1], [0, 0, 1, 1], [], []>} : vector<16x72xbf16>, vector<72x512xbf16>, vector<16x512xf32> -> vector<16x512xf32>
    %cst_3 = arith.constant dense<0.000000e+00> : vector<16xf32>
    %3 = vector.multi_reduction <add>, %2, %cst_3 [1] : vector<16x512xf32> to vector<16xf32>
    %4 = vector.shape_cast %3 : vector<16xf32> to vector<16x1xf32>
    %cst_4 = arith.constant 5.120000e+02 : f32
    %5 = vector.broadcast %cst_4 : f32 to vector<16x1xf32>
    %6 = arith.divf %4, %5 : vector<16x1xf32>
    %7 = vector.broadcast %6 : vector<16x1xf32> to vector<16x512xf32>
    %8 = arith.subf %2, %7 : vector<16x512xf32>
    %9 = arith.mulf %8, %8 : vector<16x512xf32>
    %cst_5 = arith.constant dense<0.000000e+00> : vector<16xf32>
    %10 = vector.multi_reduction <add>, %9, %cst_5 [1] : vector<16x512xf32> to vector<16xf32>
    %11 = vector.shape_cast %10 : vector<16xf32> to vector<16x1xf32>
    %cst_6 = arith.constant 5.120000e+02 : f32
    %12 = vector.broadcast %cst_6 : f32 to vector<16x1xf32>
    %13 = arith.divf %11, %12 : vector<16x1xf32>
    %14 = vector.broadcast %6 : vector<16x1xf32> to vector<16x512xf32>
    %15 = arith.subf %2, %14 : vector<16x512xf32>
    %cst_7 = arith.constant 9.99999974E-6 : f32
    %16 = vector.broadcast %cst_7 : f32 to vector<16x1xf32>
    %17 = arith.addf %13, %16 : vector<16x1xf32>
    %18 = math.rsqrt %17 : vector<16x1xf32>
    %19 = vector.broadcast %18 : vector<16x1xf32> to vector<16x512xf32>
    %20 = arith.mulf %15, %19 : vector<16x512xf32>
    %cst_8 = arith.constant 0.000000e+00 : f32
    %21 = vector.broadcast %cst_8 : f32 to vector<16x512xf32>
    %22 = arith.maximumf %20, %21 : vector<16x512xf32>
    %c0_9 = arith.constant 0 : index
    %c0_10 = arith.constant 0 : index
    %23 = vector.load %arg3[%c0_9, %c0_10] : memref<16x512xf32, #tpu.memory_space<vmem>>, vector<16x512xf32>
    tpu.vector_store %arg3[%c0_9, %c0_10], %22 {strides = array<i32>} : memref<16x512xf32, #tpu.memory_space<vmem>>, vector<16x512xf32>,
    return
  }
  func.func @transform_0(%arg0: i32) -> (i32, i32) {
    %c0_i32 = arith.constant 0 : i32
    %c0_i32_0 = arith.constant 0 : i32
    %c0_i32_1 = arith.constant 0 : i32
    return %c0_i32, %c0_i32_0 : i32, i32
  }
  func.func @transform_1(%arg0: i32) -> (i32, i32) {
    %c0_i32 = arith.constant 0 : i32
    %c0_i32_0 = arith.constant 0 : i32
    %c0_i32_1 = arith.constant 0 : i32
    return %c0_i32, %c0_i32_0 : i32, i32
  }
  func.func @transform_2(%arg0: i32) -> (i32, i32) {
    %c0_i32 = arith.constant 0 : i32
    %c0_i32_0 = arith.constant 0 : i32
    %c0_i32_1 = arith.constant 0 : i32
    return %c0_i32, %c0_i32_0 : i32, i32
  }
}

module attributes {stable_mosaic.version = 11 : i64} {
  func.func @_blur_kernel(%arg0: i32, %arg1: memref<9x16x128xf32, #tpu.memory_space<vmem>>, %arg2: memref<16x128xf32, #tpu.memory_space<vmem>>) attributes {dimension_semantics = [#tpu.dimension_semantics<arbitrary>], iteration_bounds = array<i64: 1>, scalar_prefetch = 0 : i64, scratch_operands = 0 : i64, tpu.core_type = #tpu.core_type<tc>, window_params = [{pipeline_mode = #tpu.pipeline_mode<synchronous>, transform_indices = @transform_0, window_bounds = array<i64: 9, 16, 128>}, {pipeline_mode = #tpu.pipeline_mode<synchronous>, transform_indices = @transform_1, window_bounds = array<i64: 16, 128>}]} {
    %c0 = arith.constant 0 : index
    %c0_0 = arith.constant 0 : index
    %c0_1 = arith.constant 0 : index
    %0 = vector.load %arg1[%c0, %c0_0, %c0_1] : memref<9x16x128xf32, #tpu.memory_space<vmem>>, vector<1x16x128xf32>
    %1 = vector.shape_cast %0 : vector<1x16x128xf32> to vector<16x128xf32>
    %cst = arith.constant 6.250000e-02 : f32
    %2 = vector.broadcast %cst : f32 to vector<16x128xf32>
    %3 = arith.mulf %1, %2 : vector<16x128xf32>
    %c1 = arith.constant 1 : index
    %c0_2 = arith.constant 0 : index
    %c0_3 = arith.constant 0 : index
    %4 = vector.load %arg1[%c1, %c0_2, %c0_3] : memref<9x16x128xf32, #tpu.memory_space<vmem>>, vector<1x16x128xf32>
    %5 = vector.shape_cast %4 : vector<1x16x128xf32> to vector<16x128xf32>
    %cst_4 = arith.constant 1.250000e-01 : f32
    %6 = vector.broadcast %cst_4 : f32 to vector<16x128xf32>
    %7 = arith.mulf %5, %6 : vector<16x128xf32>
    %8 = arith.addf %3, %7 : vector<16x128xf32>
    %c2 = arith.constant 2 : index
    %c0_5 = arith.constant 0 : index
    %c0_6 = arith.constant 0 : index
    %9 = vector.load %arg1[%c2, %c0_5, %c0_6] : memref<9x16x128xf32, #tpu.memory_space<vmem>>, vector<1x16x128xf32>
    %10 = vector.shape_cast %9 : vector<1x16x128xf32> to vector<16x128xf32>
    %cst_7 = arith.constant 6.250000e-02 : f32
    %11 = vector.broadcast %cst_7 : f32 to vector<16x128xf32>
    %12 = arith.mulf %10, %11 : vector<16x128xf32>
    %13 = arith.addf %8, %12 : vector<16x128xf32>
    %c3 = arith.constant 3 : index
    %c0_8 = arith.constant 0 : index
    %c0_9 = arith.constant 0 : index
    %14 = vector.load %arg1[%c3, %c0_8, %c0_9] : memref<9x16x128xf32, #tpu.memory_space<vmem>>, vector<1x16x128xf32>
    %15 = vector.shape_cast %14 : vector<1x16x128xf32> to vector<16x128xf32>
    %cst_10 = arith.constant 1.250000e-01 : f32
    %16 = vector.broadcast %cst_10 : f32 to vector<16x128xf32>
    %17 = arith.mulf %15, %16 : vector<16x128xf32>
    %18 = arith.addf %13, %17 : vector<16x128xf32>
    %c4 = arith.constant 4 : index
    %c0_11 = arith.constant 0 : index
    %c0_12 = arith.constant 0 : index
    %19 = vector.load %arg1[%c4, %c0_11, %c0_12] : memref<9x16x128xf32, #tpu.memory_space<vmem>>, vector<1x16x128xf32>
    %20 = vector.shape_cast %19 : vector<1x16x128xf32> to vector<16x128xf32>
    %cst_13 = arith.constant 2.500000e-01 : f32
    %21 = vector.broadcast %cst_13 : f32 to vector<16x128xf32>
    %22 = arith.mulf %20, %21 : vector<16x128xf32>
    %23 = arith.addf %18, %22 : vector<16x128xf32>
    %c5 = arith.constant 5 : index
    %c0_14 = arith.constant 0 : index
    %c0_15 = arith.constant 0 : index
    %24 = vector.load %arg1[%c5, %c0_14, %c0_15] : memref<9x16x128xf32, #tpu.memory_space<vmem>>, vector<1x16x128xf32>
    %25 = vector.shape_cast %24 : vector<1x16x128xf32> to vector<16x128xf32>
    %cst_16 = arith.constant 1.250000e-01 : f32
    %26 = vector.broadcast %cst_16 : f32 to vector<16x128xf32>
    %27 = arith.mulf %25, %26 : vector<16x128xf32>
    %28 = arith.addf %23, %27 : vector<16x128xf32>
    %c6 = arith.constant 6 : index
    %c0_17 = arith.constant 0 : index
    %c0_18 = arith.constant 0 : index
    %29 = vector.load %arg1[%c6, %c0_17, %c0_18] : memref<9x16x128xf32, #tpu.memory_space<vmem>>, vector<1x16x128xf32>
    %30 = vector.shape_cast %29 : vector<1x16x128xf32> to vector<16x128xf32>
    %cst_19 = arith.constant 6.250000e-02 : f32
    %31 = vector.broadcast %cst_19 : f32 to vector<16x128xf32>
    %32 = arith.mulf %30, %31 : vector<16x128xf32>
    %33 = arith.addf %28, %32 : vector<16x128xf32>
    %c7 = arith.constant 7 : index
    %c0_20 = arith.constant 0 : index
    %c0_21 = arith.constant 0 : index
    %34 = vector.load %arg1[%c7, %c0_20, %c0_21] : memref<9x16x128xf32, #tpu.memory_space<vmem>>, vector<1x16x128xf32>
    %35 = vector.shape_cast %34 : vector<1x16x128xf32> to vector<16x128xf32>
    %cst_22 = arith.constant 1.250000e-01 : f32
    %36 = vector.broadcast %cst_22 : f32 to vector<16x128xf32>
    %37 = arith.mulf %35, %36 : vector<16x128xf32>
    %38 = arith.addf %33, %37 : vector<16x128xf32>
    %c8 = arith.constant 8 : index
    %c0_23 = arith.constant 0 : index
    %c0_24 = arith.constant 0 : index
    %39 = vector.load %arg1[%c8, %c0_23, %c0_24] : memref<9x16x128xf32, #tpu.memory_space<vmem>>, vector<1x16x128xf32>
    %40 = vector.shape_cast %39 : vector<1x16x128xf32> to vector<16x128xf32>
    %cst_25 = arith.constant 6.250000e-02 : f32
    %41 = vector.broadcast %cst_25 : f32 to vector<16x128xf32>
    %42 = arith.mulf %40, %41 : vector<16x128xf32>
    %43 = arith.addf %38, %42 : vector<16x128xf32>
    %c0_26 = arith.constant 0 : index
    %c0_27 = arith.constant 0 : index
    %44 = vector.load %arg2[%c0_26, %c0_27] : memref<16x128xf32, #tpu.memory_space<vmem>>, vector<16x128xf32>
    tpu.vector_store %arg2[%c0_26, %c0_27], %43 {strides = array<i32>} : memref<16x128xf32, #tpu.memory_space<vmem>>, vector<16x128xf32>,
    return
  }
  func.func @transform_0(%arg0: i32) -> (i32, i32, i32) {
    %c0_i32 = arith.constant 0 : i32
    %c0_i32_0 = arith.constant 0 : i32
    %c0_i32_1 = arith.constant 0 : i32
    %c0_i32_2 = arith.constant 0 : i32
    return %c0_i32, %c0_i32_0, %c0_i32_1 : i32, i32, i32
  }
  func.func @transform_1(%arg0: i32) -> (i32, i32) {
    %c0_i32 = arith.constant 0 : i32
    %c0_i32_0 = arith.constant 0 : i32
    %c0_i32_1 = arith.constant 0 : i32
    return %c0_i32, %c0_i32_0 : i32, i32
  }
}

module attributes {stable_mosaic.version = 11 : i64} {
  func.func @_conv_bn_relu_kernel(%arg0: i32, %arg1: memref<32x144xbf16, #tpu.memory_space<vmem>>, %arg2: memref<144x128xbf16, #tpu.memory_space<vmem>>, %arg3: memref<32x128xf32, #tpu.memory_space<vmem>>) attributes {dimension_semantics = [#tpu.dimension_semantics<arbitrary>], iteration_bounds = array<i64: 1>, scalar_prefetch = 0 : i64, scratch_operands = 0 : i64, tpu.core_type = #tpu.core_type<tc>, window_params = [{pipeline_mode = #tpu.pipeline_mode<synchronous>, transform_indices = @transform_0, window_bounds = array<i64: 32, 144>}, {pipeline_mode = #tpu.pipeline_mode<synchronous>, transform_indices = @transform_1, window_bounds = array<i64: 144, 128>}, {pipeline_mode = #tpu.pipeline_mode<synchronous>, transform_indices = @transform_2, window_bounds = array<i64: 32, 128>}]} {
    %c0 = arith.constant 0 : index
    %c0_0 = arith.constant 0 : index
    %0 = vector.load %arg1[%c0, %c0_0] : memref<32x144xbf16, #tpu.memory_space<vmem>>, vector<32x144xbf16>
    %c0_1 = arith.constant 0 : index
    %c0_2 = arith.constant 0 : index
    %1 = vector.load %arg2[%c0_1, %c0_2] : memref<144x128xbf16, #tpu.memory_space<vmem>>, vector<144x128xbf16>
    %cst = arith.constant dense<0.000000e+00> : vector<32x128xf32>
    %2 = tpu.matmul %0, %1, %cst {dimension_numbers = #tpu.dot_dimension_numbers<[1], [0], [0], [1], [0, 0, 1, 1], [], []>} : vector<32x144xbf16>, vector<144x128xbf16>, vector<32x128xf32> -> vector<32x128xf32>
    %cst_3 = arith.constant dense<0.000000e+00> : vector<32xf32>
    %3 = vector.multi_reduction <add>, %2, %cst_3 [1] : vector<32x128xf32> to vector<32xf32>
    %4 = vector.shape_cast %3 : vector<32xf32> to vector<32x1xf32>
    %cst_4 = arith.constant 1.280000e+02 : f32
    %5 = vector.broadcast %cst_4 : f32 to vector<32x1xf32>
    %6 = arith.divf %4, %5 : vector<32x1xf32>
    %7 = vector.broadcast %6 : vector<32x1xf32> to vector<32x128xf32>
    %8 = arith.subf %2, %7 : vector<32x128xf32>
    %9 = arith.mulf %8, %8 : vector<32x128xf32>
    %cst_5 = arith.constant dense<0.000000e+00> : vector<32xf32>
    %10 = vector.multi_reduction <add>, %9, %cst_5 [1] : vector<32x128xf32> to vector<32xf32>
    %11 = vector.shape_cast %10 : vector<32xf32> to vector<32x1xf32>
    %cst_6 = arith.constant 1.280000e+02 : f32
    %12 = vector.broadcast %cst_6 : f32 to vector<32x1xf32>
    %13 = arith.divf %11, %12 : vector<32x1xf32>
    %14 = vector.broadcast %6 : vector<32x1xf32> to vector<32x128xf32>
    %15 = arith.subf %2, %14 : vector<32x128xf32>
    %cst_7 = arith.constant 9.99999974E-6 : f32
    %16 = vector.broadcast %cst_7 : f32 to vector<32x1xf32>
    %17 = arith.addf %13, %16 : vector<32x1xf32>
    %18 = math.rsqrt %17 : vector<32x1xf32>
    %19 = vector.broadcast %18 : vector<32x1xf32> to vector<32x128xf32>
    %20 = arith.mulf %15, %19 : vector<32x128xf32>
    %cst_8 = arith.constant 0.000000e+00 : f32
    %21 = vector.broadcast %cst_8 : f32 to vector<32x128xf32>
    %22 = arith.maximumf %20, %21 : vector<32x128xf32>
    %c0_9 = arith.constant 0 : index
    %c0_10 = arith.constant 0 : index
    %23 = vector.load %arg3[%c0_9, %c0_10] : memref<32x128xf32, #tpu.memory_space<vmem>>, vector<32x128xf32>
    tpu.vector_store %arg3[%c0_9, %c0_10], %22 {strides = array<i32>} : memref<32x128xf32, #tpu.memory_space<vmem>>, vector<32x128xf32>,
    return
  }
  func.func @transform_0(%arg0: i32) -> (i32, i32) {
    %c0_i32 = arith.constant 0 : i32
    %c0_i32_0 = arith.constant 0 : i32
    %c0_i32_1 = arith.constant 0 : i32
    return %c0_i32, %c0_i32_0 : i32, i32
  }
  func.func @transform_1(%arg0: i32) -> (i32, i32) {
    %c0_i32 = arith.constant 0 : i32
    %c0_i32_0 = arith.constant 0 : i32
    %c0_i32_1 = arith.constant 0 : i32
    return %c0_i32, %c0_i32_0 : i32, i32
  }
  func.func @transform_2(%arg0: i32) -> (i32, i32) {
    %c0_i32 = arith.constant 0 : i32
    %c0_i32_0 = arith.constant 0 : i32
    %c0_i32_1 = arith.constant 0 : i32
    return %c0_i32, %c0_i32_0 : i32, i32
  }
}

module attributes {stable_mosaic.version = 11 : i64} {
  func.func @_blur_kernel(%arg0: i32, %arg1: memref<9x32x32xf32, #tpu.memory_space<vmem>>, %arg2: memref<32x32xf32, #tpu.memory_space<vmem>>) attributes {dimension_semantics = [#tpu.dimension_semantics<arbitrary>], iteration_bounds = array<i64: 1>, scalar_prefetch = 0 : i64, scratch_operands = 0 : i64, tpu.core_type = #tpu.core_type<tc>, window_params = [{pipeline_mode = #tpu.pipeline_mode<synchronous>, transform_indices = @transform_0, window_bounds = array<i64: 9, 32, 32>}, {pipeline_mode = #tpu.pipeline_mode<synchronous>, transform_indices = @transform_1, window_bounds = array<i64: 32, 32>}]} {
    %c0 = arith.constant 0 : index
    %c0_0 = arith.constant 0 : index
    %c0_1 = arith.constant 0 : index
    %0 = vector.load %arg1[%c0, %c0_0, %c0_1] : memref<9x32x32xf32, #tpu.memory_space<vmem>>, vector<1x32x32xf32>
    %1 = vector.shape_cast %0 : vector<1x32x32xf32> to vector<32x32xf32>
    %cst = arith.constant 6.250000e-02 : f32
    %2 = vector.broadcast %cst : f32 to vector<32x32xf32>
    %3 = arith.mulf %1, %2 : vector<32x32xf32>
    %c1 = arith.constant 1 : index
    %c0_2 = arith.constant 0 : index
    %c0_3 = arith.constant 0 : index
    %4 = vector.load %arg1[%c1, %c0_2, %c0_3] : memref<9x32x32xf32, #tpu.memory_space<vmem>>, vector<1x32x32xf32>
    %5 = vector.shape_cast %4 : vector<1x32x32xf32> to vector<32x32xf32>
    %cst_4 = arith.constant 1.250000e-01 : f32
    %6 = vector.broadcast %cst_4 : f32 to vector<32x32xf32>
    %7 = arith.mulf %5, %6 : vector<32x32xf32>
    %8 = arith.addf %3, %7 : vector<32x32xf32>
    %c2 = arith.constant 2 : index
    %c0_5 = arith.constant 0 : index
    %c0_6 = arith.constant 0 : index
    %9 = vector.load %arg1[%c2, %c0_5, %c0_6] : memref<9x32x32xf32, #tpu.memory_space<vmem>>, vector<1x32x32xf32>
    %10 = vector.shape_cast %9 : vector<1x32x32xf32> to vector<32x32xf32>
    %cst_7 = arith.constant 6.250000e-02 : f32
    %11 = vector.broadcast %cst_7 : f32 to vector<32x32xf32>
    %12 = arith.mulf %10, %11 : vector<32x32xf32>
    %13 = arith.addf %8, %12 : vector<32x32xf32>
    %c3 = arith.constant 3 : index
    %c0_8 = arith.constant 0 : index
    %c0_9 = arith.constant 0 : index
    %14 = vector.load %arg1[%c3, %c0_8, %c0_9] : memref<9x32x32xf32, #tpu.memory_space<vmem>>, vector<1x32x32xf32>
    %15 = vector.shape_cast %14 : vector<1x32x32xf32> to vector<32x32xf32>
    %cst_10 = arith.constant 1.250000e-01 : f32
    %16 = vector.broadcast %cst_10 : f32 to vector<32x32xf32>
    %17 = arith.mulf %15, %16 : vector<32x32xf32>
    %18 = arith.addf %13, %17 : vector<32x32xf32>
    %c4 = arith.constant 4 : index
    %c0_11 = arith.constant 0 : index
    %c0_12 = arith.constant 0 : index
    %19 = vector.load %arg1[%c4, %c0_11, %c0_12] : memref<9x32x32xf32, #tpu.memory_space<vmem>>, vector<1x32x32xf32>
    %20 = vector.shape_cast %19 : vector<1x32x32xf32> to vector<32x32xf32>
    %cst_13 = arith.constant 2.500000e-01 : f32
    %21 = vector.broadcast %cst_13 : f32 to vector<32x32xf32>
    %22 = arith.mulf %20, %21 : vector<32x32xf32>
    %23 = arith.addf %18, %22 : vector<32x32xf32>
    %c5 = arith.constant 5 : index
    %c0_14 = arith.constant 0 : index
    %c0_15 = arith.constant 0 : index
    %24 = vector.load %arg1[%c5, %c0_14, %c0_15] : memref<9x32x32xf32, #tpu.memory_space<vmem>>, vector<1x32x32xf32>
    %25 = vector.shape_cast %24 : vector<1x32x32xf32> to vector<32x32xf32>
    %cst_16 = arith.constant 1.250000e-01 : f32
    %26 = vector.broadcast %cst_16 : f32 to vector<32x32xf32>
    %27 = arith.mulf %25, %26 : vector<32x32xf32>
    %28 = arith.addf %23, %27 : vector<32x32xf32>
    %c6 = arith.constant 6 : index
    %c0_17 = arith.constant 0 : index
    %c0_18 = arith.constant 0 : index
    %29 = vector.load %arg1[%c6, %c0_17, %c0_18] : memref<9x32x32xf32, #tpu.memory_space<vmem>>, vector<1x32x32xf32>
    %30 = vector.shape_cast %29 : vector<1x32x32xf32> to vector<32x32xf32>
    %cst_19 = arith.constant 6.250000e-02 : f32
    %31 = vector.broadcast %cst_19 : f32 to vector<32x32xf32>
    %32 = arith.mulf %30, %31 : vector<32x32xf32>
    %33 = arith.addf %28, %32 : vector<32x32xf32>
    %c7 = arith.constant 7 : index
    %c0_20 = arith.constant 0 : index
    %c0_21 = arith.constant 0 : index
    %34 = vector.load %arg1[%c7, %c0_20, %c0_21] : memref<9x32x32xf32, #tpu.memory_space<vmem>>, vector<1x32x32xf32>
    %35 = vector.shape_cast %34 : vector<1x32x32xf32> to vector<32x32xf32>
    %cst_22 = arith.constant 1.250000e-01 : f32
    %36 = vector.broadcast %cst_22 : f32 to vector<32x32xf32>
    %37 = arith.mulf %35, %36 : vector<32x32xf32>
    %38 = arith.addf %33, %37 : vector<32x32xf32>
    %c8 = arith.constant 8 : index
    %c0_23 = arith.constant 0 : index
    %c0_24 = arith.constant 0 : index
    %39 = vector.load %arg1[%c8, %c0_23, %c0_24] : memref<9x32x32xf32, #tpu.memory_space<vmem>>, vector<1x32x32xf32>
    %40 = vector.shape_cast %39 : vector<1x32x32xf32> to vector<32x32xf32>
    %cst_25 = arith.constant 6.250000e-02 : f32
    %41 = vector.broadcast %cst_25 : f32 to vector<32x32xf32>
    %42 = arith.mulf %40, %41 : vector<32x32xf32>
    %43 = arith.addf %38, %42 : vector<32x32xf32>
    %c0_26 = arith.constant 0 : index
    %c0_27 = arith.constant 0 : index
    %44 = vector.load %arg2[%c0_26, %c0_27] : memref<32x32xf32, #tpu.memory_space<vmem>>, vector<32x32xf32>
    tpu.vector_store %arg2[%c0_26, %c0_27], %43 {strides = array<i32>} : memref<32x32xf32, #tpu.memory_space<vmem>>, vector<32x32xf32>,
    return
  }
  func.func @transform_0(%arg0: i32) -> (i32, i32, i32) {
    %c0_i32 = arith.constant 0 : i32
    %c0_i32_0 = arith.constant 0 : i32
    %c0_i32_1 = arith.constant 0 : i32
    %c0_i32_2 = arith.constant 0 : i32
    return %c0_i32, %c0_i32_0, %c0_i32_1 : i32, i32, i32
  }
  func.func @transform_1(%arg0: i32) -> (i32, i32) {
    %c0_i32 = arith.constant 0 : i32
    %c0_i32_0 = arith.constant 0 : i32
    %c0_i32_1 = arith.constant 0 : i32
    return %c0_i32, %c0_i32_0 : i32, i32
  }
}

module attributes {stable_mosaic.version = 11 : i64} {
  func.func @_conv_residual_relu_kernel(%arg0: i32, %arg1: memref<32x288xbf16, #tpu.memory_space<vmem>>, %arg2: memref<288x32xbf16, #tpu.memory_space<vmem>>, %arg3: memref<32x32xf32, #tpu.memory_space<vmem>>, %arg4: memref<32x32xf32, #tpu.memory_space<vmem>>) attributes {dimension_semantics = [#tpu.dimension_semantics<arbitrary>], iteration_bounds = array<i64: 1>, scalar_prefetch = 0 : i64, scratch_operands = 0 : i64, tpu.core_type = #tpu.core_type<tc>, window_params = [{pipeline_mode = #tpu.pipeline_mode<synchronous>, transform_indices = @transform_0, window_bounds = array<i64: 32, 288>}, {pipeline_mode = #tpu.pipeline_mode<synchronous>, transform_indices = @transform_1, window_bounds = array<i64: 288, 32>}, {pipeline_mode = #tpu.pipeline_mode<synchronous>, transform_indices = @transform_2, window_bounds = array<i64: 32, 32>}, {pipeline_mode = #tpu.pipeline_mode<synchronous>, transform_indices = @transform_3, window_bounds = array<i64: 32, 32>}]} {
    %c0 = arith.constant 0 : index
    %c0_0 = arith.constant 0 : index
    %0 = vector.load %arg1[%c0, %c0_0] : memref<32x288xbf16, #tpu.memory_space<vmem>>, vector<32x288xbf16>
    %c0_1 = arith.constant 0 : index
    %c0_2 = arith.constant 0 : index
    %1 = vector.load %arg2[%c0_1, %c0_2] : memref<288x32xbf16, #tpu.memory_space<vmem>>, vector<288x32xbf16>
    %cst = arith.constant dense<0.000000e+00> : vector<32x32xf32>
    %2 = tpu.matmul %0, %1, %cst {dimension_numbers = #tpu.dot_dimension_numbers<[1], [0], [0], [1], [0, 0, 1, 1], [], []>} : vector<32x288xbf16>, vector<288x32xbf16>, vector<32x32xf32> -> vector<32x32xf32>
    %c0_3 = arith.constant 0 : index
    %c0_4 = arith.constant 0 : index
    %3 = vector.load %arg3[%c0_3, %c0_4] : memref<32x32xf32, #tpu.memory_space<vmem>>, vector<32x32xf32>
    %cst_5 = arith.constant 0.000000e+00 : f32
    %4 = vector.broadcast %cst_5 : f32 to vector<32x32xf32>
    %5 = arith.maximumf %2, %4 : vector<32x32xf32>
    %6 = arith.addf %3, %5 : vector<32x32xf32>
    %c0_6 = arith.constant 0 : index
    %c0_7 = arith.constant 0 : index
    %7 = vector.load %arg4[%c0_6, %c0_7] : memref<32x32xf32, #tpu.memory_space<vmem>>, vector<32x32xf32>
    tpu.vector_store %arg4[%c0_6, %c0_7], %6 {strides = array<i32>} : memref<32x32xf32, #tpu.memory_space<vmem>>, vector<32x32xf32>,
    return
  }
  func.func @transform_0(%arg0: i32) -> (i32, i32) {
    %c0_i32 = arith.constant 0 : i32
    %c0_i32_0 = arith.constant 0 : i32
    %c0_i32_1 = arith.constant 0 : i32
    return %c0_i32, %c0_i32_0 : i32, i32
  }
  func.func @transform_1(%arg0: i32) -> (i32, i32) {
    %c0_i32 = arith.constant 0 : i32
    %c0_i32_0 = arith.constant 0 : i32
    %c0_i32_1 = arith.constant 0 : i32
    return %c0_i32, %c0_i32_0 : i32, i32
  }
  func.func @transform_2(%arg0: i32) -> (i32, i32) {
    %c0_i32 = arith.constant 0 : i32
    %c0_i32_0 = arith.constant 0 : i32
    %c0_i32_1 = arith.constant 0 : i32
    return %c0_i32, %c0_i32_0 : i32, i32
  }
  func.func @transform_3(%arg0: i32) -> (i32, i32) {
    %c0_i32 = arith.constant 0 : i32
    %c0_i32_0 = arith.constant 0 : i32
    %c0_i32_1 = arith.constant 0 : i32
    return %c0_i32, %c0_i32_0 : i32, i32
  }
}

module attributes {stable_mosaic.version = 11 : i64} {
  func.func @_lerp4_kernel(%arg0: i32, %arg1: memref<32x128xf32, #tpu.memory_space<vmem>>, %arg2: memref<32x128xf32, #tpu.memory_space<vmem>>, %arg3: memref<32x128xf32, #tpu.memory_space<vmem>>, %arg4: memref<32x128xf32, #tpu.memory_space<vmem>>, %arg5: memref<1x128xf32, #tpu.memory_space<vmem>>, %arg6: memref<1x128xf32, #tpu.memory_space<vmem>>, %arg7: memref<1x128xf32, #tpu.memory_space<vmem>>, %arg8: memref<1x128xf32, #tpu.memory_space<vmem>>, %arg9: memref<32x128xf32, #tpu.memory_space<vmem>>) attributes {dimension_semantics = [#tpu.dimension_semantics<arbitrary>], iteration_bounds = array<i64: 1>, scalar_prefetch = 0 : i64, scratch_operands = 0 : i64, tpu.core_type = #tpu.core_type<tc>, window_params = [{pipeline_mode = #tpu.pipeline_mode<synchronous>, transform_indices = @transform_0, window_bounds = array<i64: 32, 128>}, {pipeline_mode = #tpu.pipeline_mode<synchronous>, transform_indices = @transform_1, window_bounds = array<i64: 32, 128>}, {pipeline_mode = #tpu.pipeline_mode<synchronous>, transform_indices = @transform_2, window_bounds = array<i64: 32, 128>}, {pipeline_mode = #tpu.pipeline_mode<synchronous>, transform_indices = @transform_3, window_bounds = array<i64: 32, 128>}, {pipeline_mode = #tpu.pipeline_mode<synchronous>, transform_indices = @transform_4, window_bounds = array<i64: 1, 128>}, {pipeline_mode = #tpu.pipeline_mode<synchronous>, transform_indices = @transform_5, window_bounds = array<i64: 1, 128>}, {pipeline_mode = #tpu.pipeline_mode<synchronous>, transform_indices = @transform_6, window_bounds = array<i64: 1, 128>}, {pipeline_mode = #tpu.pipeline_mode<synchronous>, transform_indices = @transform_7, window_bounds = array<i64: 1, 128>}, {pipeline_mode = #tpu.pipeline_mode<synchronous>, transform_indices = @transform_8, window_bounds = array<i64: 32, 128>}]} {
    %c0 = arith.constant 0 : index
    %c0_0 = arith.constant 0 : index
    %0 = vector.load %arg1[%c0, %c0_0] : memref<32x128xf32, #tpu.memory_space<vmem>>, vector<32x128xf32>
    %c0_1 = arith.constant 0 : index
    %c0_2 = arith.constant 0 : index
    %1 = vector.load %arg5[%c0_1, %c0_2] : memref<1x128xf32, #tpu.memory_space<vmem>>, vector<1x128xf32>
    %2 = vector.broadcast %1 : vector<1x128xf32> to vector<32x128xf32>
    %3 = arith.mulf %0, %2 : vector<32x128xf32>
    %c0_3 = arith.constant 0 : index
    %c0_4 = arith.constant 0 : index
    %4 = vector.load %arg2[%c0_3, %c0_4] : memref<32x128xf32, #tpu.memory_space<vmem>>, vector<32x128xf32>
    %c0_5 = arith.constant 0 : index
    %c0_6 = arith.constant 0 : index
    %5 = vector.load %arg6[%c0_5, %c0_6] : memref<1x128xf32, #tpu.memory_space<vmem>>, vector<1x128xf32>
    %6 = vector.broadcast %5 : vector<1x128xf32> to vector<32x128xf32>
    %7 = arith.mulf %4, %6 : vector<32x128xf32>
    %8 = arith.addf %3, %7 : vector<32x128xf32>
    %c0_7 = arith.constant 0 : index
    %c0_8 = arith.constant 0 : index
    %9 = vector.load %arg3[%c0_7, %c0_8] : memref<32x128xf32, #tpu.memory_space<vmem>>, vector<32x128xf32>
    %c0_9 = arith.constant 0 : index
    %c0_10 = arith.constant 0 : index
    %10 = vector.load %arg7[%c0_9, %c0_10] : memref<1x128xf32, #tpu.memory_space<vmem>>, vector<1x128xf32>
    %11 = vector.broadcast %10 : vector<1x128xf32> to vector<32x128xf32>
    %12 = arith.mulf %9, %11 : vector<32x128xf32>
    %13 = arith.addf %8, %12 : vector<32x128xf32>
    %c0_11 = arith.constant 0 : index
    %c0_12 = arith.constant 0 : index
    %14 = vector.load %arg4[%c0_11, %c0_12] : memref<32x128xf32, #tpu.memory_space<vmem>>, vector<32x128xf32>
    %c0_13 = arith.constant 0 : index
    %c0_14 = arith.constant 0 : index
    %15 = vector.load %arg8[%c0_13, %c0_14] : memref<1x128xf32, #tpu.memory_space<vmem>>, vector<1x128xf32>
    %16 = vector.broadcast %15 : vector<1x128xf32> to vector<32x128xf32>
    %17 = arith.mulf %14, %16 : vector<32x128xf32>
    %18 = arith.addf %13, %17 : vector<32x128xf32>
    %c0_15 = arith.constant 0 : index
    %c0_16 = arith.constant 0 : index
    %19 = vector.load %arg9[%c0_15, %c0_16] : memref<32x128xf32, #tpu.memory_space<vmem>>, vector<32x128xf32>
    tpu.vector_store %arg9[%c0_15, %c0_16], %18 {strides = array<i32>} : memref<32x128xf32, #tpu.memory_space<vmem>>, vector<32x128xf32>,
    return
  }
  func.func @transform_0(%arg0: i32) -> (i32, i32) {
    %c0_i32 = arith.constant 0 : i32
    %c0_i32_0 = arith.constant 0 : i32
    %c0_i32_1 = arith.constant 0 : i32
    return %c0_i32, %c0_i32_0 : i32, i32
  }
  func.func @transform_1(%arg0: i32) -> (i32, i32) {
    %c0_i32 = arith.constant 0 : i32
    %c0_i32_0 = arith.constant 0 : i32
    %c0_i32_1 = arith.constant 0 : i32
    return %c0_i32, %c0_i32_0 : i32, i32
  }
  func.func @transform_2(%arg0: i32) -> (i32, i32) {
    %c0_i32 = arith.constant 0 : i32
    %c0_i32_0 = arith.constant 0 : i32
    %c0_i32_1 = arith.constant 0 : i32
    return %c0_i32, %c0_i32_0 : i32, i32
  }
  func.func @transform_3(%arg0: i32) -> (i32, i32) {
    %c0_i32 = arith.constant 0 : i32
    %c0_i32_0 = arith.constant 0 : i32
    %c0_i32_1 = arith.constant 0 : i32
    return %c0_i32, %c0_i32_0 : i32, i32
  }
  func.func @transform_4(%arg0: i32) -> (i32, i32) {
    %c0_i32 = arith.constant 0 : i32
    %c0_i32_0 = arith.constant 0 : i32
    %c0_i32_1 = arith.constant 0 : i32
    return %c0_i32, %c0_i32_0 : i32, i32
  }
  func.func @transform_5(%arg0: i32) -> (i32, i32) {
    %c0_i32 = arith.constant 0 : i32
    %c0_i32_0 = arith.constant 0 : i32
    %c0_i32_1 = arith.constant 0 : i32
    return %c0_i32, %c0_i32_0 : i32, i32
  }
  func.func @transform_6(%arg0: i32) -> (i32, i32) {
    %c0_i32 = arith.constant 0 : i32
    %c0_i32_0 = arith.constant 0 : i32
    %c0_i32_1 = arith.constant 0 : i32
    return %c0_i32, %c0_i32_0 : i32, i32
  }
  func.func @transform_7(%arg0: i32) -> (i32, i32) {
    %c0_i32 = arith.constant 0 : i32
    %c0_i32_0 = arith.constant 0 : i32
    %c0_i32_1 = arith.constant 0 : i32
    return %c0_i32, %c0_i32_0 : i32, i32
  }
  func.func @transform_8(%arg0: i32) -> (i32, i32) {
    %c0_i32 = arith.constant 0 : i32
    %c0_i32_0 = arith.constant 0 : i32
    %c0_i32_1 = arith.constant 0 : i32
    return %c0_i32, %c0_i32_0 : i32, i32
  }
}

module attributes {stable_mosaic.version = 11 : i64} {
  func.func @_conv_bn_wibrelu_kernel(%arg0: i32, %arg1: memref<16x288xbf16, #tpu.memory_space<vmem>>, %arg2: memref<288x128xbf16, #tpu.memory_space<vmem>>, %arg3: memref<16x128xf32, #tpu.memory_space<vmem>>) attributes {dimension_semantics = [#tpu.dimension_semantics<arbitrary>], iteration_bounds = array<i64: 1>, scalar_prefetch = 0 : i64, scratch_operands = 0 : i64, tpu.core_type = #tpu.core_type<tc>, window_params = [{pipeline_mode = #tpu.pipeline_mode<synchronous>, transform_indices = @transform_0, window_bounds = array<i64: 16, 288>}, {pipeline_mode = #tpu.pipeline_mode<synchronous>, transform_indices = @transform_1, window_bounds = array<i64: 288, 128>}, {pipeline_mode = #tpu.pipeline_mode<synchronous>, transform_indices = @transform_2, window_bounds = array<i64: 16, 128>}]} {
    %c0 = arith.constant 0 : index
    %c0_0 = arith.constant 0 : index
    %0 = vector.load %arg1[%c0, %c0_0] : memref<16x288xbf16, #tpu.memory_space<vmem>>, vector<16x288xbf16>
    %c0_1 = arith.constant 0 : index
    %c0_2 = arith.constant 0 : index
    %1 = vector.load %arg2[%c0_1, %c0_2] : memref<288x128xbf16, #tpu.memory_space<vmem>>, vector<288x128xbf16>
    %cst = arith.constant dense<0.000000e+00> : vector<16x128xf32>
    %2 = tpu.matmul %0, %1, %cst {dimension_numbers = #tpu.dot_dimension_numbers<[1], [0], [0], [1], [0, 0, 1, 1], [], []>} : vector<16x288xbf16>, vector<288x128xbf16>, vector<16x128xf32> -> vector<16x128xf32>
    %cst_3 = arith.constant dense<0.000000e+00> : vector<16xf32>
    %3 = vector.multi_reduction <add>, %2, %cst_3 [1] : vector<16x128xf32> to vector<16xf32>
    %4 = vector.shape_cast %3 : vector<16xf32> to vector<16x1xf32>
    %cst_4 = arith.constant 1.280000e+02 : f32
    %5 = vector.broadcast %cst_4 : f32 to vector<16x1xf32>
    %6 = arith.divf %4, %5 : vector<16x1xf32>
    %7 = vector.broadcast %6 : vector<16x1xf32> to vector<16x128xf32>
    %8 = arith.subf %2, %7 : vector<16x128xf32>
    %9 = arith.mulf %8, %8 : vector<16x128xf32>
    %cst_5 = arith.constant dense<0.000000e+00> : vector<16xf32>
    %10 = vector.multi_reduction <add>, %9, %cst_5 [1] : vector<16x128xf32> to vector<16xf32>
    %11 = vector.shape_cast %10 : vector<16xf32> to vector<16x1xf32>
    %cst_6 = arith.constant 1.280000e+02 : f32
    %12 = vector.broadcast %cst_6 : f32 to vector<16x1xf32>
    %13 = arith.divf %11, %12 : vector<16x1xf32>
    %14 = vector.broadcast %6 : vector<16x1xf32> to vector<16x128xf32>
    %15 = arith.subf %2, %14 : vector<16x128xf32>
    %cst_7 = arith.constant 9.99999974E-6 : f32
    %16 = vector.broadcast %cst_7 : f32 to vector<16x1xf32>
    %17 = arith.addf %13, %16 : vector<16x1xf32>
    %18 = math.rsqrt %17 : vector<16x1xf32>
    %19 = vector.broadcast %18 : vector<16x1xf32> to vector<16x128xf32>
    %20 = arith.mulf %15, %19 : vector<16x128xf32>
    %cst_8 = arith.constant 0.000000e+00 : f32
    %21 = vector.broadcast %cst_8 : f32 to vector<16x128xf32>
    %22 = arith.maximumf %20, %21 : vector<16x128xf32>
    %23 = vector.shape_cast %20 : vector<16x128xf32> to vector<1x16x128xf32>
    %cst_9 = arith.constant dense<0.000000e+00> : vector<1xf32>
    %24 = vector.multi_reduction <add>, %23, %cst_9 [1, 2] : vector<1x16x128xf32> to vector<1xf32>
    %25 = vector.shape_cast %24 : vector<1xf32> to vector<1x1x1xf32>
    %26 = vector.extract %25[0, 0, 0] : f32 from vector<1x1x1xf32>
    %cst_10 = arith.constant 2.048000e+03 : f32
    %27 = arith.divf %26, %cst_10 : f32
    %28 = vector.broadcast %27 : f32 to vector<16x128xf32>
    %29 = arith.subf %22, %28 : vector<16x128xf32>
    %c0_11 = arith.constant 0 : index
    %c0_12 = arith.constant 0 : index
    %30 = vector.load %arg3[%c0_11, %c0_12] : memref<16x128xf32, #tpu.memory_space<vmem>>, vector<16x128xf32>
    tpu.vector_store %arg3[%c0_11, %c0_12], %29 {strides = array<i32>} : memref<16x128xf32, #tpu.memory_space<vmem>>, vector<16x128xf32>,
    return
  }
  func.func @transform_0(%arg0: i32) -> (i32, i32) {
    %c0_i32 = arith.constant 0 : i32
    %c0_i32_0 = arith.constant 0 : i32
    %c0_i32_1 = arith.constant 0 : i32
    return %c0_i32, %c0_i32_0 : i32, i32
  }
  func.func @transform_1(%arg0: i32) -> (i32, i32) {
    %c0_i32 = arith.constant 0 : i32
    %c0_i32_0 = arith.constant 0 : i32
    %c0_i32_1 = arith.constant 0 : i32
    return %c0_i32, %c0_i32_0 : i32, i32
  }
  func.func @transform_2(%arg0: i32) -> (i32, i32) {
    %c0_i32 = arith.constant 0 : i32
    %c0_i32_0 = arith.constant 0 : i32
    %c0_i32_1 = arith.constant 0 : i32
    return %c0_i32, %c0_i32_0 : i32, i32
  }
}

module attributes {stable_mosaic.version = 11 : i64} {
  func.func @_lerp4_kernel(%arg0: i32, %arg1: memref<16x512xf32, #tpu.memory_space<vmem>>, %arg2: memref<16x512xf32, #tpu.memory_space<vmem>>, %arg3: memref<16x512xf32, #tpu.memory_space<vmem>>, %arg4: memref<16x512xf32, #tpu.memory_space<vmem>>, %arg5: memref<1x512xf32, #tpu.memory_space<vmem>>, %arg6: memref<1x512xf32, #tpu.memory_space<vmem>>, %arg7: memref<1x512xf32, #tpu.memory_space<vmem>>, %arg8: memref<1x512xf32, #tpu.memory_space<vmem>>, %arg9: memref<16x512xf32, #tpu.memory_space<vmem>>) attributes {dimension_semantics = [#tpu.dimension_semantics<arbitrary>], iteration_bounds = array<i64: 1>, scalar_prefetch = 0 : i64, scratch_operands = 0 : i64, tpu.core_type = #tpu.core_type<tc>, window_params = [{pipeline_mode = #tpu.pipeline_mode<synchronous>, transform_indices = @transform_0, window_bounds = array<i64: 16, 512>}, {pipeline_mode = #tpu.pipeline_mode<synchronous>, transform_indices = @transform_1, window_bounds = array<i64: 16, 512>}, {pipeline_mode = #tpu.pipeline_mode<synchronous>, transform_indices = @transform_2, window_bounds = array<i64: 16, 512>}, {pipeline_mode = #tpu.pipeline_mode<synchronous>, transform_indices = @transform_3, window_bounds = array<i64: 16, 512>}, {pipeline_mode = #tpu.pipeline_mode<synchronous>, transform_indices = @transform_4, window_bounds = array<i64: 1, 512>}, {pipeline_mode = #tpu.pipeline_mode<synchronous>, transform_indices = @transform_5, window_bounds = array<i64: 1, 512>}, {pipeline_mode = #tpu.pipeline_mode<synchronous>, transform_indices = @transform_6, window_bounds = array<i64: 1, 512>}, {pipeline_mode = #tpu.pipeline_mode<synchronous>, transform_indices = @transform_7, window_bounds = array<i64: 1, 512>}, {pipeline_mode = #tpu.pipeline_mode<synchronous>, transform_indices = @transform_8, window_bounds = array<i64: 16, 512>}]} {
    %c0 = arith.constant 0 : index
    %c0_0 = arith.constant 0 : index
    %0 = vector.load %arg1[%c0, %c0_0] : memref<16x512xf32, #tpu.memory_space<vmem>>, vector<16x512xf32>
    %c0_1 = arith.constant 0 : index
    %c0_2 = arith.constant 0 : index
    %1 = vector.load %arg5[%c0_1, %c0_2] : memref<1x512xf32, #tpu.memory_space<vmem>>, vector<1x512xf32>
    %2 = vector.broadcast %1 : vector<1x512xf32> to vector<16x512xf32>
    %3 = arith.mulf %0, %2 : vector<16x512xf32>
    %c0_3 = arith.constant 0 : index
    %c0_4 = arith.constant 0 : index
    %4 = vector.load %arg2[%c0_3, %c0_4] : memref<16x512xf32, #tpu.memory_space<vmem>>, vector<16x512xf32>
    %c0_5 = arith.constant 0 : index
    %c0_6 = arith.constant 0 : index
    %5 = vector.load %arg6[%c0_5, %c0_6] : memref<1x512xf32, #tpu.memory_space<vmem>>, vector<1x512xf32>
    %6 = vector.broadcast %5 : vector<1x512xf32> to vector<16x512xf32>
    %7 = arith.mulf %4, %6 : vector<16x512xf32>
    %8 = arith.addf %3, %7 : vector<16x512xf32>
    %c0_7 = arith.constant 0 : index
    %c0_8 = arith.constant 0 : index
    %9 = vector.load %arg3[%c0_7, %c0_8] : memref<16x512xf32, #tpu.memory_space<vmem>>, vector<16x512xf32>
    %c0_9 = arith.constant 0 : index
    %c0_10 = arith.constant 0 : index
    %10 = vector.load %arg7[%c0_9, %c0_10] : memref<1x512xf32, #tpu.memory_space<vmem>>, vector<1x512xf32>
    %11 = vector.broadcast %10 : vector<1x512xf32> to vector<16x512xf32>
    %12 = arith.mulf %9, %11 : vector<16x512xf32>
    %13 = arith.addf %8, %12 : vector<16x512xf32>
    %c0_11 = arith.constant 0 : index
    %c0_12 = arith.constant 0 : index
    %14 = vector.load %arg4[%c0_11, %c0_12] : memref<16x512xf32, #tpu.memory_space<vmem>>, vector<16x512xf32>
    %c0_13 = arith.constant 0 : index
    %c0_14 = arith.constant 0 : index
    %15 = vector.load %arg8[%c0_13, %c0_14] : memref<1x512xf32, #tpu.memory_space<vmem>>, vector<1x512xf32>
    %16 = vector.broadcast %15 : vector<1x512xf32> to vector<16x512xf32>
    %17 = arith.mulf %14, %16 : vector<16x512xf32>
    %18 = arith.addf %13, %17 : vector<16x512xf32>
    %c0_15 = arith.constant 0 : index
    %c0_16 = arith.constant 0 : index
    %19 = vector.load %arg9[%c0_15, %c0_16] : memref<16x512xf32, #tpu.memory_space<vmem>>, vector<16x512xf32>
    tpu.vector_store %arg9[%c0_15, %c0_16], %18 {strides = array<i32>} : memref<16x512xf32, #tpu.memory_space<vmem>>, vector<16x512xf32>,
    return
  }
  func.func @transform_0(%arg0: i32) -> (i32, i32) {
    %c0_i32 = arith.constant 0 : i32
    %c0_i32_0 = arith.constant 0 : i32
    %c0_i32_1 = arith.constant 0 : i32
    return %c0_i32, %c0_i32_0 : i32, i32
  }
  func.func @transform_1(%arg0: i32) -> (i32, i32) {
    %c0_i32 = arith.constant 0 : i32
    %c0_i32_0 = arith.constant 0 : i32
    %c0_i32_1 = arith.constant 0 : i32
    return %c0_i32, %c0_i32_0 : i32, i32
  }
  func.func @transform_2(%arg0: i32) -> (i32, i32) {
    %c0_i32 = arith.constant 0 : i32
    %c0_i32_0 = arith.constant 0 : i32
    %c0_i32_1 = arith.constant 0 : i32
    return %c0_i32, %c0_i32_0 : i32, i32
  }
  func.func @transform_3(%arg0: i32) -> (i32, i32) {
    %c0_i32 = arith.constant 0 : i32
    %c0_i32_0 = arith.constant 0 : i32
    %c0_i32_1 = arith.constant 0 : i32
    return %c0_i32, %c0_i32_0 : i32, i32
  }
  func.func @transform_4(%arg0: i32) -> (i32, i32) {
    %c0_i32 = arith.constant 0 : i32
    %c0_i32_0 = arith.constant 0 : i32
    %c0_i32_1 = arith.constant 0 : i32
    return %c0_i32, %c0_i32_0 : i32, i32
  }
  func.func @transform_5(%arg0: i32) -> (i32, i32) {
    %c0_i32 = arith.constant 0 : i32
    %c0_i32_0 = arith.constant 0 : i32
    %c0_i32_1 = arith.constant 0 : i32
    return %c0_i32, %c0_i32_0 : i32, i32
  }
  func.func @transform_6(%arg0: i32) -> (i32, i32) {
    %c0_i32 = arith.constant 0 : i32
    %c0_i32_0 = arith.constant 0 : i32
    %c0_i32_1 = arith.constant 0 : i32
    return %c0_i32, %c0_i32_0 : i32, i32
  }
  func.func @transform_7(%arg0: i32) -> (i32, i32) {
    %c0_i32 = arith.constant 0 : i32
    %c0_i32_0 = arith.constant 0 : i32
    %c0_i32_1 = arith.constant 0 : i32
    return %c0_i32, %c0_i32_0 : i32, i32
  }
  func.func @transform_8(%arg0: i32) -> (i32, i32) {
    %c0_i32 = arith.constant 0 : i32
    %c0_i32_0 = arith.constant 0 : i32
    %c0_i32_1 = arith.constant 0 : i32
    return %c0_i32, %c0_i32_0 : i32, i32
  }
}

module attributes {stable_mosaic.version = 11 : i64} {
  func.func @_conv_bn_wibrelu_kernel(%arg0: i32, %arg1: memref<8x144xbf16, #tpu.memory_space<vmem>>, %arg2: memref<144x512xbf16, #tpu.memory_space<vmem>>, %arg3: memref<8x512xf32, #tpu.memory_space<vmem>>) attributes {dimension_semantics = [#tpu.dimension_semantics<arbitrary>], iteration_bounds = array<i64: 1>, scalar_prefetch = 0 : i64, scratch_operands = 0 : i64, tpu.core_type = #tpu.core_type<tc>, window_params = [{pipeline_mode = #tpu.pipeline_mode<synchronous>, transform_indices = @transform_0, window_bounds = array<i64: 8, 144>}, {pipeline_mode = #tpu.pipeline_mode<synchronous>, transform_indices = @transform_1, window_bounds = array<i64: 144, 512>}, {pipeline_mode = #tpu.pipeline_mode<synchronous>, transform_indices = @transform_2, window_bounds = array<i64: 8, 512>}]} {
    %c0 = arith.constant 0 : index
    %c0_0 = arith.constant 0 : index
    %0 = vector.load %arg1[%c0, %c0_0] : memref<8x144xbf16, #tpu.memory_space<vmem>>, vector<8x144xbf16>
    %c0_1 = arith.constant 0 : index
    %c0_2 = arith.constant 0 : index
    %1 = vector.load %arg2[%c0_1, %c0_2] : memref<144x512xbf16, #tpu.memory_space<vmem>>, vector<144x512xbf16>
    %cst = arith.constant dense<0.000000e+00> : vector<8x512xf32>
    %2 = tpu.matmul %0, %1, %cst {dimension_numbers = #tpu.dot_dimension_numbers<[1], [0], [0], [1], [0, 0, 1, 1], [], []>} : vector<8x144xbf16>, vector<144x512xbf16>, vector<8x512xf32> -> vector<8x512xf32>
    %cst_3 = arith.constant dense<0.000000e+00> : vector<8xf32>
    %3 = vector.multi_reduction <add>, %2, %cst_3 [1] : vector<8x512xf32> to vector<8xf32>
    %4 = vector.shape_cast %3 : vector<8xf32> to vector<8x1xf32>
    %cst_4 = arith.constant 5.120000e+02 : f32
    %5 = vector.broadcast %cst_4 : f32 to vector<8x1xf32>
    %6 = arith.divf %4, %5 : vector<8x1xf32>
    %7 = vector.broadcast %6 : vector<8x1xf32> to vector<8x512xf32>
    %8 = arith.subf %2, %7 : vector<8x512xf32>
    %9 = arith.mulf %8, %8 : vector<8x512xf32>
    %cst_5 = arith.constant dense<0.000000e+00> : vector<8xf32>
    %10 = vector.multi_reduction <add>, %9, %cst_5 [1] : vector<8x512xf32> to vector<8xf32>
    %11 = vector.shape_cast %10 : vector<8xf32> to vector<8x1xf32>
    %cst_6 = arith.constant 5.120000e+02 : f32
    %12 = vector.broadcast %cst_6 : f32 to vector<8x1xf32>
    %13 = arith.divf %11, %12 : vector<8x1xf32>
    %14 = vector.broadcast %6 : vector<8x1xf32> to vector<8x512xf32>
    %15 = arith.subf %2, %14 : vector<8x512xf32>
    %cst_7 = arith.constant 9.99999974E-6 : f32
    %16 = vector.broadcast %cst_7 : f32 to vector<8x1xf32>
    %17 = arith.addf %13, %16 : vector<8x1xf32>
    %18 = math.rsqrt %17 : vector<8x1xf32>
    %19 = vector.broadcast %18 : vector<8x1xf32> to vector<8x512xf32>
    %20 = arith.mulf %15, %19 : vector<8x512xf32>
    %cst_8 = arith.constant 0.000000e+00 : f32
    %21 = vector.broadcast %cst_8 : f32 to vector<8x512xf32>
    %22 = arith.maximumf %20, %21 : vector<8x512xf32>
    %23 = vector.shape_cast %20 : vector<8x512xf32> to vector<1x8x512xf32>
    %cst_9 = arith.constant dense<0.000000e+00> : vector<1xf32>
    %24 = vector.multi_reduction <add>, %23, %cst_9 [1, 2] : vector<1x8x512xf32> to vector<1xf32>
    %25 = vector.shape_cast %24 : vector<1xf32> to vector<1x1x1xf32>
    %26 = vector.extract %25[0, 0, 0] : f32 from vector<1x1x1xf32>
    %cst_10 = arith.constant 4.096000e+03 : f32
    %27 = arith.divf %26, %cst_10 : f32
    %28 = vector.broadcast %27 : f32 to vector<8x512xf32>
    %29 = arith.subf %22, %28 : vector<8x512xf32>
    %c0_11 = arith.constant 0 : index
    %c0_12 = arith.constant 0 : index
    %30 = vector.load %arg3[%c0_11, %c0_12] : memref<8x512xf32, #tpu.memory_space<vmem>>, vector<8x512xf32>
    tpu.vector_store %arg3[%c0_11, %c0_12], %29 {strides = array<i32>} : memref<8x512xf32, #tpu.memory_space<vmem>>, vector<8x512xf32>,
    return
  }
  func.func @transform_0(%arg0: i32) -> (i32, i32) {
    %c0_i32 = arith.constant 0 : i32
    %c0_i32_0 = arith.constant 0 : i32
    %c0_i32_1 = arith.constant 0 : i32
    return %c0_i32, %c0_i32_0 : i32, i32
  }
  func.func @transform_1(%arg0: i32) -> (i32, i32) {
    %c0_i32 = arith.constant 0 : i32
    %c0_i32_0 = arith.constant 0 : i32
    %c0_i32_1 = arith.constant 0 : i32
    return %c0_i32, %c0_i32_0 : i32, i32
  }
  func.func @transform_2(%arg0: i32) -> (i32, i32) {
    %c0_i32 = arith.constant 0 : i32
    %c0_i32_0 = arith.constant 0 : i32
    %c0_i32_1 = arith.constant 0 : i32
    return %c0_i32, %c0_i32_0 : i32, i32
  }
}

module attributes {stable_mosaic.version = 11 : i64} {
  func.func @_conv_wibrelu_kernel(%arg0: i32, %arg1: memref<4x200xbf16, #tpu.memory_space<vmem>>, %arg2: memref<200x648xbf16, #tpu.memory_space<vmem>>, %arg3: memref<4x648xf32, #tpu.memory_space<vmem>>) attributes {dimension_semantics = [#tpu.dimension_semantics<arbitrary>], iteration_bounds = array<i64: 1>, scalar_prefetch = 0 : i64, scratch_operands = 0 : i64, tpu.core_type = #tpu.core_type<tc>, window_params = [{pipeline_mode = #tpu.pipeline_mode<synchronous>, transform_indices = @transform_0, window_bounds = array<i64: 4, 200>}, {pipeline_mode = #tpu.pipeline_mode<synchronous>, transform_indices = @transform_1, window_bounds = array<i64: 200, 648>}, {pipeline_mode = #tpu.pipeline_mode<synchronous>, transform_indices = @transform_2, window_bounds = array<i64: 4, 648>}]} {
    %c0 = arith.constant 0 : index
    %c0_0 = arith.constant 0 : index
    %0 = vector.load %arg1[%c0, %c0_0] : memref<4x200xbf16, #tpu.memory_space<vmem>>, vector<4x200xbf16>
    %c0_1 = arith.constant 0 : index
    %c0_2 = arith.constant 0 : index
    %1 = vector.load %arg2[%c0_1, %c0_2] : memref<200x648xbf16, #tpu.memory_space<vmem>>, vector<200x648xbf16>
    %cst = arith.constant dense<0.000000e+00> : vector<4x648xf32>
    %2 = tpu.matmul %0, %1, %cst {dimension_numbers = #tpu.dot_dimension_numbers<[1], [0], [0], [1], [0, 0, 1, 1], [], []>} : vector<4x200xbf16>, vector<200x648xbf16>, vector<4x648xf32> -> vector<4x648xf32>
    %cst_3 = arith.constant 0.000000e+00 : f32
    %3 = vector.broadcast %cst_3 : f32 to vector<4x648xf32>
    %4 = arith.maximumf %2, %3 : vector<4x648xf32>
    %5 = vector.shape_cast %2 : vector<4x648xf32> to vector<1x4x648xf32>
    %cst_4 = arith.constant dense<0.000000e+00> : vector<1xf32>
    %6 = vector.multi_reduction <add>, %5, %cst_4 [1, 2] : vector<1x4x648xf32> to vector<1xf32>
    %7 = vector.shape_cast %6 : vector<1xf32> to vector<1x1x1xf32>
    %8 = vector.extract %7[0, 0, 0] : f32 from vector<1x1x1xf32>
    %cst_5 = arith.constant 2.592000e+03 : f32
    %9 = arith.divf %8, %cst_5 : f32
    %10 = vector.broadcast %9 : f32 to vector<4x648xf32>
    %11 = arith.subf %4, %10 : vector<4x648xf32>
    %c0_6 = arith.constant 0 : index
    %c0_7 = arith.constant 0 : index
    %12 = vector.load %arg3[%c0_6, %c0_7] : memref<4x648xf32, #tpu.memory_space<vmem>>, vector<4x648xf32>
    tpu.vector_store %arg3[%c0_6, %c0_7], %11 {strides = array<i32>} : memref<4x648xf32, #tpu.memory_space<vmem>>, vector<4x648xf32>,
    return
  }
  func.func @transform_0(%arg0: i32) -> (i32, i32) {
    %c0_i32 = arith.constant 0 : i32
    %c0_i32_0 = arith.constant 0 : i32
    %c0_i32_1 = arith.constant 0 : i32
    return %c0_i32, %c0_i32_0 : i32, i32
  }
  func.func @transform_1(%arg0: i32) -> (i32, i32) {
    %c0_i32 = arith.constant 0 : i32
    %c0_i32_0 = arith.constant 0 : i32
    %c0_i32_1 = arith.constant 0 : i32
    return %c0_i32, %c0_i32_0 : i32, i32
  }
  func.func @transform_2(%arg0: i32) -> (i32, i32) {
    %c0_i32 = arith.constant 0 : i32
    %c0_i32_0 = arith.constant 0 : i32
    %c0_i32_1 = arith.constant 0 : i32
    return %c0_i32, %c0_i32_0 : i32, i32
  }
}

module attributes {stable_mosaic.version = 11 : i64} {
  func.func @_conv_tanh_kernel(%arg0: i32, %arg1: memref<3x36xbf16, #tpu.memory_space<vmem>>, %arg2: memref<36x512xbf16, #tpu.memory_space<vmem>>, %arg3: memref<3x512xf32, #tpu.memory_space<vmem>>) attributes {dimension_semantics = [#tpu.dimension_semantics<arbitrary>], iteration_bounds = array<i64: 1>, scalar_prefetch = 0 : i64, scratch_operands = 0 : i64, tpu.core_type = #tpu.core_type<tc>, window_params = [{pipeline_mode = #tpu.pipeline_mode<synchronous>, transform_indices = @transform_0, window_bounds = array<i64: 3, 36>}, {pipeline_mode = #tpu.pipeline_mode<synchronous>, transform_indices = @transform_1, window_bounds = array<i64: 36, 512>}, {pipeline_mode = #tpu.pipeline_mode<synchronous>, transform_indices = @transform_2, window_bounds = array<i64: 3, 512>}]} {
    %c0 = arith.constant 0 : index
    %c0_0 = arith.constant 0 : index
    %0 = vector.load %arg1[%c0, %c0_0] : memref<3x36xbf16, #tpu.memory_space<vmem>>, vector<3x36xbf16>
    %c0_1 = arith.constant 0 : index
    %c0_2 = arith.constant 0 : index
    %1 = vector.load %arg2[%c0_1, %c0_2] : memref<36x512xbf16, #tpu.memory_space<vmem>>, vector<36x512xbf16>
    %cst = arith.constant dense<0.000000e+00> : vector<3x512xf32>
    %2 = tpu.matmul %0, %1, %cst {dimension_numbers = #tpu.dot_dimension_numbers<[1], [0], [0], [1], [0, 0, 1, 1], [], []>} : vector<3x36xbf16>, vector<36x512xbf16>, vector<3x512xf32> -> vector<3x512xf32>
    %3 = math.tanh %2 : vector<3x512xf32>
    %c0_3 = arith.constant 0 : index
    %c0_4 = arith.constant 0 : index
    %4 = vector.load %arg3[%c0_3, %c0_4] : memref<3x512xf32, #tpu.memory_space<vmem>>, vector<3x512xf32>
    tpu.vector_store %arg3[%c0_3, %c0_4], %3 {strides = array<i32>} : memref<3x512xf32, #tpu.memory_space<vmem>>, vector<3x512xf32>,
    return
  }
  func.func @transform_0(%arg0: i32) -> (i32, i32) {
    %c0_i32 = arith.constant 0 : i32
    %c0_i32_0 = arith.constant 0 : i32
    %c0_i32_1 = arith.constant 0 : i32
    return %c0_i32, %c0_i32_0 : i32, i32
  }
  func.func @transform_1(%arg0: i32) -> (i32, i32) {
    %c0_i32 = arith.constant 0 : i32
    %c0_i32_0 = arith.constant 0 : i32
    %c0_i32_1 = arith.constant 0 : i32
    return %c0_i32, %c0_i32_0 : i32, i32
  }
  func.func @transform_2(%arg0: i32) -> (i32, i32) {
    %c0_i32 = arith.constant 0 : i32
    %c0_i32_0 = arith.constant 0 : i32
    %c0_i32_1 = arith.constant 0 : i32
    return %c0_i32, %c0_i32_0 : i32, i32
  }
}

</mosaic_0001>

<llo_original>
// kernel: resnet_generator_forward.14
$region0: #{resnet_generator_forward.14}
  #allocation0 [shape = 'u32[]', space=smem, size = 0x4, offset = 0x4, fixed_abs, tag = 'smem constant byte address 0x4 - core index']
  #allocation1 [shape = 'u32[144,128]{1,0:T(1,128)}', space=vmem, size = 0x12000, scoped, tag = 'internal scratch']
  %s0 = inlined_call_operand.vmem [shape: bf16[4,75], index: 0, kind: input, shape index: {}]
  %s1 = inlined_call_operand.vmem [shape: bf16[75,648], index: 1, kind: input, shape index: {}]
  %s2 = inlined_call_operand.vmem [shape: f32[4,648], index: 2, kind: output, shape index: {}]
  %s3 = sld [smem:[#allocation0]]
  $region18: #{resnet_generator_forward.14} parent=0
    _
  %s5 = ssub.s32 1, %s3
  %s6 = scalar_select 0, %s5, %s3
  // Predicated region
  $region2: #{resnet_generator_forward.14} parent=0 // pred_check
    _
  $region3: #{resnet_generator_forward.14} parent=0 // pred_check_branch
    %8 = sbr.rel (0) target = $region5
  $region4: #{resnet_generator_forward.14} parent=0 // pred_region
    _
  $region5: #{resnet_generator_forward.14} parent=0 // pred_fallthru
    _
  // Predicated region
  $region6: #{resnet_generator_forward.14} parent=0 // pred_check
    _
  $region7: #{resnet_generator_forward.14} parent=0 // pred_check_branch
    %10 = sbr.rel (0) target = $region9
  $region8: #{resnet_generator_forward.14} parent=0 // pred_region
    _
  $region9: #{resnet_generator_forward.14} parent=0 // pred_fallthru
    _
  %v12 = vld [vmem:[%s0] sm:$0x3]
  %v13 = vld [vmem:[%s1] sm:$0xff]
  %v14 = vld [vmem:[%s1 + $0x8] sm:$0xff]
  %v15 = vld [vmem:[%s1 + $0x10] sm:$0xff]
  %v16 = vld [vmem:[%s1 + $0x18] sm:$0xff]
  %v17 = vld [vmem:[%s1 + $0x20] sm:$0xff]
  %v18 = vld [vmem:[%s1 + $0x28] sm:$0xff]
  %v19 = vld [vmem:[%s1 + $0x30] sm:$0xff]
  %v20 = vld [vmem:[%s1 + $0x38] sm:$0xff]
  %v21 = vld [vmem:[%s1 + $0x40] sm:$0xff]
  %v22 = vld [vmem:[%s1 + $0x48] sm:$0xff]
  %v23 = vld [vmem:[%s1 + $0x50] sm:$0xff]
  %v24 = vld [vmem:[%s1 + $0x58] sm:$0xff]
  %v25 = vld [vmem:[%s1 + $0x60] sm:$0xff]
  %v26 = vld [vmem:[%s1 + $0x68] sm:$0xff]
  %v27 = vld [vmem:[%s1 + $0x70] sm:$0xff]
  %v28 = vld [vmem:[%s1 + $0x78] sm:$0xff]
  %v29 = vld [vmem:[%s1 + $0x80] sm:$0xff]
  %v30 = vld [vmem:[%s1 + $0x88] sm:$0xff]
  %v31 = vld [vmem:[%s1 + $0x90] sm:$0xff]
  %v32 = vld [vmem:[%s1 + $0x98] sm:$0xff]
  %v33 = vld [vmem:[%s1 + $0xa0] sm:$0xff]
  %v34 = vld [vmem:[%s1 + $0xa8] sm:$0xff]
  %v35 = vld [vmem:[%s1 + $0xb0] sm:$0xff]
  %v36 = vld [vmem:[%s1 + $0xb8] sm:$0xff]
  %v37 = vld [vmem:[%s1 + $0xc0] sm:$0xff]
  %v38 = vld [vmem:[%s1 + $0xc8] sm:$0xff]
  %v39 = vld [vmem:[%s1 + $0xd0] sm:$0xff]
  %v40 = vld [vmem:[%s1 + $0xd8] sm:$0x33]
  %v41 = vld [vmem:[%s1 + $0xe0] sm:$0x33]
  %v42 = vld [vmem:[%s1 + $0xe8] sm:$0x33]
  %v73 = vunpack.c.l.b16 %v13
  %v74 = vunpack.c.h.b16 %v13
  %v75 = vunpack.c.l.b16 %v14
  %v76 = vunpack.c.h.b16 %v14
  %v77 = vunpack.c.l.b16 %v15
  %v78 = vunpack.c.h.b16 %v15
  %v79 = vunpack.c.l.b16 %v16
  %v80 = vunpack.c.h.b16 %v16
  %v81 = vunpack.c.l.b16 %v17
  %v82 = vunpack.c.h.b16 %v17
  %v83 = vunpack.c.l.b16 %v18
  %v84 = vunpack.c.h.b16 %v18
  %v85 = vunpack.c.l.b16 %v19
  %v86 = vunpack.c.h.b16 %v19
  %v87 = vunpack.c.l.b16 %v20
  %v88 = vunpack.c.h.b16 %v20
  %v89 = vunpack.c.l.b16 %v21
  %v90 = vunpack.c.h.b16 %v21
  %v91 = vunpack.c.l.b16 %v22
  %v92 = vunpack.c.h.b16 %v22
  %v93 = vunpack.c.l.b16 %v23
  %v94 = vunpack.c.h.b16 %v23
  %v95 = vunpack.c.l.b16 %v24
  %v96 = vunpack.c.h.b16 %v24
  %v97 = vunpack.c.l.b16 %v25
  %v98 = vunpack.c.h.b16 %v25
  %v99 = vunpack.c.l.b16 %v26
  %v100 = vunpack.c.h.b16 %v26
  %v101 = vunpack.c.l.b16 %v27
  %v102 = vunpack.c.h.b16 %v27
  %v103 = vunpack.c.l.b16 %v28
  %v104 = vunpack.c.h.b16 %v28
  %v105 = vunpack.c.l.b16 %v29
  %v106 = vunpack.c.h.b16 %v29
  %v107 = vunpack.c.l.b16 %v30
  %v108 = vunpack.c.h.b16 %v30
  %v109 = vunpack.c.l.b16 %v31
  %v110 = vunpack.c.h.b16 %v31
  %v111 = vunpack.c.l.b16 %v32
  %v112 = vunpack.c.h.b16 %v32
  %v113 = vunpack.c.l.b16 %v33
  %v114 = vunpack.c.h.b16 %v33
  %v115 = vunpack.c.l.b16 %v34
  %v116 = vunpack.c.h.b16 %v34
  %v117 = vunpack.c.l.b16 %v35
  %v118 = vunpack.c.h.b16 %v35
  %v119 = vunpack.c.l.b16 %v36
  %v120 = vunpack.c.h.b16 %v36
  %v121 = vunpack.c.l.b16 %v37
  %v122 = vunpack.c.h.b16 %v37
  %v123 = vunpack.c.l.b16 %v38
  %v124 = vunpack.c.h.b16 %v38
  %v125 = vunpack.c.l.b16 %v39
  %v126 = vunpack.c.h.b16 %v39
  %v127 = vunpack.c.l.b16 %v40
  %v128 = vunpack.c.h.b16 %v40
  %v129 = vunpack.c.l.b16 %v41
  %v130 = vunpack.c.h.b16 %v41
  %v131 = vunpack.c.l.b16 %v42
  %v132 = vunpack.c.h.b16 %v42
  %v133 = vpack.c.b16 %v79, %v73
  %v134 = vpack.c.b16 %v80, %v74
  %v135 = vpack.c.b16 %v81, %v75
  %v136 = vpack.c.b16 %v82, %v76
  %v137 = vpack.c.b16 %v83, %v77
  %v138 = vpack.c.b16 %v84, %v78
  %v139 = vpack.c.b16 %v91, %v85
  %v140 = vpack.c.b16 %v92, %v86
  %v141 = vpack.c.b16 %v93, %v87
  %v142 = vpack.c.b16 %v94, %v88
  %v143 = vpack.c.b16 %v95, %v89
  %v144 = vpack.c.b16 %v96, %v90
  %v145 = vpack.c.b16 %v103, %v97
  %v146 = vpack.c.b16 %v104, %v98
  %v147 = vpack.c.b16 %v105, %v99
  %v148 = vpack.c.b16 %v106, %v100
  %v149 = vpack.c.b16 %v107, %v101
  %v150 = vpack.c.b16 %v108, %v102
  %v151 = vpack.c.b16 %v115, %v109
  %v152 = vpack.c.b16 %v116, %v110
  %v153 = vpack.c.b16 %v117, %v111
  %v154 = vpack.c.b16 %v118, %v112
  %v155 = vpack.c.b16 %v119, %v113
  %v156 = vpack.c.b16 %v120, %v114
  %v157 = vpack.c.b16 %v127, %v121
  %v158 = vpack.c.b16 %v128, %v122
  %v159 = vpack.c.b16 %v129, %v123
  %v160 = vpack.c.b16 %v130, %v124
  %v161 = vpack.c.b16 %v131, %v125
  %v162 = vpack.c.b16 %v132, %v126
  %vm187 = vcmask 613376
  %v189 = vsel %vm187, %v12, 0
  %vm191 = vcmask 1044480
  %vm192 = vcmask 1045504
  %v193 = vsel %vm191, 4294967295, 65535
  %v194 = vsel %vm192, %v193, 0
  %v196 = vand.u32 %v157, %v194
  %v199 = vand.u32 %v158, %v194
  %v202 = vand.u32 %v159, %v194
  %v205 = vand.u32 %v160, %v194
  %v208 = vand.u32 %v161, %v194
  %v211 = vand.u32 %v162, %v194
  %213 = vmatprep.subr.bf16.mxu0 %v134
  %214 = vmatpush1.bf16.msra.mxu0 %v133
  %215 = vmatprep.subr.bf16.mxu0 %v140
  %216 = vmatpush1.bf16.msra.mxu0 %v139
  %217 = vmatprep.subr.bf16.mxu0 %v146
  %218 = vmatpush1.bf16.msra.mxu0 %v145
  %219 = vmatprep.subr.bf16.mxu0 %v152
  %220 = vmatpush1.bf16.msra.mxu0 %v151
  %221 = vmatprep.subr.bf16.mxu0 %v199
  %222 = vmatpush1.bf16.msra.mxu0 %v196
  %223 = vmatprep.subr.bf16.mxu0 0
  %224 = vmatpush1.bf16.msra.mxu0 0
  %225 = vmatprep.subr.bf16.mxu0 0
  %226 = vmatpush1.bf16.msra.mxu0 0
  %227 = vmatprep.subr.bf16.mxu0 0
  %228 = vmatpush1.bf16.msra.mxu0 0
  %229 = vmatprep.subr.bf16.mxu0 0
  %230 = vmatpush1.bf16.msra.mxu0 0
  %231 = vmatprep.subr.bf16.mxu0 0
  %232 = vmatpush1.bf16.msra.mxu0 0
  %233 = vmatprep.subr.bf16.mxu0 0
  %234 = vmatpush1.bf16.msra.mxu0 0
  %235 = vmatprep.subr.bf16.mxu0 0
  %236 = vmatpush1.bf16.msra.mxu0 0
  %237 = vmatprep.subr.bf16.mxu0 0
  %238 = vmatpush1.bf16.msra.mxu0 0
  %239 = vmatprep.subr.bf16.mxu0 0
  %240 = vmatpush1.bf16.msra.mxu0 0
  %241 = vmatprep.subr.bf16.mxu0 0
  %242 = vmatpush1.bf16.msra.mxu0 0
  %243 = vmatprep.subr.bf16.mxu0 0
  %244 = vmatpush1.bf16.msra.mxu0 0
  %245 = vmatprep.mubr.bf16.mxu0 0
  %246 = vmatmul.mubr.bf16.gmra.mrb[0].mxu0 %v189
  %v247 = vpop.f32.mrb[0].mxu0
  %v248 = vadd.f32 0.0, %v247
  %v249 = vpop.f32.mrb[0].mxu0
  %v250 = vadd.f32 0.0, %v249
  %v251 = vpop.f32.mrb[0].mxu0
  %v252 = vpop.f32.mrb[0].mxu0
  %253 = vdwg.mxu0
  %254 = vmatprep.subr.bf16.mxu0 %v136
  %255 = vmatpush1.bf16.msra.mxu0 %v135
  %256 = vmatprep.subr.bf16.mxu0 %v142
  %257 = vmatpush1.bf16.msra.mxu0 %v141
  %258 = vmatprep.subr.bf16.mxu0 %v148
  %259 = vmatpush1.bf16.msra.mxu0 %v147
  %260 = vmatprep.subr.bf16.mxu0 %v154
  %261 = vmatpush1.bf16.msra.mxu0 %v153
  %262 = vmatprep.subr.bf16.mxu0 %v205
  %263 = vmatpush1.bf16.msra.mxu0 %v202
  %264 = vmatprep.subr.bf16.mxu0 0
  %265 = vmatpush1.bf16.msra.mxu0 0
  %266 = vmatprep.subr.bf16.mxu0 0
  %267 = vmatpush1.bf16.msra.mxu0 0
  %268 = vmatprep.subr.bf16.mxu0 0
  %269 = vmatpush1.bf16.msra.mxu0 0
  %270 = vmatprep.subr.bf16.mxu0 0
  %271 = vmatpush1.bf16.msra.mxu0 0
  %272 = vmatprep.subr.bf16.mxu0 0
  %273 = vmatpush1.bf16.msra.mxu0 0
  %274 = vmatprep.subr.bf16.mxu0 0
  %275 = vmatpush1.bf16.msra.mxu0 0
  %276 = vmatprep.subr.bf16.mxu0 0
  %277 = vmatpush1.bf16.msra.mxu0 0
  %278 = vmatprep.subr.bf16.mxu0 0
  %279 = vmatpush1.bf16.msra.mxu0 0
  %280 = vmatprep.subr.bf16.mxu0 0
  %281 = vmatpush1.bf16.msra.mxu0 0
  %282 = vmatprep.subr.bf16.mxu0 0
  %283 = vmatpush1.bf16.msra.mxu0 0
  %284 = vmatprep.subr.bf16.mxu0 0
  %285 = vmatpush1.bf16.msra.mxu0 0
  %286 = vmatprep.mubr.bf16.mxu0 0
  %287 = vmatmul.mubr.bf16.gmra.mrb[0].mxu0 %v189
  %v288 = vpop.f32.mrb[0].mxu0
  %v289 = vadd.f32 0.0, %v288
  %v290 = vpop.f32.mrb[0].mxu0
  %v291 = vadd.f32 0.0, %v290
  %v292 = vpop.f32.mrb[0].mxu0
  %v293 = vpop.f32.mrb[0].mxu0
  %294 = vdwg.mxu0
  %295 = vmatprep.subr.bf16.mxu0 %v138
  %296 = vmatpush1.bf16.msra.mxu0 %v137
  %297 = vmatprep.subr.bf16.mxu0 %v144
  %298 = vmatpush1.bf16.msra.mxu0 %v143
  %299 = vmatprep.subr.bf16.mxu0 %v150
  %300 = vmatpush1.bf16.msra.mxu0 %v149
  %301 = vmatprep.subr.bf16.mxu0 %v156
  %302 = vmatpush1.bf16.msra.mxu0 %v155
  %303 = vmatprep.subr.bf16.mxu0 %v211
  %304 = vmatpush1.bf16.msra.mxu0 %v208
  %305 = vmatprep.subr.bf16.mxu0 0
  %306 = vmatpush1.bf16.msra.mxu0 0
  %307 = vmatprep.subr.bf16.mxu0 0
  %308 = vmatpush1.bf16.msra.mxu0 0
  %309 = vmatprep.subr.bf16.mxu0 0
  %310 = vmatpush1.bf16.msra.mxu0 0
  %311 = vmatprep.subr.bf16.mxu0 0
  %312 = vmatpush1.bf16.msra.mxu0 0
  %313 = vmatprep.subr.bf16.mxu0 0
  %314 = vmatpush1.bf16.msra.mxu0 0
  %315 = vmatprep.subr.bf16.mxu0 0
  %316 = vmatpush1.bf16.msra.mxu0 0
  %317 = vmatprep.subr.bf16.mxu0 0
  %318 = vmatpush1.bf16.msra.mxu0 0
  %319 = vmatprep.subr.bf16.mxu0 0
  %320 = vmatpush1.bf16.msra.mxu0 0
  %321 = vmatprep.subr.bf16.mxu0 0
  %322 = vmatpush1.bf16.msra.mxu0 0
  %323 = vmatprep.subr.bf16.mxu0 0
  %324 = vmatpush1.bf16.msra.mxu0 0
  %325 = vmatprep.subr.bf16.mxu0 0
  %326 = vmatpush1.bf16.msra.mxu0 0
  %327 = vmatprep.mubr.bf16.mxu0 0
  %328 = vmatmul.mubr.bf16.gmra.mrb[0].mxu0 %v189
  %v329 = vpop.f32.mrb[0].mxu0
  %v330 = vadd.f32 0.0, %v329
  %v331 = vpop.f32.mrb[0].mxu0
  %v332 = vadd.f32 0.0, %v331
  %v333 = vpop.f32.mrb[0].mxu0
  %v334 = vpop.f32.mrb[0].mxu0
  %335 = vdwg.mxu0
  %v336 = vmax.f32 %v248, 0.0
  %v337 = vmax.f32 %v250, 0.0
  %v338 = vmax.f32 %v289, 0.0
  %v339 = vmax.f32 %v291, 0.0
  %v340 = vmax.f32 %v330, 0.0
  %v341 = vmax.f32 %v332, 0.0
  %vm342 = vcmask 1043456
  %v343 = vsel %vm342, %v248, 0.0
  %v344 = vsel %vm342, %v250, 0.0
  %v345 = vadd.f32 %v343, %v344
  %v346 = vsel %vm342, %v289, 0.0
  %v347 = vadd.f32 %v345, %v346
  %v348 = vsel %vm342, %v291, 0.0
  %v349 = vadd.f32 %v347, %v348
  %v350 = vsel %vm342, %v330, 0.0
  %v351 = vadd.f32 %v349, %v350
  %vm352 = vcmask 60416
  %v353 = vsel %vm352, %v332, 0.0
  %v354 = vadd.f32 %v351, %v353
  %355 = vadd.xlane.f32.xlu0 %v354
  %v356 = vpop.xlane.xlu0 %355
  %v357 = vrot.slane %v356, 4
  %v358 = vadd.f32 %v356, %v357
  %v359 = vrot.slane %v358, 2
  %v360 = vadd.f32 %v358, %v359
  %v361 = vrot.slane %v360, 1
  %v362 = vadd.f32 %v360, %v361
  %s363 = vtos %v362
  %v364 = vrcp.pop 2592.0
  %s365 = vtos %v364
  %s366 = smul.f32 %s363, %s365
  %v367 = vstv %s366
  %v368 = vsub.f32 %v336, %v367
  %v369 = vsub.f32 %v337, %v367
  %v370 = vsub.f32 %v338, %v367
  %v371 = vsub.f32 %v339, %v367
  %v372 = vsub.f32 %v340, %v367
  %v373 = vsub.f32 %v341, %v367
  %v380 = vcombine.low %v368, %v369
  %v381 = vcombine.low %v370, %v371
  %v382 = vcombine.low %v372, %v373
  %386 = vst [vmem:[%s2] sm:$0xff] %v380
  %387 = vst [vmem:[%s2 + $0x8] sm:$0xff] %v381
  %vm388 = vcmask 64516
  %vm389 = vmor %vm388, %vm342
  %390 = vst.msk [vmem:[%s2 + $0x10] sm:$0xff] %vm389, %v382
  // Predicated region
  $region10: #{resnet_generator_forward.14} parent=0 // pred_check
    _
  $region11: #{resnet_generator_forward.14} parent=0 // pred_check_branch
    %392 = sbr.rel (0) target = $region13
  $region12: #{resnet_generator_forward.14} parent=0 // pred_region
    _
  $region13: #{resnet_generator_forward.14} parent=0 // pred_fallthru
    _
  // Predicated region
  $region14: #{resnet_generator_forward.14} parent=0 // pred_check
    _
  $region15: #{resnet_generator_forward.14} parent=0 // pred_check_branch
    %394 = sbr.rel (0) target = $region17
  $region16: #{resnet_generator_forward.14} parent=0 // pred_region
    _
  $region17: #{resnet_generator_forward.14} parent=0 // pred_fallthru
    _

// kernel: resnet_generator_forward.15
$region0: #{resnet_generator_forward.15}
  #allocation0 [shape = 'u32[]', space=smem, size = 0x4, offset = 0x4, fixed_abs, tag = 'smem constant byte address 0x4 - core index']
  #allocation1 [shape = 'u32[144,128]{1,0:T(1,128)}', space=vmem, size = 0x12000, scoped, tag = 'internal scratch']
  %s0 = inlined_call_operand.vmem [shape: bf16[8,36], index: 0, kind: input, shape index: {}]
  %s1 = inlined_call_operand.vmem [shape: bf16[36,512], index: 1, kind: input, shape index: {}]
  %s2 = inlined_call_operand.vmem [shape: f32[8,512], index: 2, kind: output, shape index: {}]
  %s3 = sld [smem:[#allocation0]]
  $region18: #{resnet_generator_forward.15} parent=0
    _
  %s5 = ssub.s32 1, %s3
  %s6 = scalar_select 0, %s5, %s3
  // Predicated region
  $region2: #{resnet_generator_forward.15} parent=0 // pred_check
    _
  $region3: #{resnet_generator_forward.15} parent=0 // pred_check_branch
    %8 = sbr.rel (0) target = $region5
  $region4: #{resnet_generator_forward.15} parent=0 // pred_region
    _
  $region5: #{resnet_generator_forward.15} parent=0 // pred_fallthru
    _
  // Predicated region
  $region6: #{resnet_generator_forward.15} parent=0 // pred_check
    _
  $region7: #{resnet_generator_forward.15} parent=0 // pred_check_branch
    %10 = sbr.rel (0) target = $region9
  $region8: #{resnet_generator_forward.15} parent=0 // pred_region
    _
  $region9: #{resnet_generator_forward.15} parent=0 // pred_fallthru
    _
  %v12 = vld [vmem:[%s0] sm:$0xf]
  %v13 = vld [vmem:[%s1] sm:$0xff]
  %v14 = vld [vmem:[%s1 + $0x8] sm:$0xff]
  %v15 = vld [vmem:[%s1 + $0x10] sm:$0xff]
  %v16 = vld [vmem:[%s1 + $0x18] sm:$0xff]
  %v17 = vld [vmem:[%s1 + $0x20] sm:$0xff]
  %v18 = vld [vmem:[%s1 + $0x28] sm:$0xff]
  %v19 = vld [vmem:[%s1 + $0x30] sm:$0xff]
  %v20 = vld [vmem:[%s1 + $0x38] sm:$0xff]
  %v21 = vld [vmem:[%s1 + $0x40] sm:$0x33]
  %v22 = vld [vmem:[%s1 + $0x48] sm:$0x33]
  %v33 = vunpack.c.l.b16 %v13
  %v34 = vunpack.c.h.b16 %v13
  %v35 = vunpack.c.l.b16 %v14
  %v36 = vunpack.c.h.b16 %v14
  %v37 = vunpack.c.l.b16 %v15
  %v38 = vunpack.c.h.b16 %v15
  %v39 = vunpack.c.l.b16 %v16
  %v40 = vunpack.c.h.b16 %v16
  %v41 = vunpack.c.l.b16 %v17
  %v42 = vunpack.c.h.b16 %v17
  %v43 = vunpack.c.l.b16 %v18
  %v44 = vunpack.c.h.b16 %v18
  %v45 = vunpack.c.l.b16 %v19
  %v46 = vunpack.c.h.b16 %v19
  %v47 = vunpack.c.l.b16 %v20
  %v48 = vunpack.c.h.b16 %v20
  %v49 = vunpack.c.l.b16 %v21
  %v50 = vunpack.c.h.b16 %v21
  %v51 = vunpack.c.l.b16 %v22
  %v52 = vunpack.c.h.b16 %v22
  %v53 = vpack.c.b16 %v37, %v33
  %v54 = vpack.c.b16 %v38, %v34
  %v55 = vpack.c.b16 %v39, %v35
  %v56 = vpack.c.b16 %v40, %v36
  %v57 = vpack.c.b16 %v45, %v41
  %v58 = vpack.c.b16 %v46, %v42
  %v59 = vpack.c.b16 %v47, %v43
  %v60 = vpack.c.b16 %v48, %v44
  %v61 = vpack.c.b16 %v49, %v49
  %v62 = vpack.c.b16 %v50, %v50
  %v63 = vpack.c.b16 %v51, %v51
  %v64 = vpack.c.b16 %v52, %v52
  %vm73 = vcmask 293888
  %v75 = vsel %vm73, %v12, 0
  %vm77 = vcmask 1041408
  %v79 = vsel %vm77, %v61, 0
  %v82 = vsel %vm77, %v62, 0
  %v85 = vsel %vm77, %v63, 0
  %v88 = vsel %vm77, %v64, 0
  %90 = vmatprep.subr.bf16.mxu0 %v54
  %91 = vmatpush1.bf16.msra.mxu0 %v53
  %92 = vmatprep.subr.bf16.mxu0 %v58
  %93 = vmatpush1.bf16.msra.mxu0 %v57
  %94 = vmatprep.subr.bf16.mxu0 %v82
  %95 = vmatpush1.bf16.msra.mxu0 %v79
  %96 = vmatprep.subr.bf16.mxu0 0
  %97 = vmatpush1.bf16.msra.mxu0 0
  %98 = vmatprep.subr.bf16.mxu0 0
  %99 = vmatpush1.bf16.msra.mxu0 0
  %100 = vmatprep.subr.bf16.mxu0 0
  %101 = vmatpush1.bf16.msra.mxu0 0
  %102 = vmatprep.subr.bf16.mxu0 0
  %103 = vmatpush1.bf16.msra.mxu0 0
  %104 = vmatprep.subr.bf16.mxu0 0
  %105 = vmatpush1.bf16.msra.mxu0 0
  %106 = vmatprep.subr.bf16.mxu0 0
  %107 = vmatpush1.bf16.msra.mxu0 0
  %108 = vmatprep.subr.bf16.mxu0 0
  %109 = vmatpush1.bf16.msra.mxu0 0
  %110 = vmatprep.subr.bf16.mxu0 0
  %111 = vmatpush1.bf16.msra.mxu0 0
  %112 = vmatprep.subr.bf16.mxu0 0
  %113 = vmatpush1.bf16.msra.mxu0 0
  %114 = vmatprep.subr.bf16.mxu0 0
  %115 = vmatpush1.bf16.msra.mxu0 0
  %116 = vmatprep.subr.bf16.mxu0 0
  %117 = vmatpush1.bf16.msra.mxu0 0
  %118 = vmatprep.subr.bf16.mxu0 0
  %119 = vmatpush1.bf16.msra.mxu0 0
  %120 = vmatprep.subr.bf16.mxu0 0
  %121 = vmatpush1.bf16.msra.mxu0 0
  %122 = vmatprep.mubr.bf16.mxu0 0
  %123 = vmatmul.mubr.bf16.gmra.mrb[0].mxu0 %v75
  %v124 = vpop.f32.mrb[0].mxu0
  %v125 = vadd.f32 0.0, %v124
  %v126 = vpop.f32.mrb[0].mxu0
  %v127 = vadd.f32 0.0, %v126
  %v128 = vpop.f32.mrb[0].mxu0
  %v129 = vpop.f32.mrb[0].mxu0
  %130 = vdwg.mxu0
  %131 = vmatprep.subr.bf16.mxu0 %v56
  %132 = vmatpush1.bf16.msra.mxu0 %v55
  %133 = vmatprep.subr.bf16.mxu0 %v60
  %134 = vmatpush1.bf16.msra.mxu0 %v59
  %135 = vmatprep.subr.bf16.mxu0 %v88
  %136 = vmatpush1.bf16.msra.mxu0 %v85
  %137 = vmatprep.subr.bf16.mxu0 0
  %138 = vmatpush1.bf16.msra.mxu0 0
  %139 = vmatprep.subr.bf16.mxu0 0
  %140 = vmatpush1.bf16.msra.mxu0 0
  %141 = vmatprep.subr.bf16.mxu0 0
  %142 = vmatpush1.bf16.msra.mxu0 0
  %143 = vmatprep.subr.bf16.mxu0 0
  %144 = vmatpush1.bf16.msra.mxu0 0
  %145 = vmatprep.subr.bf16.mxu0 0
  %146 = vmatpush1.bf16.msra.mxu0 0
  %147 = vmatprep.subr.bf16.mxu0 0
  %148 = vmatpush1.bf16.msra.mxu0 0
  %149 = vmatprep.subr.bf16.mxu0 0
  %150 = vmatpush1.bf16.msra.mxu0 0
  %151 = vmatprep.subr.bf16.mxu0 0
  %152 = vmatpush1.bf16.msra.mxu0 0
  %153 = vmatprep.subr.bf16.mxu0 0
  %154 = vmatpush1.bf16.msra.mxu0 0
  %155 = vmatprep.subr.bf16.mxu0 0
  %156 = vmatpush1.bf16.msra.mxu0 0
  %157 = vmatprep.subr.bf16.mxu0 0
  %158 = vmatpush1.bf16.msra.mxu0 0
  %159 = vmatprep.subr.bf16.mxu0 0
  %160 = vmatpush1.bf16.msra.mxu0 0
  %161 = vmatprep.subr.bf16.mxu0 0
  %162 = vmatpush1.bf16.msra.mxu0 0
  %163 = vmatprep.mubr.bf16.mxu0 0
  %164 = vmatmul.mubr.bf16.gmra.mrb[0].mxu0 %v75
  %v165 = vpop.f32.mrb[0].mxu0
  %v166 = vadd.f32 0.0, %v165
  %v167 = vpop.f32.mrb[0].mxu0
  %v168 = vadd.f32 0.0, %v167
  %v169 = vpop.f32.mrb[0].mxu0
  %v170 = vpop.f32.mrb[0].mxu0
  %171 = vdwg.mxu0
  %v172 = vmax.f32 %v125, 0.0
  %v173 = vmax.f32 %v127, 0.0
  %v174 = vmax.f32 %v166, 0.0
  %v175 = vmax.f32 %v168, 0.0
  %v176 = vadd.f32 %v125, %v127
  %v177 = vadd.f32 %v176, %v166
  %v178 = vadd.f32 %v177, %v168
  %179 = vadd.xlane.f32.xlu0 %v178
  %v180 = vpop.xlane.xlu0 %179
  %v181 = vrot.slane %v180, 4
  %v182 = vadd.f32 %v180, %v181
  %v183 = vrot.slane %v182, 2
  %v184 = vadd.f32 %v182, %v183
  %v185 = vrot.slane %v184, 1
  %v186 = vadd.f32 %v184, %v185
  %s187 = vtos %v186
  %v188 = vrcp.pop 4096.0
  %s189 = vtos %v188
  %s190 = smul.f32 %s187, %s189
  %v191 = vstv %s190
  %v192 = vsub.f32 %v172, %v191
  %v193 = vsub.f32 %v173, %v191
  %v194 = vsub.f32 %v174, %v191
  %v195 = vsub.f32 %v175, %v191
  %196 = vst [vmem:[%s2] sm:$0xff] %v192
  %197 = vst [vmem:[%s2 + $0x8] sm:$0xff] %v193
  %198 = vst [vmem:[%s2 + $0x10] sm:$0xff] %v194
  %199 = vst [vmem:[%s2 + $0x18] sm:$0xff] %v195
  // Predicated region
  $region10: #{resnet_generator_forward.15} parent=0 // pred_check
    _
  $region11: #{resnet_generator_forward.15} parent=0 // pred_check_branch
    %201 = sbr.rel (0) target = $region13
  $region12: #{resnet_generator_forward.15} parent=0 // pred_region
    _
  $region13: #{resnet_generator_forward.15} parent=0 // pred_fallthru
    _
  // Predicated region
  $region14: #{resnet_generator_forward.15} parent=0 // pred_check
    _
  $region15: #{resnet_generator_forward.15} parent=0 // pred_check_branch
    %203 = sbr.rel (0) target = $region17
  $region16: #{resnet_generator_forward.15} parent=0 // pred_region
    _
  $region17: #{resnet_generator_forward.15} parent=0 // pred_fallthru
    _

// kernel: resnet_generator_forward.16
$region0: #{resnet_generator_forward.16}
  #allocation0 [shape = 'u32[]', space=smem, size = 0x4, offset = 0x4, fixed_abs, tag = 'smem constant byte address 0x4 - core index']
  #allocation1 [shape = 'u32[144,128]{1,0:T(1,128)}', space=vmem, size = 0x12000, scoped, tag = 'internal scratch']
  %s0 = inlined_call_operand.vmem [shape: bf16[16,72], index: 0, kind: input, shape index: {}]
  %s1 = inlined_call_operand.vmem [shape: bf16[72,512], index: 1, kind: input, shape index: {}]
  %s2 = inlined_call_operand.vmem [shape: f32[16,512], index: 2, kind: output, shape index: {}]
  %s3 = sld [smem:[#allocation0]]
  $region18: #{resnet_generator_forward.16} parent=0
    _
  %s5 = ssub.s32 1, %s3
  %s6 = scalar_select 0, %s5, %s3
  // Predicated region
  $region2: #{resnet_generator_forward.16} parent=0 // pred_check
    _
  $region3: #{resnet_generator_forward.16} parent=0 // pred_check_branch
    %8 = sbr.rel (0) target = $region5
  $region4: #{resnet_generator_forward.16} parent=0 // pred_region
    _
  $region5: #{resnet_generator_forward.16} parent=0 // pred_fallthru
    _
  // Predicated region
  $region6: #{resnet_generator_forward.16} parent=0 // pred_check
    _
  $region7: #{resnet_generator_forward.16} parent=0 // pred_check_branch
    %10 = sbr.rel (0) target = $region9
  $region8: #{resnet_generator_forward.16} parent=0 // pred_region
    _
  $region9: #{resnet_generator_forward.16} parent=0 // pred_fallthru
    _
  %v12 = vld [vmem:[%s0] sm:$0xf]
  %v13 = vld [vmem:[%s0 + $0x4] sm:$0xf]
  %v14 = vld [vmem:[%s1] sm:$0xff]
  %v15 = vld [vmem:[%s1 + $0x8] sm:$0xff]
  %v16 = vld [vmem:[%s1 + $0x10] sm:$0xff]
  %v17 = vld [vmem:[%s1 + $0x18] sm:$0xff]
  %v18 = vld [vmem:[%s1 + $0x20] sm:$0xff]
  %v19 = vld [vmem:[%s1 + $0x28] sm:$0xff]
  %v20 = vld [vmem:[%s1 + $0x30] sm:$0xff]
  %v21 = vld [vmem:[%s1 + $0x38] sm:$0xff]
  %v22 = vld [vmem:[%s1 + $0x40] sm:$0xff]
  %v23 = vld [vmem:[%s1 + $0x48] sm:$0xff]
  %v24 = vld [vmem:[%s1 + $0x50] sm:$0xff]
  %v25 = vld [vmem:[%s1 + $0x58] sm:$0xff]
  %v26 = vld [vmem:[%s1 + $0x60] sm:$0xff]
  %v27 = vld [vmem:[%s1 + $0x68] sm:$0xff]
  %v28 = vld [vmem:[%s1 + $0x70] sm:$0xff]
  %v29 = vld [vmem:[%s1 + $0x78] sm:$0xff]
  %v30 = vld [vmem:[%s1 + $0x80] sm:$0xff]
  %v31 = vld [vmem:[%s1 + $0x88] sm:$0xff]
  %v34 = vunpack.c.l.b16 %v12
  %v35 = vunpack.c.l.b16 %v13
  %v36 = vpack.c.b16 %v35, %v34
  %v55 = vunpack.c.l.b16 %v14
  %v56 = vunpack.c.h.b16 %v14
  %v57 = vunpack.c.l.b16 %v15
  %v58 = vunpack.c.h.b16 %v15
  %v59 = vunpack.c.l.b16 %v16
  %v60 = vunpack.c.h.b16 %v16
  %v61 = vunpack.c.l.b16 %v17
  %v62 = vunpack.c.h.b16 %v17
  %v63 = vunpack.c.l.b16 %v18
  %v64 = vunpack.c.h.b16 %v18
  %v65 = vunpack.c.l.b16 %v19
  %v66 = vunpack.c.h.b16 %v19
  %v67 = vunpack.c.l.b16 %v20
  %v68 = vunpack.c.h.b16 %v20
  %v69 = vunpack.c.l.b16 %v21
  %v70 = vunpack.c.h.b16 %v21
  %v71 = vunpack.c.l.b16 %v22
  %v72 = vunpack.c.h.b16 %v22
  %v73 = vunpack.c.l.b16 %v23
  %v74 = vunpack.c.h.b16 %v23
  %v75 = vunpack.c.l.b16 %v24
  %v76 = vunpack.c.h.b16 %v24
  %v77 = vunpack.c.l.b16 %v25
  %v78 = vunpack.c.h.b16 %v25
  %v79 = vunpack.c.l.b16 %v26
  %v80 = vunpack.c.h.b16 %v26
  %v81 = vunpack.c.l.b16 %v27
  %v82 = vunpack.c.h.b16 %v27
  %v83 = vunpack.c.l.b16 %v28
  %v84 = vunpack.c.h.b16 %v28
  %v85 = vunpack.c.l.b16 %v29
  %v86 = vunpack.c.h.b16 %v29
  %v87 = vunpack.c.l.b16 %v30
  %v88 = vunpack.c.h.b16 %v30
  %v89 = vunpack.c.l.b16 %v31
  %v90 = vunpack.c.h.b16 %v31
  %v91 = vpack.c.b16 %v59, %v55
  %v92 = vpack.c.b16 %v60, %v56
  %v93 = vpack.c.b16 %v61, %v57
  %v94 = vpack.c.b16 %v62, %v58
  %v95 = vpack.c.b16 %v67, %v63
  %v96 = vpack.c.b16 %v68, %v64
  %v97 = vpack.c.b16 %v69, %v65
  %v98 = vpack.c.b16 %v70, %v66
  %v99 = vpack.c.b16 %v75, %v71
  %v100 = vpack.c.b16 %v76, %v72
  %v101 = vpack.c.b16 %v77, %v73
  %v102 = vpack.c.b16 %v78, %v74
  %v103 = vpack.c.b16 %v83, %v79
  %v104 = vpack.c.b16 %v84, %v80
  %v105 = vpack.c.b16 %v85, %v81
  %v106 = vpack.c.b16 %v86, %v82
  %v107 = vpack.c.b16 %v87, %v87
  %v108 = vpack.c.b16 %v88, %v88
  %v109 = vpack.c.b16 %v89, %v89
  %v110 = vpack.c.b16 %v90, %v90
  %vm127 = vcmask 588800
  %v129 = vsel %vm127, %v36, 0
  %vm131 = vcmask 1043456
  %v133 = vsel %vm131, %v107, 0
  %v136 = vsel %vm131, %v108, 0
  %v139 = vsel %vm131, %v109, 0
  %v142 = vsel %vm131, %v110, 0
  %144 = vmatprep.subr.bf16.mxu0 %v92
  %145 = vmatpush1.bf16.msra.mxu0 %v91
  %146 = vmatprep.subr.bf16.mxu0 %v96
  %147 = vmatpush1.bf16.msra.mxu0 %v95
  %148 = vmatprep.subr.bf16.mxu0 %v100
  %149 = vmatpush1.bf16.msra.mxu0 %v99
  %150 = vmatprep.subr.bf16.mxu0 %v104
  %151 = vmatpush1.bf16.msra.mxu0 %v103
  %152 = vmatprep.subr.bf16.mxu0 %v136
  %153 = vmatpush1.bf16.msra.mxu0 %v133
  %154 = vmatprep.subr.bf16.mxu0 0
  %155 = vmatpush1.bf16.msra.mxu0 0
  %156 = vmatprep.subr.bf16.mxu0 0
  %157 = vmatpush1.bf16.msra.mxu0 0
  %158 = vmatprep.subr.bf16.mxu0 0
  %159 = vmatpush1.bf16.msra.mxu0 0
  %160 = vmatprep.subr.bf16.mxu0 0
  %161 = vmatpush1.bf16.msra.mxu0 0
  %162 = vmatprep.subr.bf16.mxu0 0
  %163 = vmatpush1.bf16.msra.mxu0 0
  %164 = vmatprep.subr.bf16.mxu0 0
  %165 = vmatpush1.bf16.msra.mxu0 0
  %166 = vmatprep.subr.bf16.mxu0 0
  %167 = vmatpush1.bf16.msra.mxu0 0
  %168 = vmatprep.subr.bf16.mxu0 0
  %169 = vmatpush1.bf16.msra.mxu0 0
  %170 = vmatprep.subr.bf16.mxu0 0
  %171 = vmatpush1.bf16.msra.mxu0 0
  %172 = vmatprep.subr.bf16.mxu0 0
  %173 = vmatpush1.bf16.msra.mxu0 0
  %174 = vmatprep.subr.bf16.mxu0 0
  %175 = vmatpush1.bf16.msra.mxu0 0
  %176 = vmatprep.mubr.bf16.mxu0 0
  %177 = vmatmul.mubr.bf16.gmra.mrb[0].mxu0 %v129
  %v178 = vpop.f32.mrb[0].mxu0
  %v179 = vadd.f32 0.0, %v178
  %v180 = vpop.f32.mrb[0].mxu0
  %v181 = vadd.f32 0.0, %v180
  %v182 = vpop.f32.mrb[0].mxu0
  %v183 = vadd.f32 0.0, %v182
  %v184 = vpop.f32.mrb[0].mxu0
  %v185 = vadd.f32 0.0, %v184
  %186 = vdwg.mxu0
  %187 = vmatprep.subr.bf16.mxu0 %v94
  %188 = vmatpush1.bf16.msra.mxu0 %v93
  %189 = vmatprep.subr.bf16.mxu0 %v98
  %190 = vmatpush1.bf16.msra.mxu0 %v97
  %191 = vmatprep.subr.bf16.mxu0 %v102
  %192 = vmatpush1.bf16.msra.mxu0 %v101
  %193 = vmatprep.subr.bf16.mxu0 %v106
  %194 = vmatpush1.bf16.msra.mxu0 %v105
  %195 = vmatprep.subr.bf16.mxu0 %v142
  %196 = vmatpush1.bf16.msra.mxu0 %v139
  %197 = vmatprep.subr.bf16.mxu0 0
  %198 = vmatpush1.bf16.msra.mxu0 0
  %199 = vmatprep.subr.bf16.mxu0 0
  %200 = vmatpush1.bf16.msra.mxu0 0
  %201 = vmatprep.subr.bf16.mxu0 0
  %202 = vmatpush1.bf16.msra.mxu0 0
  %203 = vmatprep.subr.bf16.mxu0 0
  %204 = vmatpush1.bf16.msra.mxu0 0
  %205 = vmatprep.subr.bf16.mxu0 0
  %206 = vmatpush1.bf16.msra.mxu0 0
  %207 = vmatprep.subr.bf16.mxu0 0
  %208 = vmatpush1.bf16.msra.mxu0 0
  %209 = vmatprep.subr.bf16.mxu0 0
  %210 = vmatpush1.bf16.msra.mxu0 0
  %211 = vmatprep.subr.bf16.mxu0 0
  %212 = vmatpush1.bf16.msra.mxu0 0
  %213 = vmatprep.subr.bf16.mxu0 0
  %214 = vmatpush1.bf16.msra.mxu0 0
  %215 = vmatprep.subr.bf16.mxu0 0
  %216 = vmatpush1.bf16.msra.mxu0 0
  %217 = vmatprep.subr.bf16.mxu0 0
  %218 = vmatpush1.bf16.msra.mxu0 0
  %219 = vmatprep.mubr.bf16.mxu0 0
  %220 = vmatmul.mubr.bf16.gmra.mrb[0].mxu0 %v129
  %v221 = vpop.f32.mrb[0].mxu0
  %v222 = vadd.f32 0.0, %v221
  %v223 = vpop.f32.mrb[0].mxu0
  %v224 = vadd.f32 0.0, %v223
  %v225 = vpop.f32.mrb[0].mxu0
  %v226 = vadd.f32 0.0, %v225
  %v227 = vpop.f32.mrb[0].mxu0
  %v228 = vadd.f32 0.0, %v227
  %229 = vdwg.mxu0
  %v230 = vadd.f32 %v179, %v181
  %v231 = vadd.f32 %v230, %v222
  %v232 = vadd.f32 %v231, %v224
  %233 = vadd.xlane.f32.xlu0 %v232
  %v234 = vpop.xlane.xlu0 %233
  %v235 = vadd.f32 %v183, %v185
  %v236 = vadd.f32 %v235, %v226
  %v237 = vadd.f32 %v236, %v228
  %238 = vadd.xlane.f32.xlu0 %v237
  %v239 = vpop.xlane.xlu0 %238
  %v240 = vrcp.pop 512.0
  %v241 = vmul.f32 %v234, %v240
  %v242 = vmul.f32 %v239, %v240
  %v243 = vsub.f32 %v179, %v241
  %v244 = vsub.f32 %v181, %v241
  %v245 = vsub.f32 %v222, %v241
  %v246 = vsub.f32 %v224, %v241
  %v247 = vsub.f32 %v183, %v242
  %v248 = vsub.f32 %v185, %v242
  %v249 = vsub.f32 %v226, %v242
  %v250 = vsub.f32 %v228, %v242
  %v251 = vmul.f32 %v243, %v243
  %v252 = vmul.f32 %v244, %v244
  %v253 = vmul.f32 %v245, %v245
  %v254 = vmul.f32 %v246, %v246
  %v255 = vmul.f32 %v247, %v247
  %v256 = vmul.f32 %v248, %v248
  %v257 = vmul.f32 %v249, %v249
  %v258 = vmul.f32 %v250, %v250
  %v259 = vadd.f32 %v251, %v252
  %v260 = vadd.f32 %v259, %v253
  %v261 = vadd.f32 %v260, %v254
  %262 = vadd.xlane.f32.xlu0 %v261
  %v263 = vpop.xlane.xlu0 %262
  %v264 = vadd.f32 %v255, %v256
  %v265 = vadd.f32 %v264, %v257
  %v266 = vadd.f32 %v265, %v258
  %267 = vadd.xlane.f32.xlu0 %v266
  %v268 = vpop.xlane.xlu0 %267
  %v269 = vmul.f32 %v263, %v240
  %v270 = vmul.f32 %v268, %v240
  %v271 = vadd.f32 %v269, 1e-05
  %v272 = vadd.f32 %v270, 1e-05
  %v273 = vrsqrt.pop %v271
  %v274 = vrsqrt.pop %v272
  %v275 = vmul.f32 %v243, %v273
  %v276 = vmul.f32 %v244, %v273
  %v277 = vmul.f32 %v245, %v273
  %v278 = vmul.f32 %v246, %v273
  %v279 = vmul.f32 %v247, %v274
  %v280 = vmul.f32 %v248, %v274
  %v281 = vmul.f32 %v249, %v274
  %v282 = vmul.f32 %v250, %v274
  %v283 = vmax.f32 %v275, 0.0
  %v284 = vmax.f32 %v276, 0.0
  %v285 = vmax.f32 %v277, 0.0
  %v286 = vmax.f32 %v278, 0.0
  %v287 = vmax.f32 %v279, 0.0
  %v288 = vmax.f32 %v280, 0.0
  %v289 = vmax.f32 %v281, 0.0
  %v290 = vmax.f32 %v282, 0.0
  %291 = vst [vmem:[%s2] sm:$0xff] %v283
  %292 = vst [vmem:[%s2 + $0x8] sm:$0xff] %v284
  %293 = vst [vmem:[%s2 + $0x10] sm:$0xff] %v285
  %294 = vst [vmem:[%s2 + $0x18] sm:$0xff] %v286
  %295 = vst [vmem:[%s2 + $0x20] sm:$0xff] %v287
  %296 = vst [vmem:[%s2 + $0x28] sm:$0xff] %v288
  %297 = vst [vmem:[%s2 + $0x30] sm:$0xff] %v289
  %298 = vst [vmem:[%s2 + $0x38] sm:$0xff] %v290
  // Predicated region
  $region10: #{resnet_generator_forward.16} parent=0 // pred_check
    _
  $region11: #{resnet_generator_forward.16} parent=0 // pred_check_branch
    %300 = sbr.rel (0) target = $region13
  $region12: #{resnet_generator_forward.16} parent=0 // pred_region
    _
  $region13: #{resnet_generator_forward.16} parent=0 // pred_fallthru
    _
  // Predicated region
  $region14: #{resnet_generator_forward.16} parent=0 // pred_check
    _
  $region15: #{resnet_generator_forward.16} parent=0 // pred_check_branch
    %302 = sbr.rel (0) target = $region17
  $region16: #{resnet_generator_forward.16} parent=0 // pred_region
    _
  $region17: #{resnet_generator_forward.16} parent=0 // pred_fallthru
    _

// kernel: resnet_generator_forward.17
$region0: #{resnet_generator_forward.17}
  #allocation0 [shape = 'u32[]', space=smem, size = 0x4, offset = 0x4, fixed_abs, tag = 'smem constant byte address 0x4 - core index']
  #allocation1 [shape = 'u32[144,128]{1,0:T(1,128)}', space=vmem, size = 0x12000, scoped, tag = 'internal scratch']
  %s0 = inlined_call_operand.vmem [shape: f32[9,16,128], index: 0, kind: input, shape index: {}]
  %s1 = inlined_call_operand.vmem [shape: f32[16,128], index: 1, kind: output, shape index: {}]
  %s2 = sld [smem:[#allocation0]]
  $region14: #{resnet_generator_forward.17} parent=0
    _
  %s4 = ssub.s32 1, %s2
  %s5 = scalar_select 0, %s4, %s2
  // Predicated region
  $region2: #{resnet_generator_forward.17} parent=0 // pred_check
    _
  $region3: #{resnet_generator_forward.17} parent=0 // pred_check_branch
    %7 = sbr.rel (0) target = $region5
  $region4: #{resnet_generator_forward.17} parent=0 // pred_region
    _
  $region5: #{resnet_generator_forward.17} parent=0 // pred_fallthru
    _
  %v8 = vld [vmem:[%s0] sm:$0xff]
  %v9 = vld [vmem:[%s0 + $0x8] sm:$0xff]
  %v10 = vmul.f32 %v8, 0.0625
  %v11 = vmul.f32 %v9, 0.0625
  %s12 = scalar_lea.vmem %s0, 16
  %v13 = vld [vmem:[%s12] sm:$0xff]
  %v14 = vld [vmem:[%s12 + $0x8] sm:$0xff]
  %v15 = vmul.f32 %v13, 0.125
  %v16 = vmul.f32 %v14, 0.125
  %v17 = vadd.f32 %v10, %v15
  %v18 = vadd.f32 %v11, %v16
  %s19 = scalar_lea.vmem %s0, 32
  %v20 = vld [vmem:[%s19] sm:$0xff]
  %v21 = vld [vmem:[%s19 + $0x8] sm:$0xff]
  %v22 = vmul.f32 %v20, 0.0625
  %v23 = vmul.f32 %v21, 0.0625
  %v24 = vadd.f32 %v17, %v22
  %v25 = vadd.f32 %v18, %v23
  %s26 = scalar_lea.vmem %s0, 48
  %v27 = vld [vmem:[%s26] sm:$0xff]
  %v28 = vld [vmem:[%s26 + $0x8] sm:$0xff]
  %v29 = vmul.f32 %v27, 0.125
  %v30 = vmul.f32 %v28, 0.125
  %v31 = vadd.f32 %v24, %v29
  %v32 = vadd.f32 %v25, %v30
  %s33 = scalar_lea.vmem %s0, 64
  %v34 = vld [vmem:[%s33] sm:$0xff]
  %v35 = vld [vmem:[%s33 + $0x8] sm:$0xff]
  %v36 = vmul.f32 %v34, 0.25
  %v37 = vmul.f32 %v35, 0.25
  %v38 = vadd.f32 %v31, %v36
  %v39 = vadd.f32 %v32, %v37
  %s40 = scalar_lea.vmem %s0, 80
  %v41 = vld [vmem:[%s40] sm:$0xff]
  %v42 = vld [vmem:[%s40 + $0x8] sm:$0xff]
  %v43 = vmul.f32 %v41, 0.125
  %v44 = vmul.f32 %v42, 0.125
  %v45 = vadd.f32 %v38, %v43
  %v46 = vadd.f32 %v39, %v44
  %s47 = scalar_lea.vmem %s0, 96
  %v48 = vld [vmem:[%s47] sm:$0xff]
  %v49 = vld [vmem:[%s47 + $0x8] sm:$0xff]
  %v50 = vmul.f32 %v48, 0.0625
  %v51 = vmul.f32 %v49, 0.0625
  %v52 = vadd.f32 %v45, %v50
  %v53 = vadd.f32 %v46, %v51
  %s54 = scalar_lea.vmem %s0, 112
  %v55 = vld [vmem:[%s54] sm:$0xff]
  %v56 = vld [vmem:[%s54 + $0x8] sm:$0xff]
  %v57 = vmul.f32 %v55, 0.125
  %v58 = vmul.f32 %v56, 0.125
  %v59 = vadd.f32 %v52, %v57
  %v60 = vadd.f32 %v53, %v58
  %s61 = scalar_lea.vmem %s0, 128
  %v62 = vld [vmem:[%s61] sm:$0xff]
  %v63 = vld [vmem:[%s61 + $0x8] sm:$0xff]
  %v64 = vmul.f32 %v62, 0.0625
  %v65 = vmul.f32 %v63, 0.0625
  %v66 = vadd.f32 %v59, %v64
  %v67 = vadd.f32 %v60, %v65
  %68 = vst [vmem:[%s1] sm:$0xff] %v66
  %69 = vst [vmem:[%s1 + $0x8] sm:$0xff] %v67
  // Predicated region
  $region6: #{resnet_generator_forward.17} parent=0 // pred_check
    _
  $region7: #{resnet_generator_forward.17} parent=0 // pred_check_branch
    %71 = sbr.rel (0) target = $region9
  $region8: #{resnet_generator_forward.17} parent=0 // pred_region
    _
  $region9: #{resnet_generator_forward.17} parent=0 // pred_fallthru
    _
  // Predicated region
  $region10: #{resnet_generator_forward.17} parent=0 // pred_check
    _
  $region11: #{resnet_generator_forward.17} parent=0 // pred_check_branch
    %73 = sbr.rel (0) target = $region13
  $region12: #{resnet_generator_forward.17} parent=0 // pred_region
    _
  $region13: #{resnet_generator_forward.17} parent=0 // pred_fallthru
    _

// kernel: resnet_generator_forward.18
$region0: #{resnet_generator_forward.18}
  #allocation0 [shape = 'u32[]', space=smem, size = 0x4, offset = 0x4, fixed_abs, tag = 'smem constant byte address 0x4 - core index']
  #allocation1 [shape = 'u32[144,128]{1,0:T(1,128)}', space=vmem, size = 0x12000, scoped, tag = 'internal scratch']
  %s0 = inlined_call_operand.vmem [shape: bf16[32,144], index: 0, kind: input, shape index: {}]
  %s1 = inlined_call_operand.vmem [shape: bf16[144,128], index: 1, kind: input, shape index: {}]
  %s2 = inlined_call_operand.vmem [shape: f32[32,128], index: 2, kind: output, shape index: {}]
  %s3 = sld [smem:[#allocation0]]
  $region18: #{resnet_generator_forward.18} parent=0
    _
  %s5 = ssub.s32 1, %s3
  %s6 = scalar_select 0, %s5, %s3
  // Predicated region
  $region2: #{resnet_generator_forward.18} parent=0 // pred_check
    _
  $region3: #{resnet_generator_forward.18} parent=0 // pred_check_branch
    %8 = sbr.rel (0) target = $region5
  $region4: #{resnet_generator_forward.18} parent=0 // pred_region
    _
  $region5: #{resnet_generator_forward.18} parent=0 // pred_fallthru
    _
  // Predicated region
  $region6: #{resnet_generator_forward.18} parent=0 // pred_check
    _
  $region7: #{resnet_generator_forward.18} parent=0 // pred_check_branch
    %10 = sbr.rel (0) target = $region9
  $region8: #{resnet_generator_forward.18} parent=0 // pred_region
    _
  $region9: #{resnet_generator_forward.18} parent=0 // pred_fallthru
    _
  %v12 = vld [vmem:[%s0] sm:$0xff]
  %v13 = vld [vmem:[%s0 + $0x8] sm:$0xff]
  %v14 = vld [vmem:[%s0 + $0x10] sm:$0xff]
  %v15 = vld [vmem:[%s0 + $0x18] sm:$0xff]
  %v16 = vld [vmem:[%s1] sm:$0xf]
  %v17 = vld [vmem:[%s1 + $0x4] sm:$0xf]
  %v18 = vld [vmem:[%s1 + $0x8] sm:$0xf]
  %v19 = vld [vmem:[%s1 + $0xc] sm:$0xf]
  %v20 = vld [vmem:[%s1 + $0x10] sm:$0xf]
  %v21 = vld [vmem:[%s1 + $0x14] sm:$0xf]
  %v22 = vld [vmem:[%s1 + $0x18] sm:$0xf]
  %v23 = vld [vmem:[%s1 + $0x1c] sm:$0xf]
  %v24 = vld [vmem:[%s1 + $0x20] sm:$0xf]
  %v25 = vld [vmem:[%s1 + $0x24] sm:$0xf]
  %v26 = vld [vmem:[%s1 + $0x28] sm:$0xf]
  %v27 = vld [vmem:[%s1 + $0x2c] sm:$0xf]
  %v28 = vld [vmem:[%s1 + $0x30] sm:$0xf]
  %v29 = vld [vmem:[%s1 + $0x34] sm:$0xf]
  %v30 = vld [vmem:[%s1 + $0x38] sm:$0xf]
  %v31 = vld [vmem:[%s1 + $0x3c] sm:$0xf]
  %v32 = vld [vmem:[%s1 + $0x40] sm:$0xf]
  %v33 = vld [vmem:[%s1 + $0x44] sm:$0xf]
  %v38 = vunpack.c.l.b16 %v12
  %v39 = vunpack.c.h.b16 %v12
  %v40 = vunpack.c.l.b16 %v13
  %v41 = vunpack.c.h.b16 %v13
  %v42 = vunpack.c.l.b16 %v14
  %v43 = vunpack.c.h.b16 %v14
  %v44 = vunpack.c.l.b16 %v15
  %v45 = vunpack.c.h.b16 %v15
  %v46 = vpack.c.b16 %v40, %v38
  %v47 = vpack.c.b16 %v41, %v39
  %v48 = vpack.c.b16 %v44, %v42
  %v49 = vpack.c.b16 %v45, %v43
  %v70 = vunpack.c.l.b16 %v16
  %v71 = vunpack.c.l.b16 %v17
  %v72 = vunpack.c.l.b16 %v18
  %v73 = vunpack.c.l.b16 %v19
  %v74 = vunpack.c.l.b16 %v20
  %v75 = vunpack.c.l.b16 %v21
  %v76 = vunpack.c.l.b16 %v22
  %v77 = vunpack.c.l.b16 %v23
  %v78 = vunpack.c.l.b16 %v24
  %v79 = vunpack.c.l.b16 %v25
  %v80 = vunpack.c.l.b16 %v26
  %v81 = vunpack.c.l.b16 %v27
  %v82 = vunpack.c.l.b16 %v28
  %v83 = vunpack.c.l.b16 %v29
  %v84 = vunpack.c.l.b16 %v30
  %v85 = vunpack.c.l.b16 %v31
  %v86 = vunpack.c.l.b16 %v32
  %v87 = vunpack.c.l.b16 %v33
  %v88 = vpack.c.b16 %v71, %v70
  %v89 = vpack.c.b16 %v73, %v72
  %v90 = vpack.c.b16 %v75, %v74
  %v91 = vpack.c.b16 %v77, %v76
  %v92 = vpack.c.b16 %v79, %v78
  %v93 = vpack.c.b16 %v81, %v80
  %v94 = vpack.c.b16 %v83, %v82
  %v95 = vpack.c.b16 %v85, %v84
  %v96 = vpack.c.b16 %v87, %v86
  %vm106 = vcmask 130048
  %v108 = vsel %vm106, %v47, 0
  %v111 = vsel %vm106, %v49, 0
  %113 = vmatprep.subr.bf16.mxu0 0
  %114 = vmatpush1.bf16.msra.mxu0 %v88
  %115 = vmatprep.subr.bf16.mxu0 0
  %116 = vmatpush1.bf16.msra.mxu0 %v89
  %117 = vmatprep.subr.bf16.mxu0 0
  %118 = vmatpush1.bf16.msra.mxu0 %v90
  %119 = vmatprep.subr.bf16.mxu0 0
  %120 = vmatpush1.bf16.msra.mxu0 %v91
  %121 = vmatprep.subr.bf16.mxu0 0
  %122 = vmatpush1.bf16.msra.mxu0 %v92
  %123 = vmatprep.subr.bf16.mxu0 0
  %124 = vmatpush1.bf16.msra.mxu0 %v93
  %125 = vmatprep.subr.bf16.mxu0 0
  %126 = vmatpush1.bf16.msra.mxu0 %v94
  %127 = vmatprep.subr.bf16.mxu0 0
  %128 = vmatpush1.bf16.msra.mxu0 %v95
  %129 = vmatprep.subr.bf16.mxu0 0
  %130 = vmatpush1.bf16.msra.mxu0 %v96
  %131 = vmatprep.subr.bf16.mxu0 0
  %132 = vmatpush1.bf16.msra.mxu0 0
  %133 = vmatprep.subr.bf16.mxu0 0
  %134 = vmatpush1.bf16.msra.mxu0 0
  %135 = vmatprep.subr.bf16.mxu0 0
  %136 = vmatpush1.bf16.msra.mxu0 0
  %137 = vmatprep.subr.bf16.mxu0 0
  %138 = vmatpush1.bf16.msra.mxu0 0
  %139 = vmatprep.subr.bf16.mxu0 0
  %140 = vmatpush1.bf16.msra.mxu0 0
  %141 = vmatprep.subr.bf16.mxu0 0
  %142 = vmatpush1.bf16.msra.mxu0 0
  %143 = vmatprep.subr.bf16.mxu0 0
  %144 = vmatpush1.bf16.msra.mxu0 0
  %145 = vmatprep.mubr.bf16.mxu0 %v108
  %146 = vmatmul.mubr.bf16.gmra.mrb[0].mxu0 %v46
  %v147 = vpop.f32.mrb[0].mxu0
  %v148 = vadd.f32 0.0, %v147
  %v149 = vpop.f32.mrb[0].mxu0
  %v150 = vpop.f32.mrb[0].mxu0
  %v151 = vadd.f32 0.0, %v150
  %v152 = vpop.f32.mrb[0].mxu0
  %153 = vmatprep.mubr.bf16.mxu0 %v111
  %154 = vmatmul.mubr.bf16.gmra.mrb[0].mxu0 %v48
  %v155 = vpop.f32.mrb[0].mxu0
  %v156 = vadd.f32 0.0, %v155
  %v157 = vpop.f32.mrb[0].mxu0
  %v158 = vpop.f32.mrb[0].mxu0
  %v159 = vadd.f32 0.0, %v158
  %v160 = vpop.f32.mrb[0].mxu0
  %161 = vdwg.mxu0
  %162 = vadd.xlane.f32.xlu0 %v148
  %v163 = vpop.xlane.xlu0 %162
  %164 = vadd.xlane.f32.xlu0 %v151
  %v165 = vpop.xlane.xlu0 %164
  %166 = vadd.xlane.f32.xlu0 %v156
  %v167 = vpop.xlane.xlu0 %166
  %168 = vadd.xlane.f32.xlu0 %v159
  %v169 = vpop.xlane.xlu0 %168
  %v170 = vrcp.pop 128.0
  %v171 = vmul.f32 %v163, %v170
  %v172 = vmul.f32 %v165, %v170
  %v173 = vmul.f32 %v167, %v170
  %v174 = vmul.f32 %v169, %v170
  %v175 = vsub.f32 %v148, %v171
  %v176 = vsub.f32 %v151, %v172
  %v177 = vsub.f32 %v156, %v173
  %v178 = vsub.f32 %v159, %v174
  %v179 = vmul.f32 %v175, %v175
  %v180 = vmul.f32 %v176, %v176
  %v181 = vmul.f32 %v177, %v177
  %v182 = vmul.f32 %v178, %v178
  %183 = vadd.xlane.f32.xlu0 %v179
  %v184 = vpop.xlane.xlu0 %183
  %185 = vadd.xlane.f32.xlu0 %v180
  %v186 = vpop.xlane.xlu0 %185
  %187 = vadd.xlane.f32.xlu0 %v181
  %v188 = vpop.xlane.xlu0 %187
  %189 = vadd.xlane.f32.xlu0 %v182
  %v190 = vpop.xlane.xlu0 %189
  %v191 = vmul.f32 %v184, %v170
  %v192 = vmul.f32 %v186, %v170
  %v193 = vmul.f32 %v188, %v170
  %v194 = vmul.f32 %v190, %v170
  %v195 = vadd.f32 %v191, 1e-05
  %v196 = vadd.f32 %v192, 1e-05
  %v197 = vadd.f32 %v193, 1e-05
  %v198 = vadd.f32 %v194, 1e-05
  %v199 = vrsqrt.pop %v195
  %v200 = vrsqrt.pop %v196
  %v201 = vrsqrt.pop %v197
  %v202 = vrsqrt.pop %v198
  %v203 = vmul.f32 %v175, %v199
  %v204 = vmul.f32 %v176, %v200
  %v205 = vmul.f32 %v177, %v201
  %v206 = vmul.f32 %v178, %v202
  %v207 = vmax.f32 %v203, 0.0
  %v208 = vmax.f32 %v204, 0.0
  %v209 = vmax.f32 %v205, 0.0
  %v210 = vmax.f32 %v206, 0.0
  %211 = vst [vmem:[%s2] sm:$0xff] %v207
  %212 = vst [vmem:[%s2 + $0x8] sm:$0xff] %v208
  %213 = vst [vmem:[%s2 + $0x10] sm:$0xff] %v209
  %214 = vst [vmem:[%s2 + $0x18] sm:$0xff] %v210
  // Predicated region
  $region10: #{resnet_generator_forward.18} parent=0 // pred_check
    _
  $region11: #{resnet_generator_forward.18} parent=0 // pred_check_branch
    %216 = sbr.rel (0) target = $region13
  $region12: #{resnet_generator_forward.18} parent=0 // pred_region
    _
  $region13: #{resnet_generator_forward.18} parent=0 // pred_fallthru
    _
  // Predicated region
  $region14: #{resnet_generator_forward.18} parent=0 // pred_check
    _
  $region15: #{resnet_generator_forward.18} parent=0 // pred_check_branch
    %218 = sbr.rel (0) target = $region17
  $region16: #{resnet_generator_forward.18} parent=0 // pred_region
    _
  $region17: #{resnet_generator_forward.18} parent=0 // pred_fallthru
    _

// kernel: resnet_generator_forward.19
$region0: #{resnet_generator_forward.19}
  #allocation0 [shape = 'u32[]', space=smem, size = 0x4, offset = 0x4, fixed_abs, tag = 'smem constant byte address 0x4 - core index']
  #allocation1 [shape = 'u32[144,128]{1,0:T(1,128)}', space=vmem, size = 0x12000, scoped, tag = 'internal scratch']
  %s0 = inlined_call_operand.vmem [shape: f32[9,32,32], index: 0, kind: input, shape index: {}]
  %s1 = inlined_call_operand.vmem [shape: f32[32,32], index: 1, kind: output, shape index: {}]
  %s2 = sld [smem:[#allocation0]]
  $region14: #{resnet_generator_forward.19} parent=0
    _
  %s4 = ssub.s32 1, %s2
  %s5 = scalar_select 0, %s4, %s2
  // Predicated region
  $region2: #{resnet_generator_forward.19} parent=0 // pred_check
    _
  $region3: #{resnet_generator_forward.19} parent=0 // pred_check_branch
    %7 = sbr.rel (0) target = $region5
  $region4: #{resnet_generator_forward.19} parent=0 // pred_region
    _
  $region5: #{resnet_generator_forward.19} parent=0 // pred_fallthru
    _
  %v8 = vld [vmem:[%s0] sm:$0xff]
  %v9 = vld [vmem:[%s0 + $0x8] sm:$0xff]
  %v10 = vld [vmem:[%s0 + $0x10] sm:$0xff]
  %v11 = vld [vmem:[%s0 + $0x18] sm:$0xff]
  %v12 = vmul.f32 %v8, 0.0625
  %v13 = vmul.f32 %v9, 0.0625
  %v14 = vmul.f32 %v10, 0.0625
  %v15 = vmul.f32 %v11, 0.0625
  %s16 = scalar_lea.vmem %s0, 32
  %v17 = vld [vmem:[%s16] sm:$0xff]
  %v18 = vld [vmem:[%s16 + $0x8] sm:$0xff]
  %v19 = vld [vmem:[%s16 + $0x10] sm:$0xff]
  %v20 = vld [vmem:[%s16 + $0x18] sm:$0xff]
  %v21 = vmul.f32 %v17, 0.125
  %v22 = vmul.f32 %v18, 0.125
  %v23 = vmul.f32 %v19, 0.125
  %v24 = vmul.f32 %v20, 0.125
  %v25 = vadd.f32 %v12, %v21
  %v26 = vadd.f32 %v13, %v22
  %v27 = vadd.f32 %v14, %v23
  %v28 = vadd.f32 %v15, %v24
  %s29 = scalar_lea.vmem %s0, 64
  %v30 = vld [vmem:[%s29] sm:$0xff]
  %v31 = vld [vmem:[%s29 + $0x8] sm:$0xff]
  %v32 = vld [vmem:[%s29 + $0x10] sm:$0xff]
  %v33 = vld [vmem:[%s29 + $0x18] sm:$0xff]
  %v34 = vmul.f32 %v30, 0.0625
  %v35 = vmul.f32 %v31, 0.0625
  %v36 = vmul.f32 %v32, 0.0625
  %v37 = vmul.f32 %v33, 0.0625
  %v38 = vadd.f32 %v25, %v34
  %v39 = vadd.f32 %v26, %v35
  %v40 = vadd.f32 %v27, %v36
  %v41 = vadd.f32 %v28, %v37
  %s42 = scalar_lea.vmem %s0, 96
  %v43 = vld [vmem:[%s42] sm:$0xff]
  %v44 = vld [vmem:[%s42 + $0x8] sm:$0xff]
  %v45 = vld [vmem:[%s42 + $0x10] sm:$0xff]
  %v46 = vld [vmem:[%s42 + $0x18] sm:$0xff]
  %v47 = vmul.f32 %v43, 0.125
  %v48 = vmul.f32 %v44, 0.125
  %v49 = vmul.f32 %v45, 0.125
  %v50 = vmul.f32 %v46, 0.125
  %v51 = vadd.f32 %v38, %v47
  %v52 = vadd.f32 %v39, %v48
  %v53 = vadd.f32 %v40, %v49
  %v54 = vadd.f32 %v41, %v50
  %s55 = scalar_lea.vmem %s0, 128
  %v56 = vld [vmem:[%s55] sm:$0xff]
  %v57 = vld [vmem:[%s55 + $0x8] sm:$0xff]
  %v58 = vld [vmem:[%s55 + $0x10] sm:$0xff]
  %v59 = vld [vmem:[%s55 + $0x18] sm:$0xff]
  %v60 = vmul.f32 %v56, 0.25
  %v61 = vmul.f32 %v57, 0.25
  %v62 = vmul.f32 %v58, 0.25
  %v63 = vmul.f32 %v59, 0.25
  %v64 = vadd.f32 %v51, %v60
  %v65 = vadd.f32 %v52, %v61
  %v66 = vadd.f32 %v53, %v62
  %v67 = vadd.f32 %v54, %v63
  %s68 = scalar_lea.vmem %s0, 160
  %v69 = vld [vmem:[%s68] sm:$0xff]
  %v70 = vld [vmem:[%s68 + $0x8] sm:$0xff]
  %v71 = vld [vmem:[%s68 + $0x10] sm:$0xff]
  %v72 = vld [vmem:[%s68 + $0x18] sm:$0xff]
  %v73 = vmul.f32 %v69, 0.125
  %v74 = vmul.f32 %v70, 0.125
  %v75 = vmul.f32 %v71, 0.125
  %v76 = vmul.f32 %v72, 0.125
  %v77 = vadd.f32 %v64, %v73
  %v78 = vadd.f32 %v65, %v74
  %v79 = vadd.f32 %v66, %v75
  %v80 = vadd.f32 %v67, %v76
  %s81 = scalar_lea.vmem %s0, 192
  %v82 = vld [vmem:[%s81] sm:$0xff]
  %v83 = vld [vmem:[%s81 + $0x8] sm:$0xff]
  %v84 = vld [vmem:[%s81 + $0x10] sm:$0xff]
  %v85 = vld [vmem:[%s81 + $0x18] sm:$0xff]
  %v86 = vmul.f32 %v82, 0.0625
  %v87 = vmul.f32 %v83, 0.0625
  %v88 = vmul.f32 %v84, 0.0625
  %v89 = vmul.f32 %v85, 0.0625
  %v90 = vadd.f32 %v77, %v86
  %v91 = vadd.f32 %v78, %v87
  %v92 = vadd.f32 %v79, %v88
  %v93 = vadd.f32 %v80, %v89
  %s94 = scalar_lea.vmem %s0, 224
  %v95 = vld [vmem:[%s94] sm:$0xff]
  %v96 = vld [vmem:[%s94 + $0x8] sm:$0xff]
  %v97 = vld [vmem:[%s94 + $0x10] sm:$0xff]
  %v98 = vld [vmem:[%s94 + $0x18] sm:$0xff]
  %v99 = vmul.f32 %v95, 0.125
  %v100 = vmul.f32 %v96, 0.125
  %v101 = vmul.f32 %v97, 0.125
  %v102 = vmul.f32 %v98, 0.125
  %v103 = vadd.f32 %v90, %v99
  %v104 = vadd.f32 %v91, %v100
  %v105 = vadd.f32 %v92, %v101
  %v106 = vadd.f32 %v93, %v102
  %s107 = scalar_lea.vmem %s0, 256
  %v108 = vld [vmem:[%s107] sm:$0xff]
  %v109 = vld [vmem:[%s107 + $0x8] sm:$0xff]
  %v110 = vld [vmem:[%s107 + $0x10] sm:$0xff]
  %v111 = vld [vmem:[%s107 + $0x18] sm:$0xff]
  %v112 = vmul.f32 %v108, 0.0625
  %v113 = vmul.f32 %v109, 0.0625
  %v114 = vmul.f32 %v110, 0.0625
  %v115 = vmul.f32 %v111, 0.0625
  %v116 = vadd.f32 %v103, %v112
  %v117 = vadd.f32 %v104, %v113
  %v118 = vadd.f32 %v105, %v114
  %v119 = vadd.f32 %v106, %v115
  %vm120 = vcmask 261120
  %121 = vst.msk [vmem:[%s1] sm:$0xff] %vm120, %v116
  %122 = vst.msk [vmem:[%s1 + $0x8] sm:$0xff] %vm120, %v117
  %123 = vst.msk [vmem:[%s1 + $0x10] sm:$0xff] %vm120, %v118
  %124 = vst.msk [vmem:[%s1 + $0x18] sm:$0xff] %vm120, %v119
  // Predicated region
  $region6: #{resnet_generator_forward.19} parent=0 // pred_check
    _
  $region7: #{resnet_generator_forward.19} parent=0 // pred_check_branch
    %126 = sbr.rel (0) target = $region9
  $region8: #{resnet_generator_forward.19} parent=0 // pred_region
    _
  $region9: #{resnet_generator_forward.19} parent=0 // pred_fallthru
    _
  // Predicated region
  $region10: #{resnet_generator_forward.19} parent=0 // pred_check
    _
  $region11: #{resnet_generator_forward.19} parent=0 // pred_check_branch
    %128 = sbr.rel (0) target = $region13
  $region12: #{resnet_generator_forward.19} parent=0 // pred_region
    _
  $region13: #{resnet_generator_forward.19} parent=0 // pred_fallthru
    _

// kernel: resnet_generator_forward.20
$region0: #{resnet_generator_forward.20}
  #allocation0 [shape = 'u32[]', space=smem, size = 0x4, offset = 0x4, fixed_abs, tag = 'smem constant byte address 0x4 - core index']
  #allocation1 [shape = 'u32[144,128]{1,0:T(1,128)}', space=vmem, size = 0x12000, scoped, tag = 'internal scratch']
  %s0 = inlined_call_operand.vmem [shape: bf16[32,288], index: 0, kind: input, shape index: {}]
  %s1 = inlined_call_operand.vmem [shape: bf16[288,32], index: 1, kind: input, shape index: {}]
  %s2 = inlined_call_operand.vmem [shape: f32[32,32], index: 2, kind: input, shape index: {}]
  %s3 = inlined_call_operand.vmem [shape: f32[32,32], index: 3, kind: output, shape index: {}]
  %s4 = sld [smem:[#allocation0]]
  $region22: #{resnet_generator_forward.20} parent=0
    _
  %s6 = ssub.s32 1, %s4
  %s7 = scalar_select 0, %s6, %s4
  // Predicated region
  $region2: #{resnet_generator_forward.20} parent=0 // pred_check
    _
  $region3: #{resnet_generator_forward.20} parent=0 // pred_check_branch
    %9 = sbr.rel (0) target = $region5
  $region4: #{resnet_generator_forward.20} parent=0 // pred_region
    _
  $region5: #{resnet_generator_forward.20} parent=0 // pred_fallthru
    _
  // Predicated region
  $region6: #{resnet_generator_forward.20} parent=0 // pred_check
    _
  $region7: #{resnet_generator_forward.20} parent=0 // pred_check_branch
    %11 = sbr.rel (0) target = $region9
  $region8: #{resnet_generator_forward.20} parent=0 // pred_region
    _
  $region9: #{resnet_generator_forward.20} parent=0 // pred_fallthru
    _
  // Predicated region
  $region10: #{resnet_generator_forward.20} parent=0 // pred_check
    _
  $region11: #{resnet_generator_forward.20} parent=0 // pred_check_branch
    %13 = sbr.rel (0) target = $region13
  $region12: #{resnet_generator_forward.20} parent=0 // pred_region
    _
  $region13: #{resnet_generator_forward.20} parent=0 // pred_fallthru
    _
  %v15 = vld [vmem:[%s0] sm:$0xff]
  %v16 = vld [vmem:[%s0 + $0x8] sm:$0xf]
  %v17 = vld [vmem:[%s0 + $0xc] sm:$0xff]
  %v18 = vld [vmem:[%s0 + $0x14] sm:$0xf]
  %v19 = vld [vmem:[%s0 + $0x18] sm:$0xff]
  %v20 = vld [vmem:[%s0 + $0x20] sm:$0xf]
  %v21 = vld [vmem:[%s0 + $0x24] sm:$0xff]
  %v22 = vld [vmem:[%s0 + $0x2c] sm:$0xf]
  %v23 = vld [vmem:[%s1] sm:$0xf]
  %v24 = vld [vmem:[%s1 + $0x4] sm:$0xf]
  %v25 = vld [vmem:[%s1 + $0x8] sm:$0xf]
  %v26 = vld [vmem:[%s1 + $0xc] sm:$0xf]
  %v27 = vld [vmem:[%s1 + $0x10] sm:$0xf]
  %v28 = vld [vmem:[%s1 + $0x14] sm:$0xf]
  %v29 = vld [vmem:[%s1 + $0x18] sm:$0xf]
  %v30 = vld [vmem:[%s1 + $0x1c] sm:$0xf]
  %v31 = vld [vmem:[%s1 + $0x20] sm:$0xf]
  %v32 = vld [vmem:[%s1 + $0x24] sm:$0xf]
  %v33 = vld [vmem:[%s1 + $0x28] sm:$0xf]
  %v34 = vld [vmem:[%s1 + $0x2c] sm:$0xf]
  %v35 = vld [vmem:[%s1 + $0x30] sm:$0xf]
  %v36 = vld [vmem:[%s1 + $0x34] sm:$0xf]
  %v37 = vld [vmem:[%s1 + $0x38] sm:$0xf]
  %v38 = vld [vmem:[%s1 + $0x3c] sm:$0xf]
  %v39 = vld [vmem:[%s1 + $0x40] sm:$0xf]
  %v40 = vld [vmem:[%s1 + $0x44] sm:$0xf]
  %v41 = vld [vmem:[%s1 + $0x48] sm:$0xf]
  %v42 = vld [vmem:[%s1 + $0x4c] sm:$0xf]
  %v43 = vld [vmem:[%s1 + $0x50] sm:$0xf]
  %v44 = vld [vmem:[%s1 + $0x54] sm:$0xf]
  %v45 = vld [vmem:[%s1 + $0x58] sm:$0xf]
  %v46 = vld [vmem:[%s1 + $0x5c] sm:$0xf]
  %v47 = vld [vmem:[%s1 + $0x60] sm:$0xf]
  %v48 = vld [vmem:[%s1 + $0x64] sm:$0xf]
  %v49 = vld [vmem:[%s1 + $0x68] sm:$0xf]
  %v50 = vld [vmem:[%s1 + $0x6c] sm:$0xf]
  %v51 = vld [vmem:[%s1 + $0x70] sm:$0xf]
  %v52 = vld [vmem:[%s1 + $0x74] sm:$0xf]
  %v53 = vld [vmem:[%s1 + $0x78] sm:$0xf]
  %v54 = vld [vmem:[%s1 + $0x7c] sm:$0xf]
  %v55 = vld [vmem:[%s1 + $0x80] sm:$0xf]
  %v56 = vld [vmem:[%s1 + $0x84] sm:$0xf]
  %v57 = vld [vmem:[%s1 + $0x88] sm:$0xf]
  %v58 = vld [vmem:[%s1 + $0x8c] sm:$0xf]
  %v67 = vunpack.c.l.b16 %v15
  %v68 = vunpack.c.h.b16 %v15
  %v69 = vunpack.c.l.b16 %v16
  %v70 = vunpack.c.l.b16 %v17
  %v71 = vunpack.c.h.b16 %v17
  %v72 = vunpack.c.l.b16 %v18
  %v73 = vunpack.c.l.b16 %v19
  %v74 = vunpack.c.h.b16 %v19
  %v75 = vunpack.c.l.b16 %v20
  %v76 = vunpack.c.l.b16 %v21
  %v77 = vunpack.c.h.b16 %v21
  %v78 = vunpack.c.l.b16 %v22
  %v79 = vpack.c.b16 %v70, %v67
  %v80 = vpack.c.b16 %v71, %v68
  %v81 = vpack.c.b16 %v72, %v69
  %v82 = vpack.c.b16 %v76, %v73
  %v83 = vpack.c.b16 %v77, %v74
  %v84 = vpack.c.b16 %v78, %v75
  %v125 = vunpack.c.l.b16 %v23
  %v126 = vunpack.c.l.b16 %v24
  %v127 = vunpack.c.l.b16 %v25
  %v128 = vunpack.c.l.b16 %v26
  %v129 = vunpack.c.l.b16 %v27
  %v130 = vunpack.c.l.b16 %v28
  %v131 = vunpack.c.l.b16 %v29
  %v132 = vunpack.c.l.b16 %v30
  %v133 = vunpack.c.l.b16 %v31
  %v134 = vunpack.c.l.b16 %v32
  %v135 = vunpack.c.l.b16 %v33
  %v136 = vunpack.c.l.b16 %v34
  %v137 = vunpack.c.l.b16 %v35
  %v138 = vunpack.c.l.b16 %v36
  %v139 = vunpack.c.l.b16 %v37
  %v140 = vunpack.c.l.b16 %v38
  %v141 = vunpack.c.l.b16 %v39
  %v142 = vunpack.c.l.b16 %v40
  %v143 = vunpack.c.l.b16 %v41
  %v144 = vunpack.c.l.b16 %v42
  %v145 = vunpack.c.l.b16 %v43
  %v146 = vunpack.c.l.b16 %v44
  %v147 = vunpack.c.l.b16 %v45
  %v148 = vunpack.c.l.b16 %v46
  %v149 = vunpack.c.l.b16 %v47
  %v150 = vunpack.c.l.b16 %v48
  %v151 = vunpack.c.l.b16 %v49
  %v152 = vunpack.c.l.b16 %v50
  %v153 = vunpack.c.l.b16 %v51
  %v154 = vunpack.c.l.b16 %v52
  %v155 = vunpack.c.l.b16 %v53
  %v156 = vunpack.c.l.b16 %v54
  %v157 = vunpack.c.l.b16 %v55
  %v158 = vunpack.c.l.b16 %v56
  %v159 = vunpack.c.l.b16 %v57
  %v160 = vunpack.c.l.b16 %v58
  %v161 = vpack.c.b16 %v126, %v125
  %v162 = vpack.c.b16 %v128, %v127
  %v163 = vpack.c.b16 %v130, %v129
  %v164 = vpack.c.b16 %v132, %v131
  %v165 = vpack.c.b16 %v134, %v133
  %v166 = vpack.c.b16 %v136, %v135
  %v167 = vpack.c.b16 %v138, %v137
  %v168 = vpack.c.b16 %v140, %v139
  %v169 = vpack.c.b16 %v142, %v141
  %v170 = vpack.c.b16 %v144, %v143
  %v171 = vpack.c.b16 %v146, %v145
  %v172 = vpack.c.b16 %v148, %v147
  %v173 = vpack.c.b16 %v150, %v149
  %v174 = vpack.c.b16 %v152, %v151
  %v175 = vpack.c.b16 %v154, %v153
  %v176 = vpack.c.b16 %v156, %v155
  %v177 = vpack.c.b16 %v158, %v157
  %v178 = vpack.c.b16 %v160, %v159
  %vm197 = vcmask 261120
  %v199 = vsel %vm197, %v81, 0
  %v202 = vsel %vm197, %v84, 0
  %204 = vmatprep.subr.bf16.mxu0 0
  %205 = vmatpush1.bf16.msra.mxu0 %v161
  %206 = vmatprep.subr.bf16.mxu0 0
  %207 = vmatpush1.bf16.msra.mxu0 %v162
  %208 = vmatprep.subr.bf16.mxu0 0
  %209 = vmatpush1.bf16.msra.mxu0 %v163
  %210 = vmatprep.subr.bf16.mxu0 0
  %211 = vmatpush1.bf16.msra.mxu0 %v164
  %212 = vmatprep.subr.bf16.mxu0 0
  %213 = vmatpush1.bf16.msra.mxu0 %v165
  %214 = vmatprep.subr.bf16.mxu0 0
  %215 = vmatpush1.bf16.msra.mxu0 %v166
  %216 = vmatprep.subr.bf16.mxu0 0
  %217 = vmatpush1.bf16.msra.mxu0 %v167
  %218 = vmatprep.subr.bf16.mxu0 0
  %219 = vmatpush1.bf16.msra.mxu0 %v168
  %220 = vmatprep.subr.bf16.mxu0 0
  %221 = vmatpush1.bf16.msra.mxu0 %v169
  %222 = vmatprep.subr.bf16.mxu0 0
  %223 = vmatpush1.bf16.msra.mxu0 %v170
  %224 = vmatprep.subr.bf16.mxu0 0
  %225 = vmatpush1.bf16.msra.mxu0 %v171
  %226 = vmatprep.subr.bf16.mxu0 0
  %227 = vmatpush1.bf16.msra.mxu0 %v172
  %228 = vmatprep.subr.bf16.mxu0 0
  %229 = vmatpush1.bf16.msra.mxu0 %v173
  %230 = vmatprep.subr.bf16.mxu0 0
  %231 = vmatpush1.bf16.msra.mxu0 %v174
  %232 = vmatprep.subr.bf16.mxu0 0
  %233 = vmatpush1.bf16.msra.mxu0 %v175
  %234 = vmatprep.subr.bf16.mxu0 0
  %235 = vmatpush1.bf16.msra.mxu0 %v176
  %236 = vmatprep.mubr.bf16.mxu0 %v80
  %237 = vmatmul.mubr.bf16.gmra.mrb[0].mxu0 %v79
  %v238 = vpop.f32.mrb[0].mxu0
  %v239 = vadd.f32 0.0, %v238
  %v240 = vpop.f32.mrb[0].mxu0
  %v241 = vpop.f32.mrb[0].mxu0
  %v242 = vadd.f32 0.0, %v241
  %v243 = vpop.f32.mrb[0].mxu0
  %244 = vmatprep.mubr.bf16.mxu0 %v83
  %245 = vmatmul.mubr.bf16.gmra.mrb[0].mxu0 %v82
  %v246 = vpop.f32.mrb[0].mxu0
  %v247 = vadd.f32 0.0, %v246
  %v248 = vpop.f32.mrb[0].mxu0
  %v249 = vpop.f32.mrb[0].mxu0
  %v250 = vadd.f32 0.0, %v249
  %v251 = vpop.f32.mrb[0].mxu0
  %252 = vdwg.mxu0
  %253 = vmatprep.subr.bf16.mxu0 0
  %254 = vmatpush1.bf16.msra.mxu0 %v177
  %255 = vmatprep.subr.bf16.mxu0 0
  %256 = vmatpush1.bf16.msra.mxu0 %v178
  %257 = vmatprep.subr.bf16.mxu0 0
  %258 = vmatpush1.bf16.msra.mxu0 0
  %259 = vmatprep.subr.bf16.mxu0 0
  %260 = vmatpush1.bf16.msra.mxu0 0
  %261 = vmatprep.subr.bf16.mxu0 0
  %262 = vmatpush1.bf16.msra.mxu0 0
  %263 = vmatprep.subr.bf16.mxu0 0
  %264 = vmatpush1.bf16.msra.mxu0 0
  %265 = vmatprep.subr.bf16.mxu0 0
  %266 = vmatpush1.bf16.msra.mxu0 0
  %267 = vmatprep.subr.bf16.mxu0 0
  %268 = vmatpush1.bf16.msra.mxu0 0
  %269 = vmatprep.subr.bf16.mxu0 0
  %270 = vmatpush1.bf16.msra.mxu0 0
  %271 = vmatprep.subr.bf16.mxu0 0
  %272 = vmatpush1.bf16.msra.mxu0 0
  %273 = vmatprep.subr.bf16.mxu0 0
  %274 = vmatpush1.bf16.msra.mxu0 0
  %275 = vmatprep.subr.bf16.mxu0 0
  %276 = vmatpush1.bf16.msra.mxu0 0
  %277 = vmatprep.subr.bf16.mxu0 0
  %278 = vmatpush1.bf16.msra.mxu0 0
  %279 = vmatprep.subr.bf16.mxu0 0
  %280 = vmatpush1.bf16.msra.mxu0 0
  %281 = vmatprep.subr.bf16.mxu0 0
  %282 = vmatpush1.bf16.msra.mxu0 0
  %283 = vmatprep.subr.bf16.mxu0 0
  %284 = vmatpush1.bf16.msra.mxu0 0
  %285 = vmatprep.mubr.bf16.mxu0 0
  %286 = vmatmul.mubr.bf16.gmra.mrb[0].mxu0 %v199
  %v287 = vpop.f32.mrb[0].mxu0
  %v288 = vadd.f32 %v239, %v287
  %v289 = vpop.f32.mrb[0].mxu0
  %v290 = vpop.f32.mrb[0].mxu0
  %v291 = vadd.f32 %v242, %v290
  %v292 = vpop.f32.mrb[0].mxu0
  %293 = vmatprep.mubr.bf16.mxu0 0
  %294 = vmatmul.mubr.bf16.gmra.mrb[0].mxu0 %v202
  %v295 = vpop.f32.mrb[0].mxu0
  %v296 = vadd.f32 %v247, %v295
  %v297 = vpop.f32.mrb[0].mxu0
  %v298 = vpop.f32.mrb[0].mxu0
  %v299 = vadd.f32 %v250, %v298
  %v300 = vpop.f32.mrb[0].mxu0
  %301 = vdwg.mxu0
  %v302 = vld [vmem:[%s2] sm:$0xff]
  %v303 = vld [vmem:[%s2 + $0x8] sm:$0xff]
  %v304 = vld [vmem:[%s2 + $0x10] sm:$0xff]
  %v305 = vld [vmem:[%s2 + $0x18] sm:$0xff]
  %v306 = vmax.f32 %v288, 0.0
  %v307 = vmax.f32 %v291, 0.0
  %v308 = vmax.f32 %v296, 0.0
  %v309 = vmax.f32 %v299, 0.0
  %v310 = vadd.f32 %v302, %v306
  %v311 = vadd.f32 %v303, %v307
  %v312 = vadd.f32 %v304, %v308
  %v313 = vadd.f32 %v305, %v309
  %314 = vst.msk [vmem:[%s3] sm:$0xff] %vm197, %v310
  %315 = vst.msk [vmem:[%s3 + $0x8] sm:$0xff] %vm197, %v311
  %316 = vst.msk [vmem:[%s3 + $0x10] sm:$0xff] %vm197, %v312
  %317 = vst.msk [vmem:[%s3 + $0x18] sm:$0xff] %vm197, %v313
  // Predicated region
  $region14: #{resnet_generator_forward.20} parent=0 // pred_check
    _
  $region15: #{resnet_generator_forward.20} parent=0 // pred_check_branch
    %319 = sbr.rel (0) target = $region17
  $region16: #{resnet_generator_forward.20} parent=0 // pred_region
    _
  $region17: #{resnet_generator_forward.20} parent=0 // pred_fallthru
    _
  // Predicated region
  $region18: #{resnet_generator_forward.20} parent=0 // pred_check
    _
  $region19: #{resnet_generator_forward.20} parent=0 // pred_check_branch
    %321 = sbr.rel (0) target = $region21
  $region20: #{resnet_generator_forward.20} parent=0 // pred_region
    _
  $region21: #{resnet_generator_forward.20} parent=0 // pred_fallthru
    _

// kernel: resnet_generator_forward.22
$region0: #{resnet_generator_forward.22}
  #allocation0 [shape = 'u32[]', space=smem, size = 0x4, offset = 0x4, fixed_abs, tag = 'smem constant byte address 0x4 - core index']
  #allocation1 [shape = 'u32[144,128]{1,0:T(1,128)}', space=vmem, size = 0x12000, scoped, tag = 'internal scratch']
  %s0 = inlined_call_operand.vmem [shape: f32[32,128], index: 0, kind: input, shape index: {}]
  %s1 = inlined_call_operand.vmem [shape: f32[32,128], index: 1, kind: input, shape index: {}]
  %s2 = inlined_call_operand.vmem [shape: f32[32,128], index: 2, kind: input, shape index: {}]
  %s3 = inlined_call_operand.vmem [shape: f32[32,128], index: 3, kind: input, shape index: {}]
  %s4 = inlined_call_operand.vmem [shape: f32[1,128], index: 4, kind: input, shape index: {}]
  %s5 = inlined_call_operand.vmem [shape: f32[1,128], index: 5, kind: input, shape index: {}]
  %s6 = inlined_call_operand.vmem [shape: f32[1,128], index: 6, kind: input, shape index: {}]
  %s7 = inlined_call_operand.vmem [shape: f32[1,128], index: 7, kind: input, shape index: {}]
  %s8 = inlined_call_operand.vmem [shape: f32[32,128], index: 8, kind: output, shape index: {}]
  %s9 = sld [smem:[#allocation0]]
  $region42: #{resnet_generator_forward.22} parent=0
    _
  %s11 = ssub.s32 1, %s9
  %s12 = scalar_select 0, %s11, %s9
  // Predicated region
  $region2: #{resnet_generator_forward.22} parent=0 // pred_check
    _
  $region3: #{resnet_generator_forward.22} parent=0 // pred_check_branch
    %14 = sbr.rel (0) target = $region5
  $region4: #{resnet_generator_forward.22} parent=0 // pred_region
    _
  $region5: #{resnet_generator_forward.22} parent=0 // pred_fallthru
    _
  // Predicated region
  $region6: #{resnet_generator_forward.22} parent=0 // pred_check
    _
  $region7: #{resnet_generator_forward.22} parent=0 // pred_check_branch
    %16 = sbr.rel (0) target = $region9
  $region8: #{resnet_generator_forward.22} parent=0 // pred_region
    _
  $region9: #{resnet_generator_forward.22} parent=0 // pred_fallthru
    _
  // Predicated region
  $region10: #{resnet_generator_forward.22} parent=0 // pred_check
    _
  $region11: #{resnet_generator_forward.22} parent=0 // pred_check_branch
    %18 = sbr.rel (0) target = $region13
  $region12: #{resnet_generator_forward.22} parent=0 // pred_region
    _
  $region13: #{resnet_generator_forward.22} parent=0 // pred_fallthru
    _
  // Predicated region
  $region14: #{resnet_generator_forward.22} parent=0 // pred_check
    _
  $region15: #{resnet_generator_forward.22} parent=0 // pred_check_branch
    %20 = sbr.rel (0) target = $region17
  $region16: #{resnet_generator_forward.22} parent=0 // pred_region
    _
  $region17: #{resnet_generator_forward.22} parent=0 // pred_fallthru
    _
  // Predicated region
  $region18: #{resnet_generator_forward.22} parent=0 // pred_check
    _
  $region19: #{resnet_generator_forward.22} parent=0 // pred_check_branch
    %22 = sbr.rel (0) target = $region21
  $region20: #{resnet_generator_forward.22} parent=0 // pred_region
    _
  $region21: #{resnet_generator_forward.22} parent=0 // pred_fallthru
    _
  // Predicated region
  $region22: #{resnet_generator_forward.22} parent=0 // pred_check
    _
  $region23: #{resnet_generator_forward.22} parent=0 // pred_check_branch
    %24 = sbr.rel (0) target = $region25
  $region24: #{resnet_generator_forward.22} parent=0 // pred_region
    _
  $region25: #{resnet_generator_forward.22} parent=0 // pred_fallthru
    _
  // Predicated region
  $region26: #{resnet_generator_forward.22} parent=0 // pred_check
    _
  $region27: #{resnet_generator_forward.22} parent=0 // pred_check_branch
    %26 = sbr.rel (0) target = $region29
  $region28: #{resnet_generator_forward.22} parent=0 // pred_region
    _
  $region29: #{resnet_generator_forward.22} parent=0 // pred_fallthru
    _
  // Predicated region
  $region30: #{resnet_generator_forward.22} parent=0 // pred_check
    _
  $region31: #{resnet_generator_forward.22} parent=0 // pred_check_branch
    %28 = sbr.rel (0) target = $region33
  $region32: #{resnet_generator_forward.22} parent=0 // pred_region
    _
  $region33: #{resnet_generator_forward.22} parent=0 // pred_fallthru
    _
  %v29 = vld [vmem:[%s0] sm:$0xff]
  %v30 = vld [vmem:[%s0 + $0x8] sm:$0xff]
  %v31 = vld [vmem:[%s0 + $0x10] sm:$0xff]
  %v32 = vld [vmem:[%s0 + $0x18] sm:$0xff]
  %v33 = vld [vmem:[%s4] sm:$0x1]
  %v35 = vlaneseq
  %v36 = vshrl.u32 %v35, 7
  %v37 = vsub.s32 0, %v36
  %v38 = vrot.slane %v33, %v37
  %v40 = vmul.f32 %v29, %v38
  %v41 = vmul.f32 %v30, %v38
  %v42 = vmul.f32 %v31, %v38
  %v43 = vmul.f32 %v32, %v38
  %v44 = vld [vmem:[%s1] sm:$0xff]
  %v45 = vld [vmem:[%s1 + $0x8] sm:$0xff]
  %v46 = vld [vmem:[%s1 + $0x10] sm:$0xff]
  %v47 = vld [vmem:[%s1 + $0x18] sm:$0xff]
  %v48 = vld [vmem:[%s5] sm:$0x1]
  %v50 = vlaneseq
  %v51 = vshrl.u32 %v50, 7
  %v52 = vsub.s32 0, %v51
  %v53 = vrot.slane %v48, %v52
  %v55 = vmul.f32 %v44, %v53
  %v56 = vmul.f32 %v45, %v53
  %v57 = vmul.f32 %v46, %v53
  %v58 = vmul.f32 %v47, %v53
  %v59 = vadd.f32 %v40, %v55
  %v60 = vadd.f32 %v41, %v56
  %v61 = vadd.f32 %v42, %v57
  %v62 = vadd.f32 %v43, %v58
  %v63 = vld [vmem:[%s2] sm:$0xff]
  %v64 = vld [vmem:[%s2 + $0x8] sm:$0xff]
  %v65 = vld [vmem:[%s2 + $0x10] sm:$0xff]
  %v66 = vld [vmem:[%s2 + $0x18] sm:$0xff]
  %v67 = vld [vmem:[%s6] sm:$0x1]
  %v69 = vlaneseq
  %v70 = vshrl.u32 %v69, 7
  %v71 = vsub.s32 0, %v70
  %v72 = vrot.slane %v67, %v71
  %v74 = vmul.f32 %v63, %v72
  %v75 = vmul.f32 %v64, %v72
  %v76 = vmul.f32 %v65, %v72
  %v77 = vmul.f32 %v66, %v72
  %v78 = vadd.f32 %v59, %v74
  %v79 = vadd.f32 %v60, %v75
  %v80 = vadd.f32 %v61, %v76
  %v81 = vadd.f32 %v62, %v77
  %v82 = vld [vmem:[%s3] sm:$0xff]
  %v83 = vld [vmem:[%s3 + $0x8] sm:$0xff]
  %v84 = vld [vmem:[%s3 + $0x10] sm:$0xff]
  %v85 = vld [vmem:[%s3 + $0x18] sm:$0xff]
  %v86 = vld [vmem:[%s7] sm:$0x1]
  %v88 = vlaneseq
  %v89 = vshrl.u32 %v88, 7
  %v90 = vsub.s32 0, %v89
  %v91 = vrot.slane %v86, %v90
  %v93 = vmul.f32 %v82, %v91
  %v94 = vmul.f32 %v83, %v91
  %v95 = vmul.f32 %v84, %v91
  %v96 = vmul.f32 %v85, %v91
  %v97 = vadd.f32 %v78, %v93
  %v98 = vadd.f32 %v79, %v94
  %v99 = vadd.f32 %v80, %v95
  %v100 = vadd.f32 %v81, %v96
  %101 = vst [vmem:[%s8] sm:$0xff] %v97
  %102 = vst [vmem:[%s8 + $0x8] sm:$0xff] %v98
  %103 = vst [vmem:[%s8 + $0x10] sm:$0xff] %v99
  %104 = vst [vmem:[%s8 + $0x18] sm:$0xff] %v100
  // Predicated region
  $region34: #{resnet_generator_forward.22} parent=0 // pred_check
    _
  $region35: #{resnet_generator_forward.22} parent=0 // pred_check_branch
    %106 = sbr.rel (0) target = $region37
  $region36: #{resnet_generator_forward.22} parent=0 // pred_region
    _
  $region37: #{resnet_generator_forward.22} parent=0 // pred_fallthru
    _
  // Predicated region
  $region38: #{resnet_generator_forward.22} parent=0 // pred_check
    _
  $region39: #{resnet_generator_forward.22} parent=0 // pred_check_branch
    %108 = sbr.rel (0) target = $region41
  $region40: #{resnet_generator_forward.22} parent=0 // pred_region
    _
  $region41: #{resnet_generator_forward.22} parent=0 // pred_fallthru
    _

// kernel: resnet_generator_forward.23
$region0: #{resnet_generator_forward.23}
  #allocation0 [shape = 'u32[]', space=smem, size = 0x4, offset = 0x4, fixed_abs, tag = 'smem constant byte address 0x4 - core index']
  #allocation1 [shape = 'u32[144,128]{1,0:T(1,128)}', space=vmem, size = 0x12000, scoped, tag = 'internal scratch']
  %s0 = inlined_call_operand.vmem [shape: bf16[16,288], index: 0, kind: input, shape index: {}]
  %s1 = inlined_call_operand.vmem [shape: bf16[288,128], index: 1, kind: input, shape index: {}]
  %s2 = inlined_call_operand.vmem [shape: f32[16,128], index: 2, kind: output, shape index: {}]
  %s3 = sld [smem:[#allocation0]]
  $region18: #{resnet_generator_forward.23} parent=0
    _
  %s5 = ssub.s32 1, %s3
  %s6 = scalar_select 0, %s5, %s3
  // Predicated region
  $region2: #{resnet_generator_forward.23} parent=0 // pred_check
    _
  $region3: #{resnet_generator_forward.23} parent=0 // pred_check_branch
    %8 = sbr.rel (0) target = $region5
  $region4: #{resnet_generator_forward.23} parent=0 // pred_region
    _
  $region5: #{resnet_generator_forward.23} parent=0 // pred_fallthru
    _
  // Predicated region
  $region6: #{resnet_generator_forward.23} parent=0 // pred_check
    _
  $region7: #{resnet_generator_forward.23} parent=0 // pred_check_branch
    %10 = sbr.rel (0) target = $region9
  $region8: #{resnet_generator_forward.23} parent=0 // pred_region
    _
  $region9: #{resnet_generator_forward.23} parent=0 // pred_fallthru
    _
  %v12 = vld [vmem:[%s0] sm:$0xff]
  %v13 = vld [vmem:[%s0 + $0x8] sm:$0xf]
  %v14 = vld [vmem:[%s0 + $0xc] sm:$0xff]
  %v15 = vld [vmem:[%s0 + $0x14] sm:$0xf]
  %v16 = vld [vmem:[%s1] sm:$0xf]
  %v17 = vld [vmem:[%s1 + $0x4] sm:$0xf]
  %v18 = vld [vmem:[%s1 + $0x8] sm:$0xf]
  %v19 = vld [vmem:[%s1 + $0xc] sm:$0xf]
  %v20 = vld [vmem:[%s1 + $0x10] sm:$0xf]
  %v21 = vld [vmem:[%s1 + $0x14] sm:$0xf]
  %v22 = vld [vmem:[%s1 + $0x18] sm:$0xf]
  %v23 = vld [vmem:[%s1 + $0x1c] sm:$0xf]
  %v24 = vld [vmem:[%s1 + $0x20] sm:$0xf]
  %v25 = vld [vmem:[%s1 + $0x24] sm:$0xf]
  %v26 = vld [vmem:[%s1 + $0x28] sm:$0xf]
  %v27 = vld [vmem:[%s1 + $0x2c] sm:$0xf]
  %v28 = vld [vmem:[%s1 + $0x30] sm:$0xf]
  %v29 = vld [vmem:[%s1 + $0x34] sm:$0xf]
  %v30 = vld [vmem:[%s1 + $0x38] sm:$0xf]
  %v31 = vld [vmem:[%s1 + $0x3c] sm:$0xf]
  %v32 = vld [vmem:[%s1 + $0x40] sm:$0xf]
  %v33 = vld [vmem:[%s1 + $0x44] sm:$0xf]
  %v34 = vld [vmem:[%s1 + $0x48] sm:$0xf]
  %v35 = vld [vmem:[%s1 + $0x4c] sm:$0xf]
  %v36 = vld [vmem:[%s1 + $0x50] sm:$0xf]
  %v37 = vld [vmem:[%s1 + $0x54] sm:$0xf]
  %v38 = vld [vmem:[%s1 + $0x58] sm:$0xf]
  %v39 = vld [vmem:[%s1 + $0x5c] sm:$0xf]
  %v40 = vld [vmem:[%s1 + $0x60] sm:$0xf]
  %v41 = vld [vmem:[%s1 + $0x64] sm:$0xf]
  %v42 = vld [vmem:[%s1 + $0x68] sm:$0xf]
  %v43 = vld [vmem:[%s1 + $0x6c] sm:$0xf]
  %v44 = vld [vmem:[%s1 + $0x70] sm:$0xf]
  %v45 = vld [vmem:[%s1 + $0x74] sm:$0xf]
  %v46 = vld [vmem:[%s1 + $0x78] sm:$0xf]
  %v47 = vld [vmem:[%s1 + $0x7c] sm:$0xf]
  %v48 = vld [vmem:[%s1 + $0x80] sm:$0xf]
  %v49 = vld [vmem:[%s1 + $0x84] sm:$0xf]
  %v50 = vld [vmem:[%s1 + $0x88] sm:$0xf]
  %v51 = vld [vmem:[%s1 + $0x8c] sm:$0xf]
  %v56 = vunpack.c.l.b16 %v12
  %v57 = vunpack.c.h.b16 %v12
  %v58 = vunpack.c.l.b16 %v13
  %v59 = vunpack.c.l.b16 %v14
  %v60 = vunpack.c.h.b16 %v14
  %v61 = vunpack.c.l.b16 %v15
  %v62 = vpack.c.b16 %v59, %v56
  %v63 = vpack.c.b16 %v60, %v57
  %v64 = vpack.c.b16 %v61, %v58
  %v103 = vunpack.c.l.b16 %v16
  %v104 = vunpack.c.l.b16 %v17
  %v105 = vunpack.c.l.b16 %v18
  %v106 = vunpack.c.l.b16 %v19
  %v107 = vunpack.c.l.b16 %v20
  %v108 = vunpack.c.l.b16 %v21
  %v109 = vunpack.c.l.b16 %v22
  %v110 = vunpack.c.l.b16 %v23
  %v111 = vunpack.c.l.b16 %v24
  %v112 = vunpack.c.l.b16 %v25
  %v113 = vunpack.c.l.b16 %v26
  %v114 = vunpack.c.l.b16 %v27
  %v115 = vunpack.c.l.b16 %v28
  %v116 = vunpack.c.l.b16 %v29
  %v117 = vunpack.c.l.b16 %v30
  %v118 = vunpack.c.l.b16 %v31
  %v119 = vunpack.c.l.b16 %v32
  %v120 = vunpack.c.l.b16 %v33
  %v121 = vunpack.c.l.b16 %v34
  %v122 = vunpack.c.l.b16 %v35
  %v123 = vunpack.c.l.b16 %v36
  %v124 = vunpack.c.l.b16 %v37
  %v125 = vunpack.c.l.b16 %v38
  %v126 = vunpack.c.l.b16 %v39
  %v127 = vunpack.c.l.b16 %v40
  %v128 = vunpack.c.l.b16 %v41
  %v129 = vunpack.c.l.b16 %v42
  %v130 = vunpack.c.l.b16 %v43
  %v131 = vunpack.c.l.b16 %v44
  %v132 = vunpack.c.l.b16 %v45
  %v133 = vunpack.c.l.b16 %v46
  %v134 = vunpack.c.l.b16 %v47
  %v135 = vunpack.c.l.b16 %v48
  %v136 = vunpack.c.l.b16 %v49
  %v137 = vunpack.c.l.b16 %v50
  %v138 = vunpack.c.l.b16 %v51
  %v139 = vpack.c.b16 %v104, %v103
  %v140 = vpack.c.b16 %v106, %v105
  %v141 = vpack.c.b16 %v108, %v107
  %v142 = vpack.c.b16 %v110, %v109
  %v143 = vpack.c.b16 %v112, %v111
  %v144 = vpack.c.b16 %v114, %v113
  %v145 = vpack.c.b16 %v116, %v115
  %v146 = vpack.c.b16 %v118, %v117
  %v147 = vpack.c.b16 %v120, %v119
  %v148 = vpack.c.b16 %v122, %v121
  %v149 = vpack.c.b16 %v124, %v123
  %v150 = vpack.c.b16 %v126, %v125
  %v151 = vpack.c.b16 %v128, %v127
  %v152 = vpack.c.b16 %v130, %v129
  %v153 = vpack.c.b16 %v132, %v131
  %v154 = vpack.c.b16 %v134, %v133
  %v155 = vpack.c.b16 %v136, %v135
  %v156 = vpack.c.b16 %v138, %v137
  %vm175 = vcmask 261120
  %v177 = vsel %vm175, %v64, 0
  %179 = vmatprep.subr.bf16.mxu0 0
  %180 = vmatpush1.bf16.msra.mxu0 %v139
  %181 = vmatprep.subr.bf16.mxu0 0
  %182 = vmatpush1.bf16.msra.mxu0 %v140
  %183 = vmatprep.subr.bf16.mxu0 0
  %184 = vmatpush1.bf16.msra.mxu0 %v141
  %185 = vmatprep.subr.bf16.mxu0 0
  %186 = vmatpush1.bf16.msra.mxu0 %v142
  %187 = vmatprep.subr.bf16.mxu0 0
  %188 = vmatpush1.bf16.msra.mxu0 %v143
  %189 = vmatprep.subr.bf16.mxu0 0
  %190 = vmatpush1.bf16.msra.mxu0 %v144
  %191 = vmatprep.subr.bf16.mxu0 0
  %192 = vmatpush1.bf16.msra.mxu0 %v145
  %193 = vmatprep.subr.bf16.mxu0 0
  %194 = vmatpush1.bf16.msra.mxu0 %v146
  %195 = vmatprep.subr.bf16.mxu0 0
  %196 = vmatpush1.bf16.msra.mxu0 %v147
  %197 = vmatprep.subr.bf16.mxu0 0
  %198 = vmatpush1.bf16.msra.mxu0 %v148
  %199 = vmatprep.subr.bf16.mxu0 0
  %200 = vmatpush1.bf16.msra.mxu0 %v149
  %201 = vmatprep.subr.bf16.mxu0 0
  %202 = vmatpush1.bf16.msra.mxu0 %v150
  %203 = vmatprep.subr.bf16.mxu0 0
  %204 = vmatpush1.bf16.msra.mxu0 %v151
  %205 = vmatprep.subr.bf16.mxu0 0
  %206 = vmatpush1.bf16.msra.mxu0 %v152
  %207 = vmatprep.subr.bf16.mxu0 0
  %208 = vmatpush1.bf16.msra.mxu0 %v153
  %209 = vmatprep.subr.bf16.mxu0 0
  %210 = vmatpush1.bf16.msra.mxu0 %v154
  %211 = vmatprep.mubr.bf16.mxu0 %v63
  %212 = vmatmul.mubr.bf16.gmra.mrb[0].mxu0 %v62
  %v213 = vpop.f32.mrb[0].mxu0
  %v214 = vadd.f32 0.0, %v213
  %v215 = vpop.f32.mrb[0].mxu0
  %v216 = vpop.f32.mrb[0].mxu0
  %v217 = vadd.f32 0.0, %v216
  %v218 = vpop.f32.mrb[0].mxu0
  %219 = vdwg.mxu0
  %220 = vmatprep.subr.bf16.mxu0 0
  %221 = vmatpush1.bf16.msra.mxu0 %v155
  %222 = vmatprep.subr.bf16.mxu0 0
  %223 = vmatpush1.bf16.msra.mxu0 %v156
  %224 = vmatprep.subr.bf16.mxu0 0
  %225 = vmatpush1.bf16.msra.mxu0 0
  %226 = vmatprep.subr.bf16.mxu0 0
  %227 = vmatpush1.bf16.msra.mxu0 0
  %228 = vmatprep.subr.bf16.mxu0 0
  %229 = vmatpush1.bf16.msra.mxu0 0
  %230 = vmatprep.subr.bf16.mxu0 0
  %231 = vmatpush1.bf16.msra.mxu0 0
  %232 = vmatprep.subr.bf16.mxu0 0
  %233 = vmatpush1.bf16.msra.mxu0 0
  %234 = vmatprep.subr.bf16.mxu0 0
  %235 = vmatpush1.bf16.msra.mxu0 0
  %236 = vmatprep.subr.bf16.mxu0 0
  %237 = vmatpush1.bf16.msra.mxu0 0
  %238 = vmatprep.subr.bf16.mxu0 0
  %239 = vmatpush1.bf16.msra.mxu0 0
  %240 = vmatprep.subr.bf16.mxu0 0
  %241 = vmatpush1.bf16.msra.mxu0 0
  %242 = vmatprep.subr.bf16.mxu0 0
  %243 = vmatpush1.bf16.msra.mxu0 0
  %244 = vmatprep.subr.bf16.mxu0 0
  %245 = vmatpush1.bf16.msra.mxu0 0
  %246 = vmatprep.subr.bf16.mxu0 0
  %247 = vmatpush1.bf16.msra.mxu0 0
  %248 = vmatprep.subr.bf16.mxu0 0
  %249 = vmatpush1.bf16.msra.mxu0 0
  %250 = vmatprep.subr.bf16.mxu0 0
  %251 = vmatpush1.bf16.msra.mxu0 0
  %252 = vmatprep.mubr.bf16.mxu0 0
  %253 = vmatmul.mubr.bf16.gmra.mrb[0].mxu0 %v177
  %v254 = vpop.f32.mrb[0].mxu0
  %v255 = vadd.f32 %v214, %v254
  %v256 = vpop.f32.mrb[0].mxu0
  %v257 = vpop.f32.mrb[0].mxu0
  %v258 = vadd.f32 %v217, %v257
  %v259 = vpop.f32.mrb[0].mxu0
  %260 = vdwg.mxu0
  %261 = vadd.xlane.f32.xlu0 %v255
  %v262 = vpop.xlane.xlu0 %261
  %263 = vadd.xlane.f32.xlu0 %v258
  %v264 = vpop.xlane.xlu0 %263
  %v265 = vrcp.pop 128.0
  %v266 = vmul.f32 %v262, %v265
  %v267 = vmul.f32 %v264, %v265
  %v268 = vsub.f32 %v255, %v266
  %v269 = vsub.f32 %v258, %v267
  %v270 = vmul.f32 %v268, %v268
  %v271 = vmul.f32 %v269, %v269
  %272 = vadd.xlane.f32.xlu0 %v270
  %v273 = vpop.xlane.xlu0 %272
  %274 = vadd.xlane.f32.xlu0 %v271
  %v275 = vpop.xlane.xlu0 %274
  %v276 = vmul.f32 %v273, %v265
  %v277 = vmul.f32 %v275, %v265
  %v278 = vadd.f32 %v276, 1e-05
  %v279 = vadd.f32 %v277, 1e-05
  %v280 = vrsqrt.pop %v278
  %v281 = vrsqrt.pop %v279
  %v282 = vmul.f32 %v268, %v280
  %v283 = vmul.f32 %v269, %v281
  %v284 = vmax.f32 %v282, 0.0
  %v285 = vmax.f32 %v283, 0.0
  %v286 = vadd.f32 %v282, %v283
  %287 = vadd.xlane.f32.xlu0 %v286
  %v288 = vpop.xlane.xlu0 %287
  %v289 = vrot.slane %v288, 4
  %v290 = vadd.f32 %v288, %v289
  %v291 = vrot.slane %v290, 2
  %v292 = vadd.f32 %v290, %v291
  %v293 = vrot.slane %v292, 1
  %v294 = vadd.f32 %v292, %v293
  %s295 = vtos %v294
  %v296 = vrcp.pop 2048.0
  %s297 = vtos %v296
  %s298 = smul.f32 %s295, %s297
  %v299 = vstv %s298
  %v300 = vsub.f32 %v284, %v299
  %v301 = vsub.f32 %v285, %v299
  %302 = vst [vmem:[%s2] sm:$0xff] %v300
  %303 = vst [vmem:[%s2 + $0x8] sm:$0xff] %v301
  // Predicated region
  $region10: #{resnet_generator_forward.23} parent=0 // pred_check
    _
  $region11: #{resnet_generator_forward.23} parent=0 // pred_check_branch
    %305 = sbr.rel (0) target = $region13
  $region12: #{resnet_generator_forward.23} parent=0 // pred_region
    _
  $region13: #{resnet_generator_forward.23} parent=0 // pred_fallthru
    _
  // Predicated region
  $region14: #{resnet_generator_forward.23} parent=0 // pred_check
    _
  $region15: #{resnet_generator_forward.23} parent=0 // pred_check_branch
    %307 = sbr.rel (0) target = $region17
  $region16: #{resnet_generator_forward.23} parent=0 // pred_region
    _
  $region17: #{resnet_generator_forward.23} parent=0 // pred_fallthru
    _

// kernel: resnet_generator_forward.24
$region0: #{resnet_generator_forward.24}
  #allocation0 [shape = 'u32[]', space=smem, size = 0x4, offset = 0x4, fixed_abs, tag = 'smem constant byte address 0x4 - core index']
  #allocation1 [shape = 'u32[144,128]{1,0:T(1,128)}', space=vmem, size = 0x12000, scoped, tag = 'internal scratch']
  %s0 = inlined_call_operand.vmem [shape: f32[16,512], index: 0, kind: input, shape index: {}]
  %s1 = inlined_call_operand.vmem [shape: f32[16,512], index: 1, kind: input, shape index: {}]
  %s2 = inlined_call_operand.vmem [shape: f32[16,512], index: 2, kind: input, shape index: {}]
  %s3 = inlined_call_operand.vmem [shape: f32[16,512], index: 3, kind: input, shape index: {}]
  %s4 = inlined_call_operand.vmem [shape: f32[1,512], index: 4, kind: input, shape index: {}]
  %s5 = inlined_call_operand.vmem [shape: f32[1,512], index: 5, kind: input, shape index: {}]
  %s6 = inlined_call_operand.vmem [shape: f32[1,512], index: 6, kind: input, shape index: {}]
  %s7 = inlined_call_operand.vmem [shape: f32[1,512], index: 7, kind: input, shape index: {}]
  %s8 = inlined_call_operand.vmem [shape: f32[16,512], index: 8, kind: output, shape index: {}]
  %s9 = sld [smem:[#allocation0]]
  $region42: #{resnet_generator_forward.24} parent=0
    _
  %s11 = ssub.s32 1, %s9
  %s12 = scalar_select 0, %s11, %s9
  // Predicated region
  $region2: #{resnet_generator_forward.24} parent=0 // pred_check
    _
  $region3: #{resnet_generator_forward.24} parent=0 // pred_check_branch
    %14 = sbr.rel (0) target = $region5
  $region4: #{resnet_generator_forward.24} parent=0 // pred_region
    _
  $region5: #{resnet_generator_forward.24} parent=0 // pred_fallthru
    _
  // Predicated region
  $region6: #{resnet_generator_forward.24} parent=0 // pred_check
    _
  $region7: #{resnet_generator_forward.24} parent=0 // pred_check_branch
    %16 = sbr.rel (0) target = $region9
  $region8: #{resnet_generator_forward.24} parent=0 // pred_region
    _
  $region9: #{resnet_generator_forward.24} parent=0 // pred_fallthru
    _
  // Predicated region
  $region10: #{resnet_generator_forward.24} parent=0 // pred_check
    _
  $region11: #{resnet_generator_forward.24} parent=0 // pred_check_branch
    %18 = sbr.rel (0) target = $region13
  $region12: #{resnet_generator_forward.24} parent=0 // pred_region
    _
  $region13: #{resnet_generator_forward.24} parent=0 // pred_fallthru
    _
  // Predicated region
  $region14: #{resnet_generator_forward.24} parent=0 // pred_check
    _
  $region15: #{resnet_generator_forward.24} parent=0 // pred_check_branch
    %20 = sbr.rel (0) target = $region17
  $region16: #{resnet_generator_forward.24} parent=0 // pred_region
    _
  $region17: #{resnet_generator_forward.24} parent=0 // pred_fallthru
    _
  // Predicated region
  $region18: #{resnet_generator_forward.24} parent=0 // pred_check
    _
  $region19: #{resnet_generator_forward.24} parent=0 // pred_check_branch
    %22 = sbr.rel (0) target = $region21
  $region20: #{resnet_generator_forward.24} parent=0 // pred_region
    _
  $region21: #{resnet_generator_forward.24} parent=0 // pred_fallthru
    _
  // Predicated region
  $region22: #{resnet_generator_forward.24} parent=0 // pred_check
    _
  $region23: #{resnet_generator_forward.24} parent=0 // pred_check_branch
    %24 = sbr.rel (0) target = $region25
  $region24: #{resnet_generator_forward.24} parent=0 // pred_region
    _
  $region25: #{resnet_generator_forward.24} parent=0 // pred_fallthru
    _
  // Predicated region
  $region26: #{resnet_generator_forward.24} parent=0 // pred_check
    _
  $region27: #{resnet_generator_forward.24} parent=0 // pred_check_branch
    %26 = sbr.rel (0) target = $region29
  $region28: #{resnet_generator_forward.24} parent=0 // pred_region
    _
  $region29: #{resnet_generator_forward.24} parent=0 // pred_fallthru
    _
  // Predicated region
  $region30: #{resnet_generator_forward.24} parent=0 // pred_check
    _
  $region31: #{resnet_generator_forward.24} parent=0 // pred_check_branch
    %28 = sbr.rel (0) target = $region33
  $region32: #{resnet_generator_forward.24} parent=0 // pred_region
    _
  $region33: #{resnet_generator_forward.24} parent=0 // pred_fallthru
    _
  %v29 = vld [vmem:[%s0] sm:$0xff]
  %v30 = vld [vmem:[%s0 + $0x8] sm:$0xff]
  %v31 = vld [vmem:[%s0 + $0x10] sm:$0xff]
  %v32 = vld [vmem:[%s0 + $0x18] sm:$0xff]
  %v33 = vld [vmem:[%s0 + $0x20] sm:$0xff]
  %v34 = vld [vmem:[%s0 + $0x28] sm:$0xff]
  %v35 = vld [vmem:[%s0 + $0x30] sm:$0xff]
  %v36 = vld [vmem:[%s0 + $0x38] sm:$0xff]
  %v37 = vld [vmem:[%s4] sm:$0xf]
  %v39 = vlaneseq
  %v40 = vshrl.u32 %v39, 7
  %v41 = vsub.s32 0, %v40
  %v42 = vrot.slane %v37, %v41
  %v43 = vlaneseq
  %v44 = vshrl.u32 %v43, 7
  %v45 = vsub.s32 1, %v44
  %v46 = vrot.slane %v37, %v45
  %v47 = vlaneseq
  %v48 = vshrl.u32 %v47, 7
  %v49 = vsub.s32 2, %v48
  %v50 = vrot.slane %v37, %v49
  %v51 = vlaneseq
  %v52 = vshrl.u32 %v51, 7
  %v53 = vsub.s32 3, %v52
  %v54 = vrot.slane %v37, %v53
  %v59 = vmul.f32 %v29, %v42
  %v60 = vmul.f32 %v30, %v46
  %v61 = vmul.f32 %v31, %v50
  %v62 = vmul.f32 %v32, %v54
  %v63 = vmul.f32 %v33, %v42
  %v64 = vmul.f32 %v34, %v46
  %v65 = vmul.f32 %v35, %v50
  %v66 = vmul.f32 %v36, %v54
  %v67 = vld [vmem:[%s1] sm:$0xff]
  %v68 = vld [vmem:[%s1 + $0x8] sm:$0xff]
  %v69 = vld [vmem:[%s1 + $0x10] sm:$0xff]
  %v70 = vld [vmem:[%s1 + $0x18] sm:$0xff]
  %v71 = vld [vmem:[%s1 + $0x20] sm:$0xff]
  %v72 = vld [vmem:[%s1 + $0x28] sm:$0xff]
  %v73 = vld [vmem:[%s1 + $0x30] sm:$0xff]
  %v74 = vld [vmem:[%s1 + $0x38] sm:$0xff]
  %v75 = vld [vmem:[%s5] sm:$0xf]
  %v77 = vlaneseq
  %v78 = vshrl.u32 %v77, 7
  %v79 = vsub.s32 0, %v78
  %v80 = vrot.slane %v75, %v79
  %v81 = vlaneseq
  %v82 = vshrl.u32 %v81, 7
  %v83 = vsub.s32 1, %v82
  %v84 = vrot.slane %v75, %v83
  %v85 = vlaneseq
  %v86 = vshrl.u32 %v85, 7
  %v87 = vsub.s32 2, %v86
  %v88 = vrot.slane %v75, %v87
  %v89 = vlaneseq
  %v90 = vshrl.u32 %v89, 7
  %v91 = vsub.s32 3, %v90
  %v92 = vrot.slane %v75, %v91
  %v97 = vmul.f32 %v67, %v80
  %v98 = vmul.f32 %v68, %v84
  %v99 = vmul.f32 %v69, %v88
  %v100 = vmul.f32 %v70, %v92
  %v101 = vmul.f32 %v71, %v80
  %v102 = vmul.f32 %v72, %v84
  %v103 = vmul.f32 %v73, %v88
  %v104 = vmul.f32 %v74, %v92
  %v105 = vadd.f32 %v59, %v97
  %v106 = vadd.f32 %v60, %v98
  %v107 = vadd.f32 %v61, %v99
  %v108 = vadd.f32 %v62, %v100
  %v109 = vadd.f32 %v63, %v101
  %v110 = vadd.f32 %v64, %v102
  %v111 = vadd.f32 %v65, %v103
  %v112 = vadd.f32 %v66, %v104
  %v113 = vld [vmem:[%s2] sm:$0xff]
  %v114 = vld [vmem:[%s2 + $0x8] sm:$0xff]
  %v115 = vld [vmem:[%s2 + $0x10] sm:$0xff]
  %v116 = vld [vmem:[%s2 + $0x18] sm:$0xff]
  %v117 = vld [vmem:[%s2 + $0x20] sm:$0xff]
  %v118 = vld [vmem:[%s2 + $0x28] sm:$0xff]
  %v119 = vld [vmem:[%s2 + $0x30] sm:$0xff]
  %v120 = vld [vmem:[%s2 + $0x38] sm:$0xff]
  %v121 = vld [vmem:[%s6] sm:$0xf]
  %v123 = vlaneseq
  %v124 = vshrl.u32 %v123, 7
  %v125 = vsub.s32 0, %v124
  %v126 = vrot.slane %v121, %v125
  %v127 = vlaneseq
  %v128 = vshrl.u32 %v127, 7
  %v129 = vsub.s32 1, %v128
  %v130 = vrot.slane %v121, %v129
  %v131 = vlaneseq
  %v132 = vshrl.u32 %v131, 7
  %v133 = vsub.s32 2, %v132
  %v134 = vrot.slane %v121, %v133
  %v135 = vlaneseq
  %v136 = vshrl.u32 %v135, 7
  %v137 = vsub.s32 3, %v136
  %v138 = vrot.slane %v121, %v137
  %v143 = vmul.f32 %v113, %v126
  %v144 = vmul.f32 %v114, %v130
  %v145 = vmul.f32 %v115, %v134
  %v146 = vmul.f32 %v116, %v138
  %v147 = vmul.f32 %v117, %v126
  %v148 = vmul.f32 %v118, %v130
  %v149 = vmul.f32 %v119, %v134
  %v150 = vmul.f32 %v120, %v138
  %v151 = vadd.f32 %v105, %v143
  %v152 = vadd.f32 %v106, %v144
  %v153 = vadd.f32 %v107, %v145
  %v154 = vadd.f32 %v108, %v146
  %v155 = vadd.f32 %v109, %v147
  %v156 = vadd.f32 %v110, %v148
  %v157 = vadd.f32 %v111, %v149
  %v158 = vadd.f32 %v112, %v150
  %v159 = vld [vmem:[%s3] sm:$0xff]
  %v160 = vld [vmem:[%s3 + $0x8] sm:$0xff]
  %v161 = vld [vmem:[%s3 + $0x10] sm:$0xff]
  %v162 = vld [vmem:[%s3 + $0x18] sm:$0xff]
  %v163 = vld [vmem:[%s3 + $0x20] sm:$0xff]
  %v164 = vld [vmem:[%s3 + $0x28] sm:$0xff]
  %v165 = vld [vmem:[%s3 + $0x30] sm:$0xff]
  %v166 = vld [vmem:[%s3 + $0x38] sm:$0xff]
  %v167 = vld [vmem:[%s7] sm:$0xf]
  %v169 = vlaneseq
  %v170 = vshrl.u32 %v169, 7
  %v171 = vsub.s32 0, %v170
  %v172 = vrot.slane %v167, %v171
  %v173 = vlaneseq
  %v174 = vshrl.u32 %v173, 7
  %v175 = vsub.s32 1, %v174
  %v176 = vrot.slane %v167, %v175
  %v177 = vlaneseq
  %v178 = vshrl.u32 %v177, 7
  %v179 = vsub.s32 2, %v178
  %v180 = vrot.slane %v167, %v179
  %v181 = vlaneseq
  %v182 = vshrl.u32 %v181, 7
  %v183 = vsub.s32 3, %v182
  %v184 = vrot.slane %v167, %v183
  %v189 = vmul.f32 %v159, %v172
  %v190 = vmul.f32 %v160, %v176
  %v191 = vmul.f32 %v161, %v180
  %v192 = vmul.f32 %v162, %v184
  %v193 = vmul.f32 %v163, %v172
  %v194 = vmul.f32 %v164, %v176
  %v195 = vmul.f32 %v165, %v180
  %v196 = vmul.f32 %v166, %v184
  %v197 = vadd.f32 %v151, %v189
  %v198 = vadd.f32 %v152, %v190
  %v199 = vadd.f32 %v153, %v191
  %v200 = vadd.f32 %v154, %v192
  %v201 = vadd.f32 %v155, %v193
  %v202 = vadd.f32 %v156, %v194
  %v203 = vadd.f32 %v157, %v195
  %v204 = vadd.f32 %v158, %v196
  %205 = vst [vmem:[%s8] sm:$0xff] %v197
  %206 = vst [vmem:[%s8 + $0x8] sm:$0xff] %v198
  %207 = vst [vmem:[%s8 + $0x10] sm:$0xff] %v199
  %208 = vst [vmem:[%s8 + $0x18] sm:$0xff] %v200
  %209 = vst [vmem:[%s8 + $0x20] sm:$0xff] %v201
  %210 = vst [vmem:[%s8 + $0x28] sm:$0xff] %v202
  %211 = vst [vmem:[%s8 + $0x30] sm:$0xff] %v203
  %212 = vst [vmem:[%s8 + $0x38] sm:$0xff] %v204
  // Predicated region
  $region34: #{resnet_generator_forward.24} parent=0 // pred_check
    _
  $region35: #{resnet_generator_forward.24} parent=0 // pred_check_branch
    %214 = sbr.rel (0) target = $region37
  $region36: #{resnet_generator_forward.24} parent=0 // pred_region
    _
  $region37: #{resnet_generator_forward.24} parent=0 // pred_fallthru
    _
  // Predicated region
  $region38: #{resnet_generator_forward.24} parent=0 // pred_check
    _
  $region39: #{resnet_generator_forward.24} parent=0 // pred_check_branch
    %216 = sbr.rel (0) target = $region41
  $region40: #{resnet_generator_forward.24} parent=0 // pred_region
    _
  $region41: #{resnet_generator_forward.24} parent=0 // pred_fallthru
    _

// kernel: resnet_generator_forward.25
$region0: #{resnet_generator_forward.25}
  #allocation0 [shape = 'u32[]', space=smem, size = 0x4, offset = 0x4, fixed_abs, tag = 'smem constant byte address 0x4 - core index']
  #allocation1 [shape = 'u32[144,128]{1,0:T(1,128)}', space=vmem, size = 0x12000, scoped, tag = 'internal scratch']
  %s0 = inlined_call_operand.vmem [shape: bf16[8,144], index: 0, kind: input, shape index: {}]
  %s1 = inlined_call_operand.vmem [shape: bf16[144,512], index: 1, kind: input, shape index: {}]
  %s2 = inlined_call_operand.vmem [shape: f32[8,512], index: 2, kind: output, shape index: {}]
  %s3 = sld [smem:[#allocation0]]
  $region18: #{resnet_generator_forward.25} parent=0
    _
  %s5 = ssub.s32 1, %s3
  %s6 = scalar_select 0, %s5, %s3
  // Predicated region
  $region2: #{resnet_generator_forward.25} parent=0 // pred_check
    _
  $region3: #{resnet_generator_forward.25} parent=0 // pred_check_branch
    %8 = sbr.rel (0) target = $region5
  $region4: #{resnet_generator_forward.25} parent=0 // pred_region
    _
  $region5: #{resnet_generator_forward.25} parent=0 // pred_fallthru
    _
  // Predicated region
  $region6: #{resnet_generator_forward.25} parent=0 // pred_check
    _
  $region7: #{resnet_generator_forward.25} parent=0 // pred_check_branch
    %10 = sbr.rel (0) target = $region9
  $region8: #{resnet_generator_forward.25} parent=0 // pred_region
    _
  $region9: #{resnet_generator_forward.25} parent=0 // pred_fallthru
    _
  %v12 = vld [vmem:[%s0] sm:$0xff]
  %v13 = vld [vmem:[%s1] sm:$0xff]
  %v14 = vld [vmem:[%s1 + $0x8] sm:$0xff]
  %v15 = vld [vmem:[%s1 + $0x10] sm:$0xff]
  %v16 = vld [vmem:[%s1 + $0x18] sm:$0xff]
  %v17 = vld [vmem:[%s1 + $0x20] sm:$0xff]
  %v18 = vld [vmem:[%s1 + $0x28] sm:$0xff]
  %v19 = vld [vmem:[%s1 + $0x30] sm:$0xff]
  %v20 = vld [vmem:[%s1 + $0x38] sm:$0xff]
  %v21 = vld [vmem:[%s1 + $0x40] sm:$0xff]
  %v22 = vld [vmem:[%s1 + $0x48] sm:$0xff]
  %v23 = vld [vmem:[%s1 + $0x50] sm:$0xff]
  %v24 = vld [vmem:[%s1 + $0x58] sm:$0xff]
  %v25 = vld [vmem:[%s1 + $0x60] sm:$0xff]
  %v26 = vld [vmem:[%s1 + $0x68] sm:$0xff]
  %v27 = vld [vmem:[%s1 + $0x70] sm:$0xff]
  %v28 = vld [vmem:[%s1 + $0x78] sm:$0xff]
  %v29 = vld [vmem:[%s1 + $0x80] sm:$0xff]
  %v30 = vld [vmem:[%s1 + $0x88] sm:$0xff]
  %v31 = vld [vmem:[%s1 + $0x90] sm:$0xff]
  %v32 = vld [vmem:[%s1 + $0x98] sm:$0xff]
  %v33 = vld [vmem:[%s1 + $0xa0] sm:$0xff]
  %v34 = vld [vmem:[%s1 + $0xa8] sm:$0xff]
  %v35 = vld [vmem:[%s1 + $0xb0] sm:$0xff]
  %v36 = vld [vmem:[%s1 + $0xb8] sm:$0xff]
  %v37 = vld [vmem:[%s1 + $0xc0] sm:$0xff]
  %v38 = vld [vmem:[%s1 + $0xc8] sm:$0xff]
  %v39 = vld [vmem:[%s1 + $0xd0] sm:$0xff]
  %v40 = vld [vmem:[%s1 + $0xd8] sm:$0xff]
  %v41 = vld [vmem:[%s1 + $0xe0] sm:$0xff]
  %v42 = vld [vmem:[%s1 + $0xe8] sm:$0xff]
  %v43 = vld [vmem:[%s1 + $0xf0] sm:$0xff]
  %v44 = vld [vmem:[%s1 + $0xf8] sm:$0xff]
  %v45 = vld [vmem:[%s1 + $0x100] sm:$0xff]
  %v46 = vld [vmem:[%s1 + $0x108] sm:$0xff]
  %v47 = vld [vmem:[%s1 + $0x110] sm:$0xff]
  %v48 = vld [vmem:[%s1 + $0x118] sm:$0xff]
  %v50 = vunpack.c.l.b16 %v12
  %v51 = vunpack.c.h.b16 %v12
  %v52 = vpack.c.b16 %v50, %v50
  %v53 = vpack.c.b16 %v51, %v51
  %v91 = vunpack.c.l.b16 %v13
  %v92 = vunpack.c.h.b16 %v13
  %v93 = vunpack.c.l.b16 %v14
  %v94 = vunpack.c.h.b16 %v14
  %v95 = vunpack.c.l.b16 %v15
  %v96 = vunpack.c.h.b16 %v15
  %v97 = vunpack.c.l.b16 %v16
  %v98 = vunpack.c.h.b16 %v16
  %v99 = vunpack.c.l.b16 %v17
  %v100 = vunpack.c.h.b16 %v17
  %v101 = vunpack.c.l.b16 %v18
  %v102 = vunpack.c.h.b16 %v18
  %v103 = vunpack.c.l.b16 %v19
  %v104 = vunpack.c.h.b16 %v19
  %v105 = vunpack.c.l.b16 %v20
  %v106 = vunpack.c.h.b16 %v20
  %v107 = vunpack.c.l.b16 %v21
  %v108 = vunpack.c.h.b16 %v21
  %v109 = vunpack.c.l.b16 %v22
  %v110 = vunpack.c.h.b16 %v22
  %v111 = vunpack.c.l.b16 %v23
  %v112 = vunpack.c.h.b16 %v23
  %v113 = vunpack.c.l.b16 %v24
  %v114 = vunpack.c.h.b16 %v24
  %v115 = vunpack.c.l.b16 %v25
  %v116 = vunpack.c.h.b16 %v25
  %v117 = vunpack.c.l.b16 %v26
  %v118 = vunpack.c.h.b16 %v26
  %v119 = vunpack.c.l.b16 %v27
  %v120 = vunpack.c.h.b16 %v27
  %v121 = vunpack.c.l.b16 %v28
  %v122 = vunpack.c.h.b16 %v28
  %v123 = vunpack.c.l.b16 %v29
  %v124 = vunpack.c.h.b16 %v29
  %v125 = vunpack.c.l.b16 %v30
  %v126 = vunpack.c.h.b16 %v30
  %v127 = vunpack.c.l.b16 %v31
  %v128 = vunpack.c.h.b16 %v31
  %v129 = vunpack.c.l.b16 %v32
  %v130 = vunpack.c.h.b16 %v32
  %v131 = vunpack.c.l.b16 %v33
  %v132 = vunpack.c.h.b16 %v33
  %v133 = vunpack.c.l.b16 %v34
  %v134 = vunpack.c.h.b16 %v34
  %v135 = vunpack.c.l.b16 %v35
  %v136 = vunpack.c.h.b16 %v35
  %v137 = vunpack.c.l.b16 %v36
  %v138 = vunpack.c.h.b16 %v36
  %v139 = vunpack.c.l.b16 %v37
  %v140 = vunpack.c.h.b16 %v37
  %v141 = vunpack.c.l.b16 %v38
  %v142 = vunpack.c.h.b16 %v38
  %v143 = vunpack.c.l.b16 %v39
  %v144 = vunpack.c.h.b16 %v39
  %v145 = vunpack.c.l.b16 %v40
  %v146 = vunpack.c.h.b16 %v40
  %v147 = vunpack.c.l.b16 %v41
  %v148 = vunpack.c.h.b16 %v41
  %v149 = vunpack.c.l.b16 %v42
  %v150 = vunpack.c.h.b16 %v42
  %v151 = vunpack.c.l.b16 %v43
  %v152 = vunpack.c.h.b16 %v43
  %v153 = vunpack.c.l.b16 %v44
  %v154 = vunpack.c.h.b16 %v44
  %v155 = vunpack.c.l.b16 %v45
  %v156 = vunpack.c.h.b16 %v45
  %v157 = vunpack.c.l.b16 %v46
  %v158 = vunpack.c.h.b16 %v46
  %v159 = vunpack.c.l.b16 %v47
  %v160 = vunpack.c.h.b16 %v47
  %v161 = vunpack.c.l.b16 %v48
  %v162 = vunpack.c.h.b16 %v48
  %v163 = vpack.c.b16 %v95, %v91
  %v164 = vpack.c.b16 %v96, %v92
  %v165 = vpack.c.b16 %v97, %v93
  %v166 = vpack.c.b16 %v98, %v94
  %v167 = vpack.c.b16 %v103, %v99
  %v168 = vpack.c.b16 %v104, %v100
  %v169 = vpack.c.b16 %v105, %v101
  %v170 = vpack.c.b16 %v106, %v102
  %v171 = vpack.c.b16 %v111, %v107
  %v172 = vpack.c.b16 %v112, %v108
  %v173 = vpack.c.b16 %v113, %v109
  %v174 = vpack.c.b16 %v114, %v110
  %v175 = vpack.c.b16 %v119, %v115
  %v176 = vpack.c.b16 %v120, %v116
  %v177 = vpack.c.b16 %v121, %v117
  %v178 = vpack.c.b16 %v122, %v118
  %v179 = vpack.c.b16 %v127, %v123
  %v180 = vpack.c.b16 %v128, %v124
  %v181 = vpack.c.b16 %v129, %v125
  %v182 = vpack.c.b16 %v130, %v126
  %v183 = vpack.c.b16 %v135, %v131
  %v184 = vpack.c.b16 %v136, %v132
  %v185 = vpack.c.b16 %v137, %v133
  %v186 = vpack.c.b16 %v138, %v134
  %v187 = vpack.c.b16 %v143, %v139
  %v188 = vpack.c.b16 %v144, %v140
  %v189 = vpack.c.b16 %v145, %v141
  %v190 = vpack.c.b16 %v146, %v142
  %v191 = vpack.c.b16 %v151, %v147
  %v192 = vpack.c.b16 %v152, %v148
  %v193 = vpack.c.b16 %v153, %v149
  %v194 = vpack.c.b16 %v154, %v150
  %v195 = vpack.c.b16 %v159, %v155
  %v196 = vpack.c.b16 %v160, %v156
  %v197 = vpack.c.b16 %v161, %v157
  %v198 = vpack.c.b16 %v162, %v158
  %vm235 = vcmask 130048
  %v237 = vsel %vm235, %v53, 0
  %239 = vmatprep.subr.bf16.mxu0 %v164
  %240 = vmatpush1.bf16.msra.mxu0 %v163
  %241 = vmatprep.subr.bf16.mxu0 %v168
  %242 = vmatpush1.bf16.msra.mxu0 %v167
  %243 = vmatprep.subr.bf16.mxu0 %v172
  %244 = vmatpush1.bf16.msra.mxu0 %v171
  %245 = vmatprep.subr.bf16.mxu0 %v176
  %246 = vmatpush1.bf16.msra.mxu0 %v175
  %247 = vmatprep.subr.bf16.mxu0 %v180
  %248 = vmatpush1.bf16.msra.mxu0 %v179
  %249 = vmatprep.subr.bf16.mxu0 %v184
  %250 = vmatpush1.bf16.msra.mxu0 %v183
  %251 = vmatprep.subr.bf16.mxu0 %v188
  %252 = vmatpush1.bf16.msra.mxu0 %v187
  %253 = vmatprep.subr.bf16.mxu0 %v192
  %254 = vmatpush1.bf16.msra.mxu0 %v191
  %255 = vmatprep.subr.bf16.mxu0 %v196
  %256 = vmatpush1.bf16.msra.mxu0 %v195
  %257 = vmatprep.subr.bf16.mxu0 0
  %258 = vmatpush1.bf16.msra.mxu0 0
  %259 = vmatprep.subr.bf16.mxu0 0
  %260 = vmatpush1.bf16.msra.mxu0 0
  %261 = vmatprep.subr.bf16.mxu0 0
  %262 = vmatpush1.bf16.msra.mxu0 0
  %263 = vmatprep.subr.bf16.mxu0 0
  %264 = vmatpush1.bf16.msra.mxu0 0
  %265 = vmatprep.subr.bf16.mxu0 0
  %266 = vmatpush1.bf16.msra.mxu0 0
  %267 = vmatprep.subr.bf16.mxu0 0
  %268 = vmatpush1.bf16.msra.mxu0 0
  %269 = vmatprep.subr.bf16.mxu0 0
  %270 = vmatpush1.bf16.msra.mxu0 0
  %271 = vmatprep.mubr.bf16.mxu0 %v237
  %272 = vmatmul.mubr.bf16.gmra.mrb[0].mxu0 %v52
  %v273 = vpop.f32.mrb[0].mxu0
  %v274 = vadd.f32 0.0, %v273
  %v275 = vpop.f32.mrb[0].mxu0
  %v276 = vadd.f32 0.0, %v275
  %v277 = vpop.f32.mrb[0].mxu0
  %v278 = vpop.f32.mrb[0].mxu0
  %279 = vdwg.mxu0
  %280 = vmatprep.subr.bf16.mxu0 %v166
  %281 = vmatpush1.bf16.msra.mxu0 %v165
  %282 = vmatprep.subr.bf16.mxu0 %v170
  %283 = vmatpush1.bf16.msra.mxu0 %v169
  %284 = vmatprep.subr.bf16.mxu0 %v174
  %285 = vmatpush1.bf16.msra.mxu0 %v173
  %286 = vmatprep.subr.bf16.mxu0 %v178
  %287 = vmatpush1.bf16.msra.mxu0 %v177
  %288 = vmatprep.subr.bf16.mxu0 %v182
  %289 = vmatpush1.bf16.msra.mxu0 %v181
  %290 = vmatprep.subr.bf16.mxu0 %v186
  %291 = vmatpush1.bf16.msra.mxu0 %v185
  %292 = vmatprep.subr.bf16.mxu0 %v190
  %293 = vmatpush1.bf16.msra.mxu0 %v189
  %294 = vmatprep.subr.bf16.mxu0 %v194
  %295 = vmatpush1.bf16.msra.mxu0 %v193
  %296 = vmatprep.subr.bf16.mxu0 %v198
  %297 = vmatpush1.bf16.msra.mxu0 %v197
  %298 = vmatprep.subr.bf16.mxu0 0
  %299 = vmatpush1.bf16.msra.mxu0 0
  %300 = vmatprep.subr.bf16.mxu0 0
  %301 = vmatpush1.bf16.msra.mxu0 0
  %302 = vmatprep.subr.bf16.mxu0 0
  %303 = vmatpush1.bf16.msra.mxu0 0
  %304 = vmatprep.subr.bf16.mxu0 0
  %305 = vmatpush1.bf16.msra.mxu0 0
  %306 = vmatprep.subr.bf16.mxu0 0
  %307 = vmatpush1.bf16.msra.mxu0 0
  %308 = vmatprep.subr.bf16.mxu0 0
  %309 = vmatpush1.bf16.msra.mxu0 0
  %310 = vmatprep.subr.bf16.mxu0 0
  %311 = vmatpush1.bf16.msra.mxu0 0
  %312 = vmatprep.mubr.bf16.mxu0 %v237
  %313 = vmatmul.mubr.bf16.gmra.mrb[0].mxu0 %v52
  %v314 = vpop.f32.mrb[0].mxu0
  %v315 = vadd.f32 0.0, %v314
  %v316 = vpop.f32.mrb[0].mxu0
  %v317 = vadd.f32 0.0, %v316
  %v318 = vpop.f32.mrb[0].mxu0
  %v319 = vpop.f32.mrb[0].mxu0
  %320 = vdwg.mxu0
  %v321 = vadd.f32 %v274, %v276
  %v322 = vadd.f32 %v321, %v315
  %v323 = vadd.f32 %v322, %v317
  %324 = vadd.xlane.f32.xlu0 %v323
  %v325 = vpop.xlane.xlu0 %324
  %v326 = vrcp.pop 512.0
  %v327 = vmul.f32 %v325, %v326
  %v328 = vsub.f32 %v274, %v327
  %v329 = vsub.f32 %v276, %v327
  %v330 = vsub.f32 %v315, %v327
  %v331 = vsub.f32 %v317, %v327
  %v332 = vmul.f32 %v328, %v328
  %v333 = vmul.f32 %v329, %v329
  %v334 = vmul.f32 %v330, %v330
  %v335 = vmul.f32 %v331, %v331
  %v336 = vadd.f32 %v332, %v333
  %v337 = vadd.f32 %v336, %v334
  %v338 = vadd.f32 %v337, %v335
  %339 = vadd.xlane.f32.xlu0 %v338
  %v340 = vpop.xlane.xlu0 %339
  %v341 = vmul.f32 %v340, %v326
  %v342 = vadd.f32 %v341, 1e-05
  %v343 = vrsqrt.pop %v342
  %v344 = vmul.f32 %v328, %v343
  %v345 = vmul.f32 %v329, %v343
  %v346 = vmul.f32 %v330, %v343
  %v347 = vmul.f32 %v331, %v343
  %v348 = vmax.f32 %v344, 0.0
  %v349 = vmax.f32 %v345, 0.0
  %v350 = vmax.f32 %v346, 0.0
  %v351 = vmax.f32 %v347, 0.0
  %v352 = vadd.f32 %v344, %v345
  %v353 = vadd.f32 %v352, %v346
  %v354 = vadd.f32 %v353, %v347
  %355 = vadd.xlane.f32.xlu0 %v354
  %v356 = vpop.xlane.xlu0 %355
  %v357 = vrot.slane %v356, 4
  %v358 = vadd.f32 %v356, %v357
  %v359 = vrot.slane %v358, 2
  %v360 = vadd.f32 %v358, %v359
  %v361 = vrot.slane %v360, 1
  %v362 = vadd.f32 %v360, %v361
  %s363 = vtos %v362
  %v364 = vrcp.pop 4096.0
  %s365 = vtos %v364
  %s366 = smul.f32 %s363, %s365
  %v367 = vstv %s366
  %v368 = vsub.f32 %v348, %v367
  %v369 = vsub.f32 %v349, %v367
  %v370 = vsub.f32 %v350, %v367
  %v371 = vsub.f32 %v351, %v367
  %372 = vst [vmem:[%s2] sm:$0xff] %v368
  %373 = vst [vmem:[%s2 + $0x8] sm:$0xff] %v369
  %374 = vst [vmem:[%s2 + $0x10] sm:$0xff] %v370
  %375 = vst [vmem:[%s2 + $0x18] sm:$0xff] %v371
  // Predicated region
  $region10: #{resnet_generator_forward.25} parent=0 // pred_check
    _
  $region11: #{resnet_generator_forward.25} parent=0 // pred_check_branch
    %377 = sbr.rel (0) target = $region13
  $region12: #{resnet_generator_forward.25} parent=0 // pred_region
    _
  $region13: #{resnet_generator_forward.25} parent=0 // pred_fallthru
    _
  // Predicated region
  $region14: #{resnet_generator_forward.25} parent=0 // pred_check
    _
  $region15: #{resnet_generator_forward.25} parent=0 // pred_check_branch
    %379 = sbr.rel (0) target = $region17
  $region16: #{resnet_generator_forward.25} parent=0 // pred_region
    _
  $region17: #{resnet_generator_forward.25} parent=0 // pred_fallthru
    _

// kernel: resnet_generator_forward.26
$region0: #{resnet_generator_forward.26}
  #allocation0 [shape = 'u32[]', space=smem, size = 0x4, offset = 0x4, fixed_abs, tag = 'smem constant byte address 0x4 - core index']
  #allocation1 [shape = 'u32[144,128]{1,0:T(1,128)}', space=vmem, size = 0x12000, scoped, tag = 'internal scratch']
  %s0 = inlined_call_operand.vmem [shape: bf16[4,200], index: 0, kind: input, shape index: {}]
  %s1 = inlined_call_operand.vmem [shape: bf16[200,648], index: 1, kind: input, shape index: {}]
  %s2 = inlined_call_operand.vmem [shape: f32[4,648], index: 2, kind: output, shape index: {}]
  %s3 = sld [smem:[#allocation0]]
  $region18: #{resnet_generator_forward.26} parent=0
    _
  %s5 = ssub.s32 1, %s3
  %s6 = scalar_select 0, %s5, %s3
  // Predicated region
  $region2: #{resnet_generator_forward.26} parent=0 // pred_check
    _
  $region3: #{resnet_generator_forward.26} parent=0 // pred_check_branch
    %8 = sbr.rel (0) target = $region5
  $region4: #{resnet_generator_forward.26} parent=0 // pred_region
    _
  $region5: #{resnet_generator_forward.26} parent=0 // pred_fallthru
    _
  // Predicated region
  $region6: #{resnet_generator_forward.26} parent=0 // pred_check
    _
  $region7: #{resnet_generator_forward.26} parent=0 // pred_check_branch
    %10 = sbr.rel (0) target = $region9
  $region8: #{resnet_generator_forward.26} parent=0 // pred_region
    _
  $region9: #{resnet_generator_forward.26} parent=0 // pred_fallthru
    _
  %v12 = vld [vmem:[%s0] sm:$0xf]
  %v13 = vld [vmem:[%s1] sm:$0xff]
  %v14 = vld [vmem:[%s1 + $0x8] sm:$0xff]
  %v15 = vld [vmem:[%s1 + $0x10] sm:$0xff]
  %v16 = vld [vmem:[%s1 + $0x18] sm:$0xff]
  %v17 = vld [vmem:[%s1 + $0x20] sm:$0xff]
  %v18 = vld [vmem:[%s1 + $0x28] sm:$0xff]
  %v19 = vld [vmem:[%s1 + $0x30] sm:$0xff]
  %v20 = vld [vmem:[%s1 + $0x38] sm:$0xff]
  %v21 = vld [vmem:[%s1 + $0x40] sm:$0xff]
  %v22 = vld [vmem:[%s1 + $0x48] sm:$0xff]
  %v23 = vld [vmem:[%s1 + $0x50] sm:$0xff]
  %v24 = vld [vmem:[%s1 + $0x58] sm:$0xff]
  %v25 = vld [vmem:[%s1 + $0x60] sm:$0xff]
  %v26 = vld [vmem:[%s1 + $0x68] sm:$0xff]
  %v27 = vld [vmem:[%s1 + $0x70] sm:$0xff]
  %v28 = vld [vmem:[%s1 + $0x78] sm:$0xff]
  %v29 = vld [vmem:[%s1 + $0x80] sm:$0xff]
  %v30 = vld [vmem:[%s1 + $0x88] sm:$0xff]
  %v31 = vld [vmem:[%s1 + $0x90] sm:$0xff]
  %v32 = vld [vmem:[%s1 + $0x98] sm:$0xff]
  %v33 = vld [vmem:[%s1 + $0xa0] sm:$0xff]
  %v34 = vld [vmem:[%s1 + $0xa8] sm:$0xff]
  %v35 = vld [vmem:[%s1 + $0xb0] sm:$0xff]
  %v36 = vld [vmem:[%s1 + $0xb8] sm:$0xff]
  %v37 = vld [vmem:[%s1 + $0xc0] sm:$0xff]
  %v38 = vld [vmem:[%s1 + $0xc8] sm:$0xff]
  %v39 = vld [vmem:[%s1 + $0xd0] sm:$0xff]
  %v40 = vld [vmem:[%s1 + $0xd8] sm:$0xff]
  %v41 = vld [vmem:[%s1 + $0xe0] sm:$0xff]
  %v42 = vld [vmem:[%s1 + $0xe8] sm:$0xff]
  %v43 = vld [vmem:[%s1 + $0xf0] sm:$0xff]
  %v44 = vld [vmem:[%s1 + $0xf8] sm:$0xff]
  %v45 = vld [vmem:[%s1 + $0x100] sm:$0xff]
  %v46 = vld [vmem:[%s1 + $0x108] sm:$0xff]
  %v47 = vld [vmem:[%s1 + $0x110] sm:$0xff]
  %v48 = vld [vmem:[%s1 + $0x118] sm:$0xff]
  %v49 = vld [vmem:[%s1 + $0x120] sm:$0xff]
  %v50 = vld [vmem:[%s1 + $0x128] sm:$0xff]
  %v51 = vld [vmem:[%s1 + $0x130] sm:$0xff]
  %v52 = vld [vmem:[%s1 + $0x138] sm:$0xff]
  %v53 = vld [vmem:[%s1 + $0x140] sm:$0xff]
  %v54 = vld [vmem:[%s1 + $0x148] sm:$0xff]
  %v55 = vld [vmem:[%s1 + $0x150] sm:$0xff]
  %v56 = vld [vmem:[%s1 + $0x158] sm:$0xff]
  %v57 = vld [vmem:[%s1 + $0x160] sm:$0xff]
  %v58 = vld [vmem:[%s1 + $0x168] sm:$0xff]
  %v59 = vld [vmem:[%s1 + $0x170] sm:$0xff]
  %v60 = vld [vmem:[%s1 + $0x178] sm:$0xff]
  %v61 = vld [vmem:[%s1 + $0x180] sm:$0xff]
  %v62 = vld [vmem:[%s1 + $0x188] sm:$0xff]
  %v63 = vld [vmem:[%s1 + $0x190] sm:$0xff]
  %v64 = vld [vmem:[%s1 + $0x198] sm:$0xff]
  %v65 = vld [vmem:[%s1 + $0x1a0] sm:$0xff]
  %v66 = vld [vmem:[%s1 + $0x1a8] sm:$0xff]
  %v67 = vld [vmem:[%s1 + $0x1b0] sm:$0xff]
  %v68 = vld [vmem:[%s1 + $0x1b8] sm:$0xff]
  %v69 = vld [vmem:[%s1 + $0x1c0] sm:$0xff]
  %v70 = vld [vmem:[%s1 + $0x1c8] sm:$0xff]
  %v71 = vld [vmem:[%s1 + $0x1d0] sm:$0xff]
  %v72 = vld [vmem:[%s1 + $0x1d8] sm:$0xff]
  %v73 = vld [vmem:[%s1 + $0x1e0] sm:$0xff]
  %v74 = vld [vmem:[%s1 + $0x1e8] sm:$0xff]
  %v75 = vld [vmem:[%s1 + $0x1f0] sm:$0xff]
  %v76 = vld [vmem:[%s1 + $0x1f8] sm:$0xff]
  %v77 = vld [vmem:[%s1 + $0x200] sm:$0xff]
  %v78 = vld [vmem:[%s1 + $0x208] sm:$0xff]
  %v79 = vld [vmem:[%s1 + $0x210] sm:$0xff]
  %v80 = vld [vmem:[%s1 + $0x218] sm:$0xff]
  %v81 = vld [vmem:[%s1 + $0x220] sm:$0xff]
  %v82 = vld [vmem:[%s1 + $0x228] sm:$0xff]
  %v83 = vld [vmem:[%s1 + $0x230] sm:$0xff]
  %v84 = vld [vmem:[%s1 + $0x238] sm:$0xff]
  %v85 = vld [vmem:[%s1 + $0x240] sm:$0xff]
  %v86 = vld [vmem:[%s1 + $0x248] sm:$0xff]
  %v87 = vld [vmem:[%s1 + $0x250] sm:$0xff]
  %v90 = vunpack.c.l.s4 1983009808
  %v91 = vunpack.c.0.s8 %v90
  %v92 = vlaneseq
  %v93 = vshrl.u32 %v92, 7
  %v94 = vsub.s32 %v91, %v93
  %v95 = vrot.slane %v12, %v94
  %v96 = vcombine.high %v95, %v95
  %v173 = vunpack.c.l.b16 %v13
  %v174 = vunpack.c.h.b16 %v13
  %v175 = vunpack.c.l.b16 %v14
  %v176 = vunpack.c.h.b16 %v14
  %v177 = vunpack.c.l.b16 %v15
  %v178 = vunpack.c.h.b16 %v15
  %v179 = vunpack.c.l.b16 %v16
  %v180 = vunpack.c.h.b16 %v16
  %v181 = vunpack.c.l.b16 %v17
  %v182 = vunpack.c.h.b16 %v17
  %v183 = vunpack.c.l.b16 %v18
  %v184 = vunpack.c.h.b16 %v18
  %v185 = vunpack.c.l.b16 %v19
  %v186 = vunpack.c.h.b16 %v19
  %v187 = vunpack.c.l.b16 %v20
  %v188 = vunpack.c.h.b16 %v20
  %v189 = vunpack.c.l.b16 %v21
  %v190 = vunpack.c.h.b16 %v21
  %v191 = vunpack.c.l.b16 %v22
  %v192 = vunpack.c.h.b16 %v22
  %v193 = vunpack.c.l.b16 %v23
  %v194 = vunpack.c.h.b16 %v23
  %v195 = vunpack.c.l.b16 %v24
  %v196 = vunpack.c.h.b16 %v24
  %v197 = vunpack.c.l.b16 %v25
  %v198 = vunpack.c.h.b16 %v25
  %v199 = vunpack.c.l.b16 %v26
  %v200 = vunpack.c.h.b16 %v26
  %v201 = vunpack.c.l.b16 %v27
  %v202 = vunpack.c.h.b16 %v27
  %v203 = vunpack.c.l.b16 %v28
  %v204 = vunpack.c.h.b16 %v28
  %v205 = vunpack.c.l.b16 %v29
  %v206 = vunpack.c.h.b16 %v29
  %v207 = vunpack.c.l.b16 %v30
  %v208 = vunpack.c.h.b16 %v30
  %v209 = vunpack.c.l.b16 %v31
  %v210 = vunpack.c.h.b16 %v31
  %v211 = vunpack.c.l.b16 %v32
  %v212 = vunpack.c.h.b16 %v32
  %v213 = vunpack.c.l.b16 %v33
  %v214 = vunpack.c.h.b16 %v33
  %v215 = vunpack.c.l.b16 %v34
  %v216 = vunpack.c.h.b16 %v34
  %v217 = vunpack.c.l.b16 %v35
  %v218 = vunpack.c.h.b16 %v35
  %v219 = vunpack.c.l.b16 %v36
  %v220 = vunpack.c.h.b16 %v36
  %v221 = vunpack.c.l.b16 %v37
  %v222 = vunpack.c.h.b16 %v37
  %v223 = vunpack.c.l.b16 %v38
  %v224 = vunpack.c.h.b16 %v38
  %v225 = vunpack.c.l.b16 %v39
  %v226 = vunpack.c.h.b16 %v39
  %v227 = vunpack.c.l.b16 %v40
  %v228 = vunpack.c.h.b16 %v40
  %v229 = vunpack.c.l.b16 %v41
  %v230 = vunpack.c.h.b16 %v41
  %v231 = vunpack.c.l.b16 %v42
  %v232 = vunpack.c.h.b16 %v42
  %v233 = vunpack.c.l.b16 %v43
  %v234 = vunpack.c.h.b16 %v43
  %v235 = vunpack.c.l.b16 %v44
  %v236 = vunpack.c.h.b16 %v44
  %v237 = vunpack.c.l.b16 %v45
  %v238 = vunpack.c.h.b16 %v45
  %v239 = vunpack.c.l.b16 %v46
  %v240 = vunpack.c.h.b16 %v46
  %v241 = vunpack.c.l.b16 %v47
  %v242 = vunpack.c.h.b16 %v47
  %v243 = vunpack.c.l.b16 %v48
  %v244 = vunpack.c.h.b16 %v48
  %v245 = vunpack.c.l.b16 %v49
  %v246 = vunpack.c.h.b16 %v49
  %v247 = vunpack.c.l.b16 %v50
  %v248 = vunpack.c.h.b16 %v50
  %v249 = vunpack.c.l.b16 %v51
  %v250 = vunpack.c.h.b16 %v51
  %v251 = vunpack.c.l.b16 %v52
  %v252 = vunpack.c.h.b16 %v52
  %v253 = vunpack.c.l.b16 %v53
  %v254 = vunpack.c.h.b16 %v53
  %v255 = vunpack.c.l.b16 %v54
  %v256 = vunpack.c.h.b16 %v54
  %v257 = vunpack.c.l.b16 %v55
  %v258 = vunpack.c.h.b16 %v55
  %v259 = vunpack.c.l.b16 %v56
  %v260 = vunpack.c.h.b16 %v56
  %v261 = vunpack.c.l.b16 %v57
  %v262 = vunpack.c.h.b16 %v57
  %v263 = vunpack.c.l.b16 %v58
  %v264 = vunpack.c.h.b16 %v58
  %v265 = vunpack.c.l.b16 %v59
  %v266 = vunpack.c.h.b16 %v59
  %v267 = vunpack.c.l.b16 %v60
  %v268 = vunpack.c.h.b16 %v60
  %v269 = vunpack.c.l.b16 %v61
  %v270 = vunpack.c.h.b16 %v61
  %v271 = vunpack.c.l.b16 %v62
  %v272 = vunpack.c.h.b16 %v62
  %v273 = vunpack.c.l.b16 %v63
  %v274 = vunpack.c.h.b16 %v63
  %v275 = vunpack.c.l.b16 %v64
  %v276 = vunpack.c.h.b16 %v64
  %v277 = vunpack.c.l.b16 %v65
  %v278 = vunpack.c.h.b16 %v65
  %v279 = vunpack.c.l.b16 %v66
  %v280 = vunpack.c.h.b16 %v66
  %v281 = vunpack.c.l.b16 %v67
  %v282 = vunpack.c.h.b16 %v67
  %v283 = vunpack.c.l.b16 %v68
  %v284 = vunpack.c.h.b16 %v68
  %v285 = vunpack.c.l.b16 %v69
  %v286 = vunpack.c.h.b16 %v69
  %v287 = vunpack.c.l.b16 %v70
  %v288 = vunpack.c.h.b16 %v70
  %v289 = vunpack.c.l.b16 %v71
  %v290 = vunpack.c.h.b16 %v71
  %v291 = vunpack.c.l.b16 %v72
  %v292 = vunpack.c.h.b16 %v72
  %v293 = vunpack.c.l.b16 %v73
  %v294 = vunpack.c.h.b16 %v73
  %v295 = vunpack.c.l.b16 %v74
  %v296 = vunpack.c.h.b16 %v74
  %v297 = vunpack.c.l.b16 %v75
  %v298 = vunpack.c.h.b16 %v75
  %v299 = vunpack.c.l.b16 %v76
  %v300 = vunpack.c.h.b16 %v76
  %v301 = vunpack.c.l.b16 %v77
  %v302 = vunpack.c.h.b16 %v77
  %v303 = vunpack.c.l.b16 %v78
  %v304 = vunpack.c.h.b16 %v78
  %v305 = vunpack.c.l.b16 %v79
  %v306 = vunpack.c.h.b16 %v79
  %v307 = vunpack.c.l.b16 %v80
  %v308 = vunpack.c.h.b16 %v80
  %v309 = vunpack.c.l.b16 %v81
  %v310 = vunpack.c.h.b16 %v81
  %v311 = vunpack.c.l.b16 %v82
  %v312 = vunpack.c.h.b16 %v82
  %v313 = vunpack.c.l.b16 %v83
  %v314 = vunpack.c.h.b16 %v83
  %v315 = vunpack.c.l.b16 %v84
  %v316 = vunpack.c.h.b16 %v84
  %v317 = vunpack.c.l.b16 %v85
  %v318 = vunpack.c.h.b16 %v85
  %v319 = vunpack.c.l.b16 %v86
  %v320 = vunpack.c.h.b16 %v86
  %v321 = vunpack.c.l.b16 %v87
  %v322 = vunpack.c.h.b16 %v87
  %v323 = vpack.c.b16 %v179, %v173
  %v324 = vpack.c.b16 %v180, %v174
  %v325 = vpack.c.b16 %v181, %v175
  %v326 = vpack.c.b16 %v182, %v176
  %v327 = vpack.c.b16 %v183, %v177
  %v328 = vpack.c.b16 %v184, %v178
  %v329 = vpack.c.b16 %v191, %v185
  %v330 = vpack.c.b16 %v192, %v186
  %v331 = vpack.c.b16 %v193, %v187
  %v332 = vpack.c.b16 %v194, %v188
  %v333 = vpack.c.b16 %v195, %v189
  %v334 = vpack.c.b16 %v196, %v190
  %v335 = vpack.c.b16 %v203, %v197
  %v336 = vpack.c.b16 %v204, %v198
  %v337 = vpack.c.b16 %v205, %v199
  %v338 = vpack.c.b16 %v206, %v200
  %v339 = vpack.c.b16 %v207, %v201
  %v340 = vpack.c.b16 %v208, %v202
  %v341 = vpack.c.b16 %v215, %v209
  %v342 = vpack.c.b16 %v216, %v210
  %v343 = vpack.c.b16 %v217, %v211
  %v344 = vpack.c.b16 %v218, %v212
  %v345 = vpack.c.b16 %v219, %v213
  %v346 = vpack.c.b16 %v220, %v214
  %v347 = vpack.c.b16 %v227, %v221
  %v348 = vpack.c.b16 %v228, %v222
  %v349 = vpack.c.b16 %v229, %v223
  %v350 = vpack.c.b16 %v230, %v224
  %v351 = vpack.c.b16 %v231, %v225
  %v352 = vpack.c.b16 %v232, %v226
  %v353 = vpack.c.b16 %v239, %v233
  %v354 = vpack.c.b16 %v240, %v234
  %v355 = vpack.c.b16 %v241, %v235
  %v356 = vpack.c.b16 %v242, %v236
  %v357 = vpack.c.b16 %v243, %v237
  %v358 = vpack.c.b16 %v244, %v238
  %v359 = vpack.c.b16 %v251, %v245
  %v360 = vpack.c.b16 %v252, %v246
  %v361 = vpack.c.b16 %v253, %v247
  %v362 = vpack.c.b16 %v254, %v248
  %v363 = vpack.c.b16 %v255, %v249
  %v364 = vpack.c.b16 %v256, %v250
  %v365 = vpack.c.b16 %v263, %v257
  %v366 = vpack.c.b16 %v264, %v258
  %v367 = vpack.c.b16 %v265, %v259
  %v368 = vpack.c.b16 %v266, %v260
  %v369 = vpack.c.b16 %v267, %v261
  %v370 = vpack.c.b16 %v268, %v262
  %v371 = vpack.c.b16 %v275, %v269
  %v372 = vpack.c.b16 %v276, %v270
  %v373 = vpack.c.b16 %v277, %v271
  %v374 = vpack.c.b16 %v278, %v272
  %v375 = vpack.c.b16 %v279, %v273
  %v376 = vpack.c.b16 %v280, %v274
  %v377 = vpack.c.b16 %v287, %v281
  %v378 = vpack.c.b16 %v288, %v282
  %v379 = vpack.c.b16 %v289, %v283
  %v380 = vpack.c.b16 %v290, %v284
  %v381 = vpack.c.b16 %v291, %v285
  %v382 = vpack.c.b16 %v292, %v286
  %v383 = vpack.c.b16 %v299, %v293
  %v384 = vpack.c.b16 %v300, %v294
  %v385 = vpack.c.b16 %v301, %v295
  %v386 = vpack.c.b16 %v302, %v296
  %v387 = vpack.c.b16 %v303, %v297
  %v388 = vpack.c.b16 %v304, %v298
  %v389 = vpack.c.b16 %v311, %v305
  %v390 = vpack.c.b16 %v312, %v306
  %v391 = vpack.c.b16 %v313, %v307
  %v392 = vpack.c.b16 %v314, %v308
  %v393 = vpack.c.b16 %v315, %v309
  %v394 = vpack.c.b16 %v316, %v310
  %v395 = vpack.c.b16 %v317, %v317
  %v396 = vpack.c.b16 %v318, %v318
  %v397 = vpack.c.b16 %v319, %v319
  %v398 = vpack.c.b16 %v320, %v320
  %v399 = vpack.c.b16 %v321, %v321
  %v400 = vpack.c.b16 %v322, %v322
  %vm473 = vcmask 588800
  %v475 = vsel %vm473, %v96, 0
  %vm477 = vcmask 1043456
  %v479 = vsel %vm477, %v395, 0
  %v482 = vsel %vm477, %v396, 0
  %v485 = vsel %vm477, %v397, 0
  %v488 = vsel %vm477, %v398, 0
  %v491 = vsel %vm477, %v399, 0
  %v494 = vsel %vm477, %v400, 0
  %496 = vmatprep.subr.bf16.mxu0 %v324
  %497 = vmatpush1.bf16.msra.mxu0 %v323
  %498 = vmatprep.subr.bf16.mxu0 %v330
  %499 = vmatpush1.bf16.msra.mxu0 %v329
  %500 = vmatprep.subr.bf16.mxu0 %v336
  %501 = vmatpush1.bf16.msra.mxu0 %v335
  %502 = vmatprep.subr.bf16.mxu0 %v342
  %503 = vmatpush1.bf16.msra.mxu0 %v341
  %504 = vmatprep.subr.bf16.mxu0 %v348
  %505 = vmatpush1.bf16.msra.mxu0 %v347
  %506 = vmatprep.subr.bf16.mxu0 %v354
  %507 = vmatpush1.bf16.msra.mxu0 %v353
  %508 = vmatprep.subr.bf16.mxu0 %v360
  %509 = vmatpush1.bf16.msra.mxu0 %v359
  %510 = vmatprep.subr.bf16.mxu0 %v366
  %511 = vmatpush1.bf16.msra.mxu0 %v365
  %512 = vmatprep.subr.bf16.mxu0 %v372
  %513 = vmatpush1.bf16.msra.mxu0 %v371
  %514 = vmatprep.subr.bf16.mxu0 %v378
  %515 = vmatpush1.bf16.msra.mxu0 %v377
  %516 = vmatprep.subr.bf16.mxu0 %v384
  %517 = vmatpush1.bf16.msra.mxu0 %v383
  %518 = vmatprep.subr.bf16.mxu0 %v390
  %519 = vmatpush1.bf16.msra.mxu0 %v389
  %520 = vmatprep.subr.bf16.mxu0 %v482
  %521 = vmatpush1.bf16.msra.mxu0 %v479
  %522 = vmatprep.subr.bf16.mxu0 0
  %523 = vmatpush1.bf16.msra.mxu0 0
  %524 = vmatprep.subr.bf16.mxu0 0
  %525 = vmatpush1.bf16.msra.mxu0 0
  %526 = vmatprep.subr.bf16.mxu0 0
  %527 = vmatpush1.bf16.msra.mxu0 0
  %528 = vmatprep.mubr.bf16.mxu0 %v475
  %529 = vmatmul.mubr.bf16.gmra.mrb[0].mxu0 %v95
  %v530 = vpop.f32.mrb[0].mxu0
  %v531 = vadd.f32 0.0, %v530
  %v532 = vpop.f32.mrb[0].mxu0
  %v533 = vadd.f32 0.0, %v532
  %v534 = vpop.f32.mrb[0].mxu0
  %v535 = vpop.f32.mrb[0].mxu0
  %536 = vdwg.mxu0
  %537 = vmatprep.subr.bf16.mxu0 %v326
  %538 = vmatpush1.bf16.msra.mxu0 %v325
  %539 = vmatprep.subr.bf16.mxu0 %v332
  %540 = vmatpush1.bf16.msra.mxu0 %v331
  %541 = vmatprep.subr.bf16.mxu0 %v338
  %542 = vmatpush1.bf16.msra.mxu0 %v337
  %543 = vmatprep.subr.bf16.mxu0 %v344
  %544 = vmatpush1.bf16.msra.mxu0 %v343
  %545 = vmatprep.subr.bf16.mxu0 %v350
  %546 = vmatpush1.bf16.msra.mxu0 %v349
  %547 = vmatprep.subr.bf16.mxu0 %v356
  %548 = vmatpush1.bf16.msra.mxu0 %v355
  %549 = vmatprep.subr.bf16.mxu0 %v362
  %550 = vmatpush1.bf16.msra.mxu0 %v361
  %551 = vmatprep.subr.bf16.mxu0 %v368
  %552 = vmatpush1.bf16.msra.mxu0 %v367
  %553 = vmatprep.subr.bf16.mxu0 %v374
  %554 = vmatpush1.bf16.msra.mxu0 %v373
  %555 = vmatprep.subr.bf16.mxu0 %v380
  %556 = vmatpush1.bf16.msra.mxu0 %v379
  %557 = vmatprep.subr.bf16.mxu0 %v386
  %558 = vmatpush1.bf16.msra.mxu0 %v385
  %559 = vmatprep.subr.bf16.mxu0 %v392
  %560 = vmatpush1.bf16.msra.mxu0 %v391
  %561 = vmatprep.subr.bf16.mxu0 %v488
  %562 = vmatpush1.bf16.msra.mxu0 %v485
  %563 = vmatprep.subr.bf16.mxu0 0
  %564 = vmatpush1.bf16.msra.mxu0 0
  %565 = vmatprep.subr.bf16.mxu0 0
  %566 = vmatpush1.bf16.msra.mxu0 0
  %567 = vmatprep.subr.bf16.mxu0 0
  %568 = vmatpush1.bf16.msra.mxu0 0
  %569 = vmatprep.mubr.bf16.mxu0 %v475
  %570 = vmatmul.mubr.bf16.gmra.mrb[0].mxu0 %v95
  %v571 = vpop.f32.mrb[0].mxu0
  %v572 = vadd.f32 0.0, %v571
  %v573 = vpop.f32.mrb[0].mxu0
  %v574 = vadd.f32 0.0, %v573
  %v575 = vpop.f32.mrb[0].mxu0
  %v576 = vpop.f32.mrb[0].mxu0
  %577 = vdwg.mxu0
  %578 = vmatprep.subr.bf16.mxu0 %v328
  %579 = vmatpush1.bf16.msra.mxu0 %v327
  %580 = vmatprep.subr.bf16.mxu0 %v334
  %581 = vmatpush1.bf16.msra.mxu0 %v333
  %582 = vmatprep.subr.bf16.mxu0 %v340
  %583 = vmatpush1.bf16.msra.mxu0 %v339
  %584 = vmatprep.subr.bf16.mxu0 %v346
  %585 = vmatpush1.bf16.msra.mxu0 %v345
  %586 = vmatprep.subr.bf16.mxu0 %v352
  %587 = vmatpush1.bf16.msra.mxu0 %v351
  %588 = vmatprep.subr.bf16.mxu0 %v358
  %589 = vmatpush1.bf16.msra.mxu0 %v357
  %590 = vmatprep.subr.bf16.mxu0 %v364
  %591 = vmatpush1.bf16.msra.mxu0 %v363
  %592 = vmatprep.subr.bf16.mxu0 %v370
  %593 = vmatpush1.bf16.msra.mxu0 %v369
  %594 = vmatprep.subr.bf16.mxu0 %v376
  %595 = vmatpush1.bf16.msra.mxu0 %v375
  %596 = vmatprep.subr.bf16.mxu0 %v382
  %597 = vmatpush1.bf16.msra.mxu0 %v381
  %598 = vmatprep.subr.bf16.mxu0 %v388
  %599 = vmatpush1.bf16.msra.mxu0 %v387
  %600 = vmatprep.subr.bf16.mxu0 %v394
  %601 = vmatpush1.bf16.msra.mxu0 %v393
  %602 = vmatprep.subr.bf16.mxu0 %v494
  %603 = vmatpush1.bf16.msra.mxu0 %v491
  %604 = vmatprep.subr.bf16.mxu0 0
  %605 = vmatpush1.bf16.msra.mxu0 0
  %606 = vmatprep.subr.bf16.mxu0 0
  %607 = vmatpush1.bf16.msra.mxu0 0
  %608 = vmatprep.subr.bf16.mxu0 0
  %609 = vmatpush1.bf16.msra.mxu0 0
  %610 = vmatprep.mubr.bf16.mxu0 %v475
  %611 = vmatmul.mubr.bf16.gmra.mrb[0].mxu0 %v95
  %v612 = vpop.f32.mrb[0].mxu0
  %v613 = vadd.f32 0.0, %v612
  %v614 = vpop.f32.mrb[0].mxu0
  %v615 = vadd.f32 0.0, %v614
  %v616 = vpop.f32.mrb[0].mxu0
  %v617 = vpop.f32.mrb[0].mxu0
  %618 = vdwg.mxu0
  %v619 = vmax.f32 %v531, 0.0
  %v620 = vmax.f32 %v533, 0.0
  %v621 = vmax.f32 %v572, 0.0
  %v622 = vmax.f32 %v574, 0.0
  %v623 = vmax.f32 %v613, 0.0
  %v624 = vmax.f32 %v615, 0.0
  %v625 = vsel %vm477, %v531, 0.0
  %v626 = vsel %vm477, %v533, 0.0
  %v627 = vadd.f32 %v625, %v626
  %v628 = vsel %vm477, %v572, 0.0
  %v629 = vadd.f32 %v627, %v628
  %v630 = vsel %vm477, %v574, 0.0
  %v631 = vadd.f32 %v629, %v630
  %v632 = vsel %vm477, %v613, 0.0
  %v633 = vadd.f32 %v631, %v632
  %vm634 = vcmask 60416
  %v635 = vsel %vm634, %v615, 0.0
  %v636 = vadd.f32 %v633, %v635
  %637 = vadd.xlane.f32.xlu0 %v636
  %v638 = vpop.xlane.xlu0 %637
  %v639 = vrot.slane %v638, 4
  %v640 = vadd.f32 %v638, %v639
  %v641 = vrot.slane %v640, 2
  %v642 = vadd.f32 %v640, %v641
  %v643 = vrot.slane %v642, 1
  %v644 = vadd.f32 %v642, %v643
  %s645 = vtos %v644
  %v646 = vrcp.pop 2592.0
  %s647 = vtos %v646
  %s648 = smul.f32 %s645, %s647
  %v649 = vstv %s648
  %v650 = vsub.f32 %v619, %v649
  %v651 = vsub.f32 %v620, %v649
  %v652 = vsub.f32 %v621, %v649
  %v653 = vsub.f32 %v622, %v649
  %v654 = vsub.f32 %v623, %v649
  %v655 = vsub.f32 %v624, %v649
  %v662 = vcombine.low %v650, %v651
  %v663 = vcombine.low %v652, %v653
  %v664 = vcombine.low %v654, %v655
  %668 = vst [vmem:[%s2] sm:$0xff] %v662
  %669 = vst [vmem:[%s2 + $0x8] sm:$0xff] %v663
  %vm670 = vcmask 64516
  %vm671 = vmor %vm670, %vm477
  %672 = vst.msk [vmem:[%s2 + $0x10] sm:$0xff] %vm671, %v664
  // Predicated region
  $region10: #{resnet_generator_forward.26} parent=0 // pred_check
    _
  $region11: #{resnet_generator_forward.26} parent=0 // pred_check_branch
    %674 = sbr.rel (0) target = $region13
  $region12: #{resnet_generator_forward.26} parent=0 // pred_region
    _
  $region13: #{resnet_generator_forward.26} parent=0 // pred_fallthru
    _
  // Predicated region
  $region14: #{resnet_generator_forward.26} parent=0 // pred_check
    _
  $region15: #{resnet_generator_forward.26} parent=0 // pred_check_branch
    %676 = sbr.rel (0) target = $region17
  $region16: #{resnet_generator_forward.26} parent=0 // pred_region
    _
  $region17: #{resnet_generator_forward.26} parent=0 // pred_fallthru
    _

// kernel: resnet_generator_forward.27
$region0: #{resnet_generator_forward.27}
  #allocation0 [shape = 'u32[]', space=smem, size = 0x4, offset = 0x4, fixed_abs, tag = 'smem constant byte address 0x4 - core index']
  #allocation1 [shape = 'u32[144,128]{1,0:T(1,128)}', space=vmem, size = 0x12000, scoped, tag = 'internal scratch']
  %s0 = inlined_call_operand.vmem [shape: bf16[3,36], index: 0, kind: input, shape index: {}]
  %s1 = inlined_call_operand.vmem [shape: bf16[36,512], index: 1, kind: input, shape index: {}]
  %s2 = inlined_call_operand.vmem [shape: f32[3,512], index: 2, kind: output, shape index: {}]
  %s3 = sld [smem:[#allocation0]]
  $region18: #{resnet_generator_forward.27} parent=0
    _
  %s5 = ssub.s32 1, %s3
  %s6 = scalar_select 0, %s5, %s3
  // Predicated region
  $region2: #{resnet_generator_forward.27} parent=0 // pred_check
    _
  $region3: #{resnet_generator_forward.27} parent=0 // pred_check_branch
    %8 = sbr.rel (0) target = $region5
  $region4: #{resnet_generator_forward.27} parent=0 // pred_region
    _
  $region5: #{resnet_generator_forward.27} parent=0 // pred_fallthru
    _
  // Predicated region
  $region6: #{resnet_generator_forward.27} parent=0 // pred_check
    _
  $region7: #{resnet_generator_forward.27} parent=0 // pred_check_branch
    %10 = sbr.rel (0) target = $region9
  $region8: #{resnet_generator_forward.27} parent=0 // pred_region
    _
  $region9: #{resnet_generator_forward.27} parent=0 // pred_fallthru
    _
  %v12 = vld [vmem:[%s0] sm:$0x3]
  %v13 = vld [vmem:[%s1] sm:$0xff]
  %v14 = vld [vmem:[%s1 + $0x8] sm:$0xff]
  %v15 = vld [vmem:[%s1 + $0x10] sm:$0xff]
  %v16 = vld [vmem:[%s1 + $0x18] sm:$0xff]
  %v17 = vld [vmem:[%s1 + $0x20] sm:$0xff]
  %v18 = vld [vmem:[%s1 + $0x28] sm:$0xff]
  %v19 = vld [vmem:[%s1 + $0x30] sm:$0xff]
  %v20 = vld [vmem:[%s1 + $0x38] sm:$0xff]
  %v21 = vld [vmem:[%s1 + $0x40] sm:$0x33]
  %v22 = vld [vmem:[%s1 + $0x48] sm:$0x33]
  %v33 = vunpack.c.l.b16 %v13
  %v34 = vunpack.c.h.b16 %v13
  %v35 = vunpack.c.l.b16 %v14
  %v36 = vunpack.c.h.b16 %v14
  %v37 = vunpack.c.l.b16 %v15
  %v38 = vunpack.c.h.b16 %v15
  %v39 = vunpack.c.l.b16 %v16
  %v40 = vunpack.c.h.b16 %v16
  %v41 = vunpack.c.l.b16 %v17
  %v42 = vunpack.c.h.b16 %v17
  %v43 = vunpack.c.l.b16 %v18
  %v44 = vunpack.c.h.b16 %v18
  %v45 = vunpack.c.l.b16 %v19
  %v46 = vunpack.c.h.b16 %v19
  %v47 = vunpack.c.l.b16 %v20
  %v48 = vunpack.c.h.b16 %v20
  %v49 = vunpack.c.l.b16 %v21
  %v50 = vunpack.c.h.b16 %v21
  %v51 = vunpack.c.l.b16 %v22
  %v52 = vunpack.c.h.b16 %v22
  %v53 = vpack.c.b16 %v37, %v33
  %v54 = vpack.c.b16 %v38, %v34
  %v55 = vpack.c.b16 %v39, %v35
  %v56 = vpack.c.b16 %v40, %v36
  %v57 = vpack.c.b16 %v45, %v41
  %v58 = vpack.c.b16 %v46, %v42
  %v59 = vpack.c.b16 %v47, %v43
  %v60 = vpack.c.b16 %v48, %v44
  %v61 = vpack.c.b16 %v49, %v49
  %v62 = vpack.c.b16 %v50, %v50
  %v63 = vpack.c.b16 %v51, %v51
  %v64 = vpack.c.b16 %v52, %v52
  %vm73 = vcmask 293888
  %v75 = vsel %vm73, %v12, 0
  %vm77 = vcmask 1041408
  %v79 = vsel %vm77, %v61, 0
  %v82 = vsel %vm77, %v62, 0
  %v85 = vsel %vm77, %v63, 0
  %v88 = vsel %vm77, %v64, 0
  %90 = vmatprep.subr.bf16.mxu0 %v54
  %91 = vmatpush1.bf16.msra.mxu0 %v53
  %92 = vmatprep.subr.bf16.mxu0 %v58
  %93 = vmatpush1.bf16.msra.mxu0 %v57
  %94 = vmatprep.subr.bf16.mxu0 %v82
  %95 = vmatpush1.bf16.msra.mxu0 %v79
  %96 = vmatprep.subr.bf16.mxu0 0
  %97 = vmatpush1.bf16.msra.mxu0 0
  %98 = vmatprep.subr.bf16.mxu0 0
  %99 = vmatpush1.bf16.msra.mxu0 0
  %100 = vmatprep.subr.bf16.mxu0 0
  %101 = vmatpush1.bf16.msra.mxu0 0
  %102 = vmatprep.subr.bf16.mxu0 0
  %103 = vmatpush1.bf16.msra.mxu0 0
  %104 = vmatprep.subr.bf16.mxu0 0
  %105 = vmatpush1.bf16.msra.mxu0 0
  %106 = vmatprep.subr.bf16.mxu0 0
  %107 = vmatpush1.bf16.msra.mxu0 0
  %108 = vmatprep.subr.bf16.mxu0 0
  %109 = vmatpush1.bf16.msra.mxu0 0
  %110 = vmatprep.subr.bf16.mxu0 0
  %111 = vmatpush1.bf16.msra.mxu0 0
  %112 = vmatprep.subr.bf16.mxu0 0
  %113 = vmatpush1.bf16.msra.mxu0 0
  %114 = vmatprep.subr.bf16.mxu0 0
  %115 = vmatpush1.bf16.msra.mxu0 0
  %116 = vmatprep.subr.bf16.mxu0 0
  %117 = vmatpush1.bf16.msra.mxu0 0
  %118 = vmatprep.subr.bf16.mxu0 0
  %119 = vmatpush1.bf16.msra.mxu0 0
  %120 = vmatprep.subr.bf16.mxu0 0
  %121 = vmatpush1.bf16.msra.mxu0 0
  %122 = vmatprep.mubr.bf16.mxu0 0
  %123 = vmatmul.mubr.bf16.gmra.mrb[0].mxu0 %v75
  %v124 = vpop.f32.mrb[0].mxu0
  %v125 = vadd.f32 0.0, %v124
  %v126 = vpop.f32.mrb[0].mxu0
  %v127 = vadd.f32 0.0, %v126
  %v128 = vpop.f32.mrb[0].mxu0
  %v129 = vpop.f32.mrb[0].mxu0
  %130 = vdwg.mxu0
  %131 = vmatprep.subr.bf16.mxu0 %v56
  %132 = vmatpush1.bf16.msra.mxu0 %v55
  %133 = vmatprep.subr.bf16.mxu0 %v60
  %134 = vmatpush1.bf16.msra.mxu0 %v59
  %135 = vmatprep.subr.bf16.mxu0 %v88
  %136 = vmatpush1.bf16.msra.mxu0 %v85
  %137 = vmatprep.subr.bf16.mxu0 0
  %138 = vmatpush1.bf16.msra.mxu0 0
  %139 = vmatprep.subr.bf16.mxu0 0
  %140 = vmatpush1.bf16.msra.mxu0 0
  %141 = vmatprep.subr.bf16.mxu0 0
  %142 = vmatpush1.bf16.msra.mxu0 0
  %143 = vmatprep.subr.bf16.mxu0 0
  %144 = vmatpush1.bf16.msra.mxu0 0
  %145 = vmatprep.subr.bf16.mxu0 0
  %146 = vmatpush1.bf16.msra.mxu0 0
  %147 = vmatprep.subr.bf16.mxu0 0
  %148 = vmatpush1.bf16.msra.mxu0 0
  %149 = vmatprep.subr.bf16.mxu0 0
  %150 = vmatpush1.bf16.msra.mxu0 0
  %151 = vmatprep.subr.bf16.mxu0 0
  %152 = vmatpush1.bf16.msra.mxu0 0
  %153 = vmatprep.subr.bf16.mxu0 0
  %154 = vmatpush1.bf16.msra.mxu0 0
  %155 = vmatprep.subr.bf16.mxu0 0
  %156 = vmatpush1.bf16.msra.mxu0 0
  %157 = vmatprep.subr.bf16.mxu0 0
  %158 = vmatpush1.bf16.msra.mxu0 0
  %159 = vmatprep.subr.bf16.mxu0 0
  %160 = vmatpush1.bf16.msra.mxu0 0
  %161 = vmatprep.subr.bf16.mxu0 0
  %162 = vmatpush1.bf16.msra.mxu0 0
  %163 = vmatprep.mubr.bf16.mxu0 0
  %164 = vmatmul.mubr.bf16.gmra.mrb[0].mxu0 %v75
  %v165 = vpop.f32.mrb[0].mxu0
  %v166 = vadd.f32 0.0, %v165
  %v167 = vpop.f32.mrb[0].mxu0
  %v168 = vadd.f32 0.0, %v167
  %v169 = vpop.f32.mrb[0].mxu0
  %v170 = vpop.f32.mrb[0].mxu0
  %171 = vdwg.mxu0
  %v172 = vtanh.pop %v125
  %v173 = vtanh.pop %v127
  %v174 = vtanh.pop %v166
  %v175 = vtanh.pop %v168
  %v180 = vcombine.low %v172, %v173
  %v181 = vcombine.low %v174, %v175
  %184 = vst [vmem:[%s2] sm:$0x77] %v180
  %185 = vst [vmem:[%s2 + $0x8] sm:$0x77] %v181
  // Predicated region
  $region10: #{resnet_generator_forward.27} parent=0 // pred_check
    _
  $region11: #{resnet_generator_forward.27} parent=0 // pred_check_branch
    %187 = sbr.rel (0) target = $region13
  $region12: #{resnet_generator_forward.27} parent=0 // pred_region
    _
  $region13: #{resnet_generator_forward.27} parent=0 // pred_fallthru
    _
  // Predicated region
  $region14: #{resnet_generator_forward.27} parent=0 // pred_check
    _
  $region15: #{resnet_generator_forward.27} parent=0 // pred_check_branch
    %189 = sbr.rel (0) target = $region17
  $region16: #{resnet_generator_forward.27} parent=0 // pred_region
    _
  $region17: #{resnet_generator_forward.27} parent=0 // pred_fallthru
    _

</llo_original>
